<compile_context>
chip_gen: v7x
topology: tpu7x:2x2x1
jax: 0.10.0
libtpu: 0.0.40
codegen_flags: <defaults>
</compile_context>

<pallas_src>
import functools

import jax
import jax.numpy as jnp
from jax.experimental import pallas as pl
from jax.experimental.pallas import tpu as pltpu


HIDDEN = 800


def _round_up(x, m):
    return (x + m - 1) // m * m


# -----------------------------------------------------------------------------
# Pallas kernel: (M, N, K)-tiled matmul with fused optional ReLU.
# Accumulates directly into the VMEM-resident f32 output block.
# -----------------------------------------------------------------------------
def _matmul_relu_kernel(x_ref, w_ref, o_ref, *, apply_relu):
    k = pl.program_id(2)

    @pl.when(k == 0)
    def _():
        o_ref[...] = jnp.zeros_like(o_ref)

    o_ref[...] += jnp.dot(
        x_ref[...], w_ref[...], preferred_element_type=jnp.float32
    )

    if apply_relu:
        @pl.when(k == pl.num_programs(2) - 1)
        def _():
            o_ref[...] = jnp.maximum(o_ref[...], 0.0)


def _pick_tiles(Mp, Kp, Np):
    """Tile sizes. Inputs are already padded to TPU-friendly extents."""
    # M tile: cap at 256 rows.
    tm = 256 if (Mp % 256 == 0) else Mp
    # K tile: run the whole reduction as one block when K is small (skips any
    # K padding / zero-FLOP work); otherwise 256-wide K steps (v6e/v7x MXU).
    if Kp <= 1024:
        tk = Kp
    elif Kp % 256 == 0:
        tk = 256
    else:
        tk = 128
    # N tile: largest divisor of Np that keeps the f32 output block <= ~1 MiB
    # and the bf16 weight block <= ~2 MiB (lane-dense stores, few grid steps).
    if Np % 128 == 0:
        tn = 128
        for cand in (Np, 512, 256):
            if (Np % cand == 0
                    and tm * cand * 4 <= (1 << 20)
                    and tk * cand * 2 <= (2 << 20)):
                tn = cand
                break
    else:
        tn = Np
    return tm, tn, tk


def matmul_pallas(x, w, *, relu):
    """Computes (optionally ReLU'd) x @ w on the MXU.

    x: (Mp, Kp) bfloat16 (already padded), w: (Kp, Np) bfloat16 (pre-padded).
    Returns (Mp, Np) float32 (accumulation stays f32 in the output block).
    """
    Mp, Kp = x.shape
    Kw, Np = w.shape
    assert Kp == Kw, (Kp, Kw)
    tm, tn, tk = _pick_tiles(Mp, Kp, Np)
    grid = (Mp // tm, Np // tn, Kp // tk)

    # Budget: double-buffered bf16 input blocks + double-buffered f32 output.
    vmem_bytes = 2 * (tm * tk + tk * tn) * 2 + 2 * tm * tn * 4
    vmem_limit = int(min(max(2 * vmem_bytes, 4 << 20), 32 << 20))

    return pl.pallas_call(
        functools.partial(_matmul_relu_kernel, apply_relu=relu),
        out_shape=jax.ShapeDtypeStruct((Mp, Np), jnp.float32),
        grid_spec=pltpu.PrefetchScalarGridSpec(
            num_scalar_prefetch=0,
            grid=grid,
            in_specs=[
                pl.BlockSpec((tm, tk), lambda i, j, k: (i, k)),
                pl.BlockSpec((tk, tn), lambda i, j, k: (k, j)),
            ],
            out_specs=pl.BlockSpec((tm, tn), lambda i, j, k: (i, j)),
        ),
        compiler_params=pltpu.CompilerParams(
            dimension_semantics=("parallel", "parallel", "arbitrary"),
            vmem_limit_bytes=vmem_limit,
        ),
    )(x, w)


# -----------------------------------------------------------------------------
# Parameters (prepared once, off the hot path)
# -----------------------------------------------------------------------------
def init_params(key, in_features, num_classes, hidden=HIDDEN):
    """Synthetic FCN parameters matching the PyTorch module's shapes.

    PyTorch Linear stores weight as (out, in) and computes x @ W.T; here each
    weight is stored transposed as (in, out), zero-padded to TPU-friendly
    extents (multiples of 128 on padded dims) and cast to bfloat16 once.
    Zero padding is mathematically inert: padded activation columns are zero
    and only ever multiply zero weight rows of the next layer.
    """
    k1, k2, k3 = jax.random.split(key, 3)

    kp1 = in_features if in_features <= 1024 else _round_up(in_features, 256)
    hp = _round_up(hidden, 128)        # 800 -> 896
    ncp = _round_up(num_classes, 128)  # 10  -> 128

    def make(k, k_dim, n_dim, k_pad, n_pad):
        w = jax.random.normal(k, (k_dim, n_dim), jnp.float32) * (
            1.0 / jnp.sqrt(k_dim)
        )
        wp = jnp.zeros((k_pad, n_pad), jnp.float32).at[:k_dim, :n_dim].set(w)
        return wp.astype(jnp.bfloat16)

    return {
        "w1": make(k1, in_features, hidden, kp1, hp),
        "w2": make(k2, hidden, hidden, hp, hp),
        "w3": make(k3, hidden, num_classes, hp, ncp),
    }


# -----------------------------------------------------------------------------
# Forward pass:  ReLU(x @ W1) -> ReLU(. @ W2) -> . @ W3    (all bias=False)
# -----------------------------------------------------------------------------
@functools.partial(jax.jit, static_argnames=("num_classes",))
def fcn_forward(x, params, *, num_classes):
    M, K = x.shape
    kp1 = params["w1"].shape[0]

    # Pad the batch dim (multiple of 16 for bf16 sublane packing, 256-tiled
    # when large), pad features to the pre-padded weight K, cast to bf16 once.
    Mp = _round_up(M, 16) if M <= 256 else _round_up(M, 256)
    xp = jnp.zeros((Mp, kp1), jnp.bfloat16).at[:M, :K].set(
        x.astype(jnp.bfloat16)
    )

    h = matmul_pallas(xp, params["w1"], relu=True)                      # (Mp, 896) f32
    h = matmul_pallas(h.astype(jnp.bfloat16), params["w2"], relu=True)  # (Mp, 896) f32
    out = matmul_pallas(h.astype(jnp.bfloat16), params["w3"], relu=False)
    return out[:M, :num_classes]


if __name__ == "__main__":
    # Small shapes consistent with the module: batch=2, in_features=32,
    # num_classes=10  ->  x is (2, 32).
    in_features = 32
    num_classes = 10
    batch = 2

    key = jax.random.PRNGKey(0)
    k_x, k_p = jax.random.split(key)
    x = jax.random.normal(k_x, (batch, in_features), jnp.float32)
    params = init_params(k_p, in_features, num_classes)

    out = fcn_forward(x, params, num_classes=num_classes)
    out = jax.block_until_ready(out)
    assert out.shape == (batch, num_classes), out.shape
    print("KERNEL_OK")
</pallas_src>

<mosaic_0001>
module attributes {stable_mosaic.version = 11 : i64} {
  func.func @_matmul_relu_kernel(%arg0: i32, %arg1: i32, %arg2: i32, %arg3: memref<16x32xbf16, #tpu.memory_space<vmem>>, %arg4: memref<32x896xbf16, #tpu.memory_space<vmem>>, %arg5: memref<16x896xf32, #tpu.memory_space<vmem>>) attributes {dimension_semantics = [#tpu.dimension_semantics<parallel>, #tpu.dimension_semantics<parallel>, #tpu.dimension_semantics<arbitrary>], iteration_bounds = array<i64: 1, 1, 1>, scalar_prefetch = 0 : i64, scratch_operands = 0 : i64, tpu.core_type = #tpu.core_type<tc>, window_params = [{transform_indices = @transform_0, window_bounds = array<i64: 16, 32>}, {transform_indices = @transform_1, window_bounds = array<i64: 32, 896>}, {transform_indices = @transform_2, window_bounds = array<i64: 16, 896>}]} {
    %c0_i32 = arith.constant 0 : i32
    %0 = arith.cmpi eq, %arg2, %c0_i32 : i32
    %1 = arith.extui %0 : i1 to i32
    %c0_i32_0 = arith.constant 0 : i32
    %2 = arith.cmpi ne, %1, %c0_i32_0 : i32
    scf.if %2 {
      %cst_10 = arith.constant 0.000000e+00 : f32
      %12 = vector.broadcast %cst_10 : f32 to vector<16x896xf32>
      %c0_11 = arith.constant 0 : index
      %c0_12 = arith.constant 0 : index
      %13 = vector.load %arg5[%c0_11, %c0_12] : memref<16x896xf32, #tpu.memory_space<vmem>>, vector<16x896xf32>
      tpu.vector_store %arg5[%c0_11, %c0_12], %12 {strides = array<i32>} : memref<16x896xf32, #tpu.memory_space<vmem>>, vector<16x896xf32>,
    } else {
    }
    %c0 = arith.constant 0 : index
    %c0_1 = arith.constant 0 : index
    %3 = vector.load %arg5[%c0, %c0_1] : memref<16x896xf32, #tpu.memory_space<vmem>>, vector<16x896xf32>
    %c0_2 = arith.constant 0 : index
    %c0_3 = arith.constant 0 : index
    %4 = vector.load %arg3[%c0_2, %c0_3] : memref<16x32xbf16, #tpu.memory_space<vmem>>, vector<16x32xbf16>
    %c0_4 = arith.constant 0 : index
    %c0_5 = arith.constant 0 : index
    %5 = vector.load %arg4[%c0_4, %c0_5] : memref<32x896xbf16, #tpu.memory_space<vmem>>, vector<32x896xbf16>
    %cst = arith.constant dense<0.000000e+00> : vector<16x896xf32>
    %6 = tpu.matmul %4, %5, %cst {dimension_numbers = #tpu.dot_dimension_numbers<[1], [0], [0], [1], [0, 0, 1, 1], [], []>} : vector<16x32xbf16>, vector<32x896xbf16>, vector<16x896xf32> -> vector<16x896xf32>
    %7 = arith.addf %3, %6 : vector<16x896xf32>
    %c0_6 = arith.constant 0 : index
    %c0_7 = arith.constant 0 : index
    %8 = vector.load %arg5[%c0_6, %c0_7] : memref<16x896xf32, #tpu.memory_space<vmem>>, vector<16x896xf32>
    tpu.vector_store %arg5[%c0_6, %c0_7], %7 {strides = array<i32>} : memref<16x896xf32, #tpu.memory_space<vmem>>, vector<16x896xf32>,
    %c0_i32_8 = arith.constant 0 : i32
    %9 = arith.cmpi eq, %arg2, %c0_i32_8 : i32
    %10 = arith.extui %9 : i1 to i32
    %c0_i32_9 = arith.constant 0 : i32
    %11 = arith.cmpi ne, %10, %c0_i32_9 : i32
    scf.if %11 {
      %c0_10 = arith.constant 0 : index
      %c0_11 = arith.constant 0 : index
      %12 = vector.load %arg5[%c0_10, %c0_11] : memref<16x896xf32, #tpu.memory_space<vmem>>, vector<16x896xf32>
      %cst_12 = arith.constant 0.000000e+00 : f32
      %13 = vector.broadcast %cst_12 : f32 to vector<16x896xf32>
      %14 = arith.maximumf %12, %13 : vector<16x896xf32>
      %c0_13 = arith.constant 0 : index
      %c0_14 = arith.constant 0 : index
      %15 = vector.load %arg5[%c0_13, %c0_14] : memref<16x896xf32, #tpu.memory_space<vmem>>, vector<16x896xf32>
      tpu.vector_store %arg5[%c0_13, %c0_14], %14 {strides = array<i32>} : memref<16x896xf32, #tpu.memory_space<vmem>>, vector<16x896xf32>,
    } else {
    }
    return
  }
  func.func @transform_0(%arg0: i32, %arg1: i32, %arg2: i32) -> (i32, i32) {
    %c0_i32 = arith.constant 0 : i32
    return %arg0, %arg2 : i32, i32
  }
  func.func @transform_1(%arg0: i32, %arg1: i32, %arg2: i32) -> (i32, i32) {
    %c0_i32 = arith.constant 0 : i32
    return %arg2, %arg1 : i32, i32
  }
  func.func @transform_2(%arg0: i32, %arg1: i32, %arg2: i32) -> (i32, i32) {
    %c0_i32 = arith.constant 0 : i32
    return %arg0, %arg1 : i32, i32
  }
}

module attributes {stable_mosaic.version = 11 : i64} {
  func.func @_matmul_relu_kernel(%arg0: i32, %arg1: i32, %arg2: i32, %arg3: memref<16x896xbf16, #tpu.memory_space<vmem>>, %arg4: memref<896x896xbf16, #tpu.memory_space<vmem>>, %arg5: memref<16x896xf32, #tpu.memory_space<vmem>>) attributes {dimension_semantics = [#tpu.dimension_semantics<parallel>, #tpu.dimension_semantics<parallel>, #tpu.dimension_semantics<arbitrary>], iteration_bounds = array<i64: 1, 1, 1>, scalar_prefetch = 0 : i64, scratch_operands = 0 : i64, tpu.core_type = #tpu.core_type<tc>, window_params = [{transform_indices = @transform_0, window_bounds = array<i64: 16, 896>}, {transform_indices = @transform_1, window_bounds = array<i64: 896, 896>}, {transform_indices = @transform_2, window_bounds = array<i64: 16, 896>}]} {
    %c0_i32 = arith.constant 0 : i32
    %0 = arith.cmpi eq, %arg2, %c0_i32 : i32
    %1 = arith.extui %0 : i1 to i32
    %c0_i32_0 = arith.constant 0 : i32
    %2 = arith.cmpi ne, %1, %c0_i32_0 : i32
    scf.if %2 {
      %cst_10 = arith.constant 0.000000e+00 : f32
      %12 = vector.broadcast %cst_10 : f32 to vector<16x896xf32>
      %c0_11 = arith.constant 0 : index
      %c0_12 = arith.constant 0 : index
      %13 = vector.load %arg5[%c0_11, %c0_12] : memref<16x896xf32, #tpu.memory_space<vmem>>, vector<16x896xf32>
      tpu.vector_store %arg5[%c0_11, %c0_12], %12 {strides = array<i32>} : memref<16x896xf32, #tpu.memory_space<vmem>>, vector<16x896xf32>,
    } else {
    }
    %c0 = arith.constant 0 : index
    %c0_1 = arith.constant 0 : index
    %3 = vector.load %arg5[%c0, %c0_1] : memref<16x896xf32, #tpu.memory_space<vmem>>, vector<16x896xf32>
    %c0_2 = arith.constant 0 : index
    %c0_3 = arith.constant 0 : index
    %4 = vector.load %arg3[%c0_2, %c0_3] : memref<16x896xbf16, #tpu.memory_space<vmem>>, vector<16x896xbf16>
    %c0_4 = arith.constant 0 : index
    %c0_5 = arith.constant 0 : index
    %5 = vector.load %arg4[%c0_4, %c0_5] : memref<896x896xbf16, #tpu.memory_space<vmem>>, vector<896x896xbf16>
    %cst = arith.constant dense<0.000000e+00> : vector<16x896xf32>
    %6 = tpu.matmul %4, %5, %cst {dimension_numbers = #tpu.dot_dimension_numbers<[1], [0], [0], [1], [0, 0, 1, 1], [], []>} : vector<16x896xbf16>, vector<896x896xbf16>, vector<16x896xf32> -> vector<16x896xf32>
    %7 = arith.addf %3, %6 : vector<16x896xf32>
    %c0_6 = arith.constant 0 : index
    %c0_7 = arith.constant 0 : index
    %8 = vector.load %arg5[%c0_6, %c0_7] : memref<16x896xf32, #tpu.memory_space<vmem>>, vector<16x896xf32>
    tpu.vector_store %arg5[%c0_6, %c0_7], %7 {strides = array<i32>} : memref<16x896xf32, #tpu.memory_space<vmem>>, vector<16x896xf32>,
    %c0_i32_8 = arith.constant 0 : i32
    %9 = arith.cmpi eq, %arg2, %c0_i32_8 : i32
    %10 = arith.extui %9 : i1 to i32
    %c0_i32_9 = arith.constant 0 : i32
    %11 = arith.cmpi ne, %10, %c0_i32_9 : i32
    scf.if %11 {
      %c0_10 = arith.constant 0 : index
      %c0_11 = arith.constant 0 : index
      %12 = vector.load %arg5[%c0_10, %c0_11] : memref<16x896xf32, #tpu.memory_space<vmem>>, vector<16x896xf32>
      %cst_12 = arith.constant 0.000000e+00 : f32
      %13 = vector.broadcast %cst_12 : f32 to vector<16x896xf32>
      %14 = arith.maximumf %12, %13 : vector<16x896xf32>
      %c0_13 = arith.constant 0 : index
      %c0_14 = arith.constant 0 : index
      %15 = vector.load %arg5[%c0_13, %c0_14] : memref<16x896xf32, #tpu.memory_space<vmem>>, vector<16x896xf32>
      tpu.vector_store %arg5[%c0_13, %c0_14], %14 {strides = array<i32>} : memref<16x896xf32, #tpu.memory_space<vmem>>, vector<16x896xf32>,
    } else {
    }
    return
  }
  func.func @transform_0(%arg0: i32, %arg1: i32, %arg2: i32) -> (i32, i32) {
    %c0_i32 = arith.constant 0 : i32
    return %arg0, %arg2 : i32, i32
  }
  func.func @transform_1(%arg0: i32, %arg1: i32, %arg2: i32) -> (i32, i32) {
    %c0_i32 = arith.constant 0 : i32
    return %arg2, %arg1 : i32, i32
  }
  func.func @transform_2(%arg0: i32, %arg1: i32, %arg2: i32) -> (i32, i32) {
    %c0_i32 = arith.constant 0 : i32
    return %arg0, %arg1 : i32, i32
  }
}

module attributes {stable_mosaic.version = 11 : i64} {
  func.func @_matmul_relu_kernel(%arg0: i32, %arg1: i32, %arg2: i32, %arg3: memref<16x896xbf16, #tpu.memory_space<vmem>>, %arg4: memref<896x128xbf16, #tpu.memory_space<vmem>>, %arg5: memref<16x128xf32, #tpu.memory_space<vmem>>) attributes {dimension_semantics = [#tpu.dimension_semantics<parallel>, #tpu.dimension_semantics<parallel>, #tpu.dimension_semantics<arbitrary>], iteration_bounds = array<i64: 1, 1, 1>, scalar_prefetch = 0 : i64, scratch_operands = 0 : i64, tpu.core_type = #tpu.core_type<tc>, window_params = [{transform_indices = @transform_0, window_bounds = array<i64: 16, 896>}, {transform_indices = @transform_1, window_bounds = array<i64: 896, 128>}, {transform_indices = @transform_2, window_bounds = array<i64: 16, 128>}]} {
    %c0_i32 = arith.constant 0 : i32
    %0 = arith.cmpi eq, %arg2, %c0_i32 : i32
    %1 = arith.extui %0 : i1 to i32
    %c0_i32_0 = arith.constant 0 : i32
    %2 = arith.cmpi ne, %1, %c0_i32_0 : i32
    scf.if %2 {
      %cst_8 = arith.constant 0.000000e+00 : f32
      %9 = vector.broadcast %cst_8 : f32 to vector<16x128xf32>
      %c0_9 = arith.constant 0 : index
      %c0_10 = arith.constant 0 : index
      %10 = vector.load %arg5[%c0_9, %c0_10] : memref<16x128xf32, #tpu.memory_space<vmem>>, vector<16x128xf32>
      tpu.vector_store %arg5[%c0_9, %c0_10], %9 {strides = array<i32>} : memref<16x128xf32, #tpu.memory_space<vmem>>, vector<16x128xf32>,
    } else {
    }
    %c0 = arith.constant 0 : index
    %c0_1 = arith.constant 0 : index
    %3 = vector.load %arg5[%c0, %c0_1] : memref<16x128xf32, #tpu.memory_space<vmem>>, vector<16x128xf32>
    %c0_2 = arith.constant 0 : index
    %c0_3 = arith.constant 0 : index
    %4 = vector.load %arg3[%c0_2, %c0_3] : memref<16x896xbf16, #tpu.memory_space<vmem>>, vector<16x896xbf16>
    %c0_4 = arith.constant 0 : index
    %c0_5 = arith.constant 0 : index
    %5 = vector.load %arg4[%c0_4, %c0_5] : memref<896x128xbf16, #tpu.memory_space<vmem>>, vector<896x128xbf16>
    %cst = arith.constant dense<0.000000e+00> : vector<16x128xf32>
    %6 = tpu.matmul %4, %5, %cst {dimension_numbers = #tpu.dot_dimension_numbers<[1], [0], [0], [1], [0, 0, 1, 1], [], []>} : vector<16x896xbf16>, vector<896x128xbf16>, vector<16x128xf32> -> vector<16x128xf32>
    %7 = arith.addf %3, %6 : vector<16x128xf32>
    %c0_6 = arith.constant 0 : index
    %c0_7 = arith.constant 0 : index
    %8 = vector.load %arg5[%c0_6, %c0_7] : memref<16x128xf32, #tpu.memory_space<vmem>>, vector<16x128xf32>
    tpu.vector_store %arg5[%c0_6, %c0_7], %7 {strides = array<i32>} : memref<16x128xf32, #tpu.memory_space<vmem>>, vector<16x128xf32>,
    return
  }
  func.func @transform_0(%arg0: i32, %arg1: i32, %arg2: i32) -> (i32, i32) {
    %c0_i32 = arith.constant 0 : i32
    return %arg0, %arg2 : i32, i32
  }
  func.func @transform_1(%arg0: i32, %arg1: i32, %arg2: i32) -> (i32, i32) {
    %c0_i32 = arith.constant 0 : i32
    return %arg2, %arg1 : i32, i32
  }
  func.func @transform_2(%arg0: i32, %arg1: i32, %arg2: i32) -> (i32, i32) {
    %c0_i32 = arith.constant 0 : i32
    return %arg0, %arg1 : i32, i32
  }
}

</mosaic_0001>

<llo_original>
// kernel: fcn_forward.3
$region0: #{fcn_forward.3}
  #allocation0 [shape = 'u32[]', space=smem, size = 0x4, offset = 0x4, fixed_abs, tag = 'smem constant byte address 0x4 - core index']
  #allocation1 [shape = 'u32[144,128]{1,0:T(1,128)}', space=vmem, size = 0x12000, scoped, tag = 'internal scratch']
  %s0 = inlined_call_operand.vmem [shape: bf16[16,32], index: 0, kind: input, shape index: {}]
  %s1 = inlined_call_operand.hbm [shape: bf16[32,896], index: 1, kind: input, shape index: {}]
  %s2 = inlined_call_operand.vmem [shape: f32[16,896], index: 2, kind: output, shape index: {}]
  %s3 = sld [smem:[#allocation0]]
  $region30: #{fcn_forward.3} parent=0
    _
  %s5 = ssub.s32 1, %s3
  %s6 = scalar_select 0, %s5, %s3
  $region1: #{fcn_forward.3} parent=0
    #allocation2 [shape = 'u8[57344]{0}', space=vmem, size = 0xe000, scoped, tag = 'input window, operand 1, single buffered']
    #allocation3 [shape = 's32[1]{0}', space=sflag, size = 0x4, scoped, tag = 'scoped memory for fcn_forward.3']
    %7 = vsyncpa [#allocation3], 0
    // Predicated region
    $region2: #{fcn_forward.3} parent=1 // pred_check
      _
    $region3: #{fcn_forward.3} parent=1 // pred_check_branch
      %9 = sbr.rel (0) target = $region5
    $region4: #{fcn_forward.3} parent=1 // pred_region
      _
    $region5: #{fcn_forward.3} parent=1 // pred_fallthru
      _
    // Predicated region
    $region6: #{fcn_forward.3} parent=1 // pred_check
      _
    $region7: #{fcn_forward.3} parent=1 // pred_check_branch
      %11 = sbr.rel (0) target = $region9
    $region8: #{fcn_forward.3} parent=1 // pred_region
      %s13 = ssub.s32 1792, 1792
      %14 = vsyncadd [#allocation3], %s13
      %s15 = sshll.u32 [#allocation2], 4
      %s16 = int_to_ptr.vmem [resolvable:$true] %s15
      %21 = dma.hbm_to_vmem [thread:$0]  %s1, 1792, %s16, [#allocation3], 448, 448, 28
    $region9: #{fcn_forward.3} parent=1 // pred_fallthru
      _
    // Predicated region
    $region10: #{fcn_forward.3} parent=1 // pred_check
      _
    $region11: #{fcn_forward.3} parent=1 // pred_check_branch
      %23 = sbr.rel (0) target = $region13
    $region12: #{fcn_forward.3} parent=1 // pred_region
      %24 = dma.done [#allocation3], 1792
    $region13: #{fcn_forward.3} parent=1 // pred_fallthru
      _
    %p26 = scmp.eq.s32.totalorder 0, 0
    // Predicated region
    $region14: #{fcn_forward.3} parent=1 // pred_check
      %p27 = pneg %p26
    $region15: #{fcn_forward.3} parent=1 // pred_check_branch
      %29 = sbr.rel (%p27) target = $region17
    $region16: #{fcn_forward.3} parent=1 // pred_region
      %30 = vst [vmem:[%s2] sm:$0xff] 0.0
      %31 = vst [vmem:[%s2 + $0x8] sm:$0xff] 0.0
      %32 = vst [vmem:[%s2 + $0x10] sm:$0xff] 0.0
      %33 = vst [vmem:[%s2 + $0x18] sm:$0xff] 0.0
      %34 = vst [vmem:[%s2 + $0x20] sm:$0xff] 0.0
      %35 = vst [vmem:[%s2 + $0x28] sm:$0xff] 0.0
      %36 = vst [vmem:[%s2 + $0x30] sm:$0xff] 0.0
      %37 = vst [vmem:[%s2 + $0x38] sm:$0xff] 0.0
      %38 = vst [vmem:[%s2 + $0x40] sm:$0xff] 0.0
      %39 = vst [vmem:[%s2 + $0x48] sm:$0xff] 0.0
      %40 = vst [vmem:[%s2 + $0x50] sm:$0xff] 0.0
      %41 = vst [vmem:[%s2 + $0x58] sm:$0xff] 0.0
      %42 = vst [vmem:[%s2 + $0x60] sm:$0xff] 0.0
      %43 = vst [vmem:[%s2 + $0x68] sm:$0xff] 0.0
    $region17: #{fcn_forward.3} parent=1 // pred_fallthru
      _
    %v44 = vld [vmem:[%s2] sm:$0xff]
    %v45 = vld [vmem:[%s2 + $0x8] sm:$0xff]
    %v46 = vld [vmem:[%s2 + $0x10] sm:$0xff]
    %v47 = vld [vmem:[%s2 + $0x18] sm:$0xff]
    %v48 = vld [vmem:[%s2 + $0x20] sm:$0xff]
    %v49 = vld [vmem:[%s2 + $0x28] sm:$0xff]
    %v50 = vld [vmem:[%s2 + $0x30] sm:$0xff]
    %v51 = vld [vmem:[%s2 + $0x38] sm:$0xff]
    %v52 = vld [vmem:[%s2 + $0x40] sm:$0xff]
    %v53 = vld [vmem:[%s2 + $0x48] sm:$0xff]
    %v54 = vld [vmem:[%s2 + $0x50] sm:$0xff]
    %v55 = vld [vmem:[%s2 + $0x58] sm:$0xff]
    %v56 = vld [vmem:[%s2 + $0x60] sm:$0xff]
    %v57 = vld [vmem:[%s2 + $0x68] sm:$0xff]
    %v58 = vld [vmem:[%s0] sm:$0xf]
    %v59 = vld [vmem:[%s0 + $0x4] sm:$0xf]
    %v60 = vld [vmem:[#allocation2] sm:$0xff]
    %v61 = vld [vmem:[#allocation2 + $0x8] sm:$0xff]
    %v62 = vld [vmem:[#allocation2 + $0x10] sm:$0xff]
    %v63 = vld [vmem:[#allocation2 + $0x18] sm:$0xf]
    %v64 = vld [vmem:[#allocation2 + $0x1c] sm:$0xff]
    %v65 = vld [vmem:[#allocation2 + $0x24] sm:$0xff]
    %v66 = vld [vmem:[#allocation2 + $0x2c] sm:$0xff]
    %v67 = vld [vmem:[#allocation2 + $0x34] sm:$0xf]
    %v68 = vld [vmem:[#allocation2 + $0x38] sm:$0xff]
    %v69 = vld [vmem:[#allocation2 + $0x40] sm:$0xff]
    %v70 = vld [vmem:[#allocation2 + $0x48] sm:$0xff]
    %v71 = vld [vmem:[#allocation2 + $0x50] sm:$0xf]
    %v72 = vld [vmem:[#allocation2 + $0x54] sm:$0xff]
    %v73 = vld [vmem:[#allocation2 + $0x5c] sm:$0xff]
    %v74 = vld [vmem:[#allocation2 + $0x64] sm:$0xff]
    %v75 = vld [vmem:[#allocation2 + $0x6c] sm:$0xf]
    %v78 = vunpack.c.l.b16 %v58
    %v79 = vunpack.c.l.b16 %v59
    %v80 = vpack.c.b16 %v79, %v78
    %v97 = vunpack.c.l.b16 %v60
    %v98 = vunpack.c.h.b16 %v60
    %v99 = vunpack.c.l.b16 %v61
    %v100 = vunpack.c.h.b16 %v61
    %v101 = vunpack.c.l.b16 %v62
    %v102 = vunpack.c.h.b16 %v62
    %v103 = vunpack.c.l.b16 %v63
    %v104 = vunpack.c.l.b16 %v64
    %v105 = vunpack.c.h.b16 %v64
    %v106 = vunpack.c.l.b16 %v65
    %v107 = vunpack.c.h.b16 %v65
    %v108 = vunpack.c.l.b16 %v66
    %v109 = vunpack.c.h.b16 %v66
    %v110 = vunpack.c.l.b16 %v67
    %v111 = vunpack.c.l.b16 %v68
    %v112 = vunpack.c.h.b16 %v68
    %v113 = vunpack.c.l.b16 %v69
    %v114 = vunpack.c.h.b16 %v69
    %v115 = vunpack.c.l.b16 %v70
    %v116 = vunpack.c.h.b16 %v70
    %v117 = vunpack.c.l.b16 %v71
    %v118 = vunpack.c.l.b16 %v72
    %v119 = vunpack.c.h.b16 %v72
    %v120 = vunpack.c.l.b16 %v73
    %v121 = vunpack.c.h.b16 %v73
    %v122 = vunpack.c.l.b16 %v74
    %v123 = vunpack.c.h.b16 %v74
    %v124 = vunpack.c.l.b16 %v75
    %v125 = vpack.c.b16 %v104, %v97
    %v126 = vpack.c.b16 %v105, %v98
    %v127 = vpack.c.b16 %v106, %v99
    %v128 = vpack.c.b16 %v107, %v100
    %v129 = vpack.c.b16 %v108, %v101
    %v130 = vpack.c.b16 %v109, %v102
    %v131 = vpack.c.b16 %v110, %v103
    %v132 = vpack.c.b16 %v118, %v111
    %v133 = vpack.c.b16 %v119, %v112
    %v134 = vpack.c.b16 %v120, %v113
    %v135 = vpack.c.b16 %v121, %v114
    %v136 = vpack.c.b16 %v122, %v115
    %v137 = vpack.c.b16 %v123, %v116
    %v138 = vpack.c.b16 %v124, %v117
    %vm153 = vcmask 261120
    %v155 = vsel %vm153, %v80, 0
    %157 = vmatprep.subr.bf16.mxu0 %v126
    %158 = vmatpush1.bf16.msra.mxu0 %v125
    %159 = vmatprep.subr.bf16.mxu0 %v133
    %160 = vmatpush1.bf16.msra.mxu0 %v132
    %161 = vmatprep.subr.bf16.mxu0 0
    %162 = vmatpush1.bf16.msra.mxu0 0
    %163 = vmatprep.subr.bf16.mxu0 0
    %164 = vmatpush1.bf16.msra.mxu0 0
    %165 = vmatprep.subr.bf16.mxu0 0
    %166 = vmatpush1.bf16.msra.mxu0 0
    %167 = vmatprep.subr.bf16.mxu0 0
    %168 = vmatpush1.bf16.msra.mxu0 0
    %169 = vmatprep.subr.bf16.mxu0 0
    %170 = vmatpush1.bf16.msra.mxu0 0
    %171 = vmatprep.subr.bf16.mxu0 0
    %172 = vmatpush1.bf16.msra.mxu0 0
    %173 = vmatprep.subr.bf16.mxu0 0
    %174 = vmatpush1.bf16.msra.mxu0 0
    %175 = vmatprep.subr.bf16.mxu0 0
    %176 = vmatpush1.bf16.msra.mxu0 0
    %177 = vmatprep.subr.bf16.mxu0 0
    %178 = vmatpush1.bf16.msra.mxu0 0
    %179 = vmatprep.subr.bf16.mxu0 0
    %180 = vmatpush1.bf16.msra.mxu0 0
    %181 = vmatprep.subr.bf16.mxu0 0
    %182 = vmatpush1.bf16.msra.mxu0 0
    %183 = vmatprep.subr.bf16.mxu0 0
    %184 = vmatpush1.bf16.msra.mxu0 0
    %185 = vmatprep.subr.bf16.mxu0 0
    %186 = vmatpush1.bf16.msra.mxu0 0
    %187 = vmatprep.subr.bf16.mxu0 0
    %188 = vmatpush1.bf16.msra.mxu0 0
    %189 = vmatprep.mubr.bf16.mxu0 0
    %190 = vmatmul.mubr.bf16.gmra.mrb[0].mxu0 %v155
    %v191 = vpop.f32.mrb[0].mxu0
    %v192 = vadd.f32 0.0, %v191
    %v193 = vpop.f32.mrb[0].mxu0
    %v194 = vadd.f32 0.0, %v193
    %v195 = vpop.f32.mrb[0].mxu0
    %v196 = vadd.f32 0.0, %v195
    %v197 = vpop.f32.mrb[0].mxu0
    %v198 = vadd.f32 0.0, %v197
    %199 = vdwg.mxu0
    %200 = vmatprep.subr.bf16.mxu0 %v128
    %201 = vmatpush1.bf16.msra.mxu0 %v127
    %202 = vmatprep.subr.bf16.mxu0 %v135
    %203 = vmatpush1.bf16.msra.mxu0 %v134
    %204 = vmatprep.subr.bf16.mxu0 0
    %205 = vmatpush1.bf16.msra.mxu0 0
    %206 = vmatprep.subr.bf16.mxu0 0
    %207 = vmatpush1.bf16.msra.mxu0 0
    %208 = vmatprep.subr.bf16.mxu0 0
    %209 = vmatpush1.bf16.msra.mxu0 0
    %210 = vmatprep.subr.bf16.mxu0 0
    %211 = vmatpush1.bf16.msra.mxu0 0
    %212 = vmatprep.subr.bf16.mxu0 0
    %213 = vmatpush1.bf16.msra.mxu0 0
    %214 = vmatprep.subr.bf16.mxu0 0
    %215 = vmatpush1.bf16.msra.mxu0 0
    %216 = vmatprep.subr.bf16.mxu0 0
    %217 = vmatpush1.bf16.msra.mxu0 0
    %218 = vmatprep.subr.bf16.mxu0 0
    %219 = vmatpush1.bf16.msra.mxu0 0
    %220 = vmatprep.subr.bf16.mxu0 0
    %221 = vmatpush1.bf16.msra.mxu0 0
    %222 = vmatprep.subr.bf16.mxu0 0
    %223 = vmatpush1.bf16.msra.mxu0 0
    %224 = vmatprep.subr.bf16.mxu0 0
    %225 = vmatpush1.bf16.msra.mxu0 0
    %226 = vmatprep.subr.bf16.mxu0 0
    %227 = vmatpush1.bf16.msra.mxu0 0
    %228 = vmatprep.subr.bf16.mxu0 0
    %229 = vmatpush1.bf16.msra.mxu0 0
    %230 = vmatprep.subr.bf16.mxu0 0
    %231 = vmatpush1.bf16.msra.mxu0 0
    %232 = vmatprep.mubr.bf16.mxu0 0
    %233 = vmatmul.mubr.bf16.gmra.mrb[0].mxu0 %v155
    %v234 = vpop.f32.mrb[0].mxu0
    %v235 = vadd.f32 0.0, %v234
    %v236 = vpop.f32.mrb[0].mxu0
    %v237 = vadd.f32 0.0, %v236
    %v238 = vpop.f32.mrb[0].mxu0
    %v239 = vadd.f32 0.0, %v238
    %v240 = vpop.f32.mrb[0].mxu0
    %v241 = vadd.f32 0.0, %v240
    %242 = vdwg.mxu0
    %243 = vmatprep.subr.bf16.mxu0 %v130
    %244 = vmatpush1.bf16.msra.mxu0 %v129
    %245 = vmatprep.subr.bf16.mxu0 %v137
    %246 = vmatpush1.bf16.msra.mxu0 %v136
    %247 = vmatprep.subr.bf16.mxu0 0
    %248 = vmatpush1.bf16.msra.mxu0 0
    %249 = vmatprep.subr.bf16.mxu0 0
    %250 = vmatpush1.bf16.msra.mxu0 0
    %251 = vmatprep.subr.bf16.mxu0 0
    %252 = vmatpush1.bf16.msra.mxu0 0
    %253 = vmatprep.subr.bf16.mxu0 0
    %254 = vmatpush1.bf16.msra.mxu0 0
    %255 = vmatprep.subr.bf16.mxu0 0
    %256 = vmatpush1.bf16.msra.mxu0 0
    %257 = vmatprep.subr.bf16.mxu0 0
    %258 = vmatpush1.bf16.msra.mxu0 0
    %259 = vmatprep.subr.bf16.mxu0 0
    %260 = vmatpush1.bf16.msra.mxu0 0
    %261 = vmatprep.subr.bf16.mxu0 0
    %262 = vmatpush1.bf16.msra.mxu0 0
    %263 = vmatprep.subr.bf16.mxu0 0
    %264 = vmatpush1.bf16.msra.mxu0 0
    %265 = vmatprep.subr.bf16.mxu0 0
    %266 = vmatpush1.bf16.msra.mxu0 0
    %267 = vmatprep.subr.bf16.mxu0 0
    %268 = vmatpush1.bf16.msra.mxu0 0
    %269 = vmatprep.subr.bf16.mxu0 0
    %270 = vmatpush1.bf16.msra.mxu0 0
    %271 = vmatprep.subr.bf16.mxu0 0
    %272 = vmatpush1.bf16.msra.mxu0 0
    %273 = vmatprep.subr.bf16.mxu0 0
    %274 = vmatpush1.bf16.msra.mxu0 0
    %275 = vmatprep.mubr.bf16.mxu0 0
    %276 = vmatmul.mubr.bf16.gmra.mrb[0].mxu0 %v155
    %v277 = vpop.f32.mrb[0].mxu0
    %v278 = vadd.f32 0.0, %v277
    %v279 = vpop.f32.mrb[0].mxu0
    %v280 = vadd.f32 0.0, %v279
    %v281 = vpop.f32.mrb[0].mxu0
    %v282 = vadd.f32 0.0, %v281
    %v283 = vpop.f32.mrb[0].mxu0
    %v284 = vadd.f32 0.0, %v283
    %285 = vdwg.mxu0
    %286 = vmatprep.subr.bf16.mxu0 0
    %287 = vmatpush1.bf16.msra.mxu0 %v131
    %288 = vmatprep.subr.bf16.mxu0 0
    %289 = vmatpush1.bf16.msra.mxu0 %v138
    %290 = vmatprep.subr.bf16.mxu0 0
    %291 = vmatpush1.bf16.msra.mxu0 0
    %292 = vmatprep.subr.bf16.mxu0 0
    %293 = vmatpush1.bf16.msra.mxu0 0
    %294 = vmatprep.subr.bf16.mxu0 0
    %295 = vmatpush1.bf16.msra.mxu0 0
    %296 = vmatprep.subr.bf16.mxu0 0
    %297 = vmatpush1.bf16.msra.mxu0 0
    %298 = vmatprep.subr.bf16.mxu0 0
    %299 = vmatpush1.bf16.msra.mxu0 0
    %300 = vmatprep.subr.bf16.mxu0 0
    %301 = vmatpush1.bf16.msra.mxu0 0
    %302 = vmatprep.subr.bf16.mxu0 0
    %303 = vmatpush1.bf16.msra.mxu0 0
    %304 = vmatprep.subr.bf16.mxu0 0
    %305 = vmatpush1.bf16.msra.mxu0 0
    %306 = vmatprep.subr.bf16.mxu0 0
    %307 = vmatpush1.bf16.msra.mxu0 0
    %308 = vmatprep.subr.bf16.mxu0 0
    %309 = vmatpush1.bf16.msra.mxu0 0
    %310 = vmatprep.subr.bf16.mxu0 0
    %311 = vmatpush1.bf16.msra.mxu0 0
    %312 = vmatprep.subr.bf16.mxu0 0
    %313 = vmatpush1.bf16.msra.mxu0 0
    %314 = vmatprep.subr.bf16.mxu0 0
    %315 = vmatpush1.bf16.msra.mxu0 0
    %316 = vmatprep.subr.bf16.mxu0 0
    %317 = vmatpush1.bf16.msra.mxu0 0
    %318 = vmatprep.mubr.bf16.mxu0 0
    %319 = vmatmul.mubr.bf16.gmra.mrb[0].mxu0 %v155
    %v320 = vpop.f32.mrb[0].mxu0
    %v321 = vadd.f32 0.0, %v320
    %v322 = vpop.f32.mrb[0].mxu0
    %v323 = vpop.f32.mrb[0].mxu0
    %v324 = vadd.f32 0.0, %v323
    %v325 = vpop.f32.mrb[0].mxu0
    %326 = vdwg.mxu0
    %v327 = vadd.f32 %v44, %v192
    %v328 = vadd.f32 %v45, %v194
    %v329 = vadd.f32 %v46, %v235
    %v330 = vadd.f32 %v47, %v237
    %v331 = vadd.f32 %v48, %v278
    %v332 = vadd.f32 %v49, %v280
    %v333 = vadd.f32 %v50, %v321
    %v334 = vadd.f32 %v51, %v196
    %v335 = vadd.f32 %v52, %v198
    %v336 = vadd.f32 %v53, %v239
    %v337 = vadd.f32 %v54, %v241
    %v338 = vadd.f32 %v55, %v282
    %v339 = vadd.f32 %v56, %v284
    %v340 = vadd.f32 %v57, %v324
    %341 = vst [vmem:[%s2] sm:$0xff] %v327
    %342 = vst [vmem:[%s2 + $0x8] sm:$0xff] %v328
    %343 = vst [vmem:[%s2 + $0x10] sm:$0xff] %v329
    %344 = vst [vmem:[%s2 + $0x18] sm:$0xff] %v330
    %345 = vst [vmem:[%s2 + $0x20] sm:$0xff] %v331
    %346 = vst [vmem:[%s2 + $0x28] sm:$0xff] %v332
    %347 = vst [vmem:[%s2 + $0x30] sm:$0xff] %v333
    %348 = vst [vmem:[%s2 + $0x38] sm:$0xff] %v334
    %349 = vst [vmem:[%s2 + $0x40] sm:$0xff] %v335
    %350 = vst [vmem:[%s2 + $0x48] sm:$0xff] %v336
    %351 = vst [vmem:[%s2 + $0x50] sm:$0xff] %v337
    %352 = vst [vmem:[%s2 + $0x58] sm:$0xff] %v338
    %353 = vst [vmem:[%s2 + $0x60] sm:$0xff] %v339
    %354 = vst [vmem:[%s2 + $0x68] sm:$0xff] %v340
    // Predicated region
    $region18: #{fcn_forward.3} parent=1 // pred_check
      %p355 = pneg %p26
    $region19: #{fcn_forward.3} parent=1 // pred_check_branch
      %357 = sbr.rel (%p355) target = $region21
    $region20: #{fcn_forward.3} parent=1 // pred_region
      %v358 = vld [vmem:[%s2] sm:$0xff]
      %v359 = vld [vmem:[%s2 + $0x8] sm:$0xff]
      %v360 = vld [vmem:[%s2 + $0x10] sm:$0xff]
      %v361 = vld [vmem:[%s2 + $0x18] sm:$0xff]
      %v362 = vld [vmem:[%s2 + $0x20] sm:$0xff]
      %v363 = vld [vmem:[%s2 + $0x28] sm:$0xff]
      %v364 = vld [vmem:[%s2 + $0x30] sm:$0xff]
      %v365 = vld [vmem:[%s2 + $0x38] sm:$0xff]
      %v366 = vld [vmem:[%s2 + $0x40] sm:$0xff]
      %v367 = vld [vmem:[%s2 + $0x48] sm:$0xff]
      %v368 = vld [vmem:[%s2 + $0x50] sm:$0xff]
      %v369 = vld [vmem:[%s2 + $0x58] sm:$0xff]
      %v370 = vld [vmem:[%s2 + $0x60] sm:$0xff]
      %v371 = vld [vmem:[%s2 + $0x68] sm:$0xff]
      %v372 = vmax.f32 %v358, 0.0
      %v373 = vmax.f32 %v359, 0.0
      %v374 = vmax.f32 %v360, 0.0
      %v375 = vmax.f32 %v361, 0.0
      %v376 = vmax.f32 %v362, 0.0
      %v377 = vmax.f32 %v363, 0.0
      %v378 = vmax.f32 %v364, 0.0
      %v379 = vmax.f32 %v365, 0.0
      %v380 = vmax.f32 %v366, 0.0
      %v381 = vmax.f32 %v367, 0.0
      %v382 = vmax.f32 %v368, 0.0
      %v383 = vmax.f32 %v369, 0.0
      %v384 = vmax.f32 %v370, 0.0
      %v385 = vmax.f32 %v371, 0.0
      %386 = vst [vmem:[%s2] sm:$0xff] %v372
      %387 = vst [vmem:[%s2 + $0x8] sm:$0xff] %v373
      %388 = vst [vmem:[%s2 + $0x10] sm:$0xff] %v374
      %389 = vst [vmem:[%s2 + $0x18] sm:$0xff] %v375
      %390 = vst [vmem:[%s2 + $0x20] sm:$0xff] %v376
      %391 = vst [vmem:[%s2 + $0x28] sm:$0xff] %v377
      %392 = vst [vmem:[%s2 + $0x30] sm:$0xff] %v378
      %393 = vst [vmem:[%s2 + $0x38] sm:$0xff] %v379
      %394 = vst [vmem:[%s2 + $0x40] sm:$0xff] %v380
      %395 = vst [vmem:[%s2 + $0x48] sm:$0xff] %v381
      %396 = vst [vmem:[%s2 + $0x50] sm:$0xff] %v382
      %397 = vst [vmem:[%s2 + $0x58] sm:$0xff] %v383
      %398 = vst [vmem:[%s2 + $0x60] sm:$0xff] %v384
      %399 = vst [vmem:[%s2 + $0x68] sm:$0xff] %v385
    $region21: #{fcn_forward.3} parent=1 // pred_fallthru
      _
    // Predicated region
    $region22: #{fcn_forward.3} parent=1 // pred_check
      _
    $region23: #{fcn_forward.3} parent=1 // pred_check_branch
      %401 = sbr.rel (0) target = $region25
    $region24: #{fcn_forward.3} parent=1 // pred_region
      _
    $region25: #{fcn_forward.3} parent=1 // pred_fallthru
      _
    // Predicated region
    $region26: #{fcn_forward.3} parent=1 // pred_check
      _
    $region27: #{fcn_forward.3} parent=1 // pred_check_branch
      %403 = sbr.rel (0) target = $region29
    $region28: #{fcn_forward.3} parent=1 // pred_region
      _
    $region29: #{fcn_forward.3} parent=1 // pred_fallthru
      _
    %404 = vsyncpa [#allocation3], 1

// kernel: fcn_forward.5
$region0: #{fcn_forward.5}
  #allocation0 [shape = 'u32[]', space=smem, size = 0x4, offset = 0x4, fixed_abs, tag = 'smem constant byte address 0x4 - core index']
  #allocation1 [shape = 'u32[144,128]{1,0:T(1,128)}', space=vmem, size = 0x12000, scoped, tag = 'internal scratch']
  %s0 = inlined_call_operand.vmem [shape: bf16[16,896], index: 0, kind: input, shape index: {}]
  %s1 = inlined_call_operand.vmem [shape: bf16[896,128], index: 1, kind: input, shape index: {}]
  %s2 = inlined_call_operand.vmem [shape: f32[16,128], index: 2, kind: output, shape index: {}]
  %s3 = sld [smem:[#allocation0]]
  $region22: #{fcn_forward.5} parent=0
    _
  %s5 = ssub.s32 1, %s3
  %s6 = scalar_select 0, %s5, %s3
  // Predicated region
  $region2: #{fcn_forward.5} parent=0 // pred_check
    _
  $region3: #{fcn_forward.5} parent=0 // pred_check_branch
    %8 = sbr.rel (0) target = $region5
  $region4: #{fcn_forward.5} parent=0 // pred_region
    _
  $region5: #{fcn_forward.5} parent=0 // pred_fallthru
    _
  // Predicated region
  $region6: #{fcn_forward.5} parent=0 // pred_check
    _
  $region7: #{fcn_forward.5} parent=0 // pred_check_branch
    %10 = sbr.rel (0) target = $region9
  $region8: #{fcn_forward.5} parent=0 // pred_region
    _
  $region9: #{fcn_forward.5} parent=0 // pred_fallthru
    _
  %p12 = scmp.eq.s32.totalorder 0, 0
  // Predicated region
  $region10: #{fcn_forward.5} parent=0 // pred_check
    %p13 = pneg %p12
  $region11: #{fcn_forward.5} parent=0 // pred_check_branch
    %15 = sbr.rel (%p13) target = $region13
  $region12: #{fcn_forward.5} parent=0 // pred_region
    %16 = vst [vmem:[%s2] sm:$0xff] 0.0
    %17 = vst [vmem:[%s2 + $0x8] sm:$0xff] 0.0
  $region13: #{fcn_forward.5} parent=0 // pred_fallthru
    _
  %v18 = vld [vmem:[%s2] sm:$0xff]
  %v19 = vld [vmem:[%s2 + $0x8] sm:$0xff]
  %v20 = vld [vmem:[%s0] sm:$0xff]
  %v21 = vld [vmem:[%s0 + $0x8] sm:$0xff]
  %v22 = vld [vmem:[%s0 + $0x10] sm:$0xff]
  %v23 = vld [vmem:[%s0 + $0x18] sm:$0xf]
  %v24 = vld [vmem:[%s0 + $0x1c] sm:$0xff]
  %v25 = vld [vmem:[%s0 + $0x24] sm:$0xff]
  %v26 = vld [vmem:[%s0 + $0x2c] sm:$0xff]
  %v27 = vld [vmem:[%s0 + $0x34] sm:$0xf]
  %v28 = vld [vmem:[%s1] sm:$0xf]
  %v29 = vld [vmem:[%s1 + $0x4] sm:$0xf]
  %v30 = vld [vmem:[%s1 + $0x8] sm:$0xf]
  %v31 = vld [vmem:[%s1 + $0xc] sm:$0xf]
  %v32 = vld [vmem:[%s1 + $0x10] sm:$0xf]
  %v33 = vld [vmem:[%s1 + $0x14] sm:$0xf]
  %v34 = vld [vmem:[%s1 + $0x18] sm:$0xf]
  %v35 = vld [vmem:[%s1 + $0x1c] sm:$0xf]
  %v36 = vld [vmem:[%s1 + $0x20] sm:$0xf]
  %v37 = vld [vmem:[%s1 + $0x24] sm:$0xf]
  %v38 = vld [vmem:[%s1 + $0x28] sm:$0xf]
  %v39 = vld [vmem:[%s1 + $0x2c] sm:$0xf]
  %v40 = vld [vmem:[%s1 + $0x30] sm:$0xf]
  %v41 = vld [vmem:[%s1 + $0x34] sm:$0xf]
  %v42 = vld [vmem:[%s1 + $0x38] sm:$0xf]
  %v43 = vld [vmem:[%s1 + $0x3c] sm:$0xf]
  %v44 = vld [vmem:[%s1 + $0x40] sm:$0xf]
  %v45 = vld [vmem:[%s1 + $0x44] sm:$0xf]
  %v46 = vld [vmem:[%s1 + $0x48] sm:$0xf]
  %v47 = vld [vmem:[%s1 + $0x4c] sm:$0xf]
  %v48 = vld [vmem:[%s1 + $0x50] sm:$0xf]
  %v49 = vld [vmem:[%s1 + $0x54] sm:$0xf]
  %v50 = vld [vmem:[%s1 + $0x58] sm:$0xf]
  %v51 = vld [vmem:[%s1 + $0x5c] sm:$0xf]
  %v52 = vld [vmem:[%s1 + $0x60] sm:$0xf]
  %v53 = vld [vmem:[%s1 + $0x64] sm:$0xf]
  %v54 = vld [vmem:[%s1 + $0x68] sm:$0xf]
  %v55 = vld [vmem:[%s1 + $0x6c] sm:$0xf]
  %v56 = vld [vmem:[%s1 + $0x70] sm:$0xf]
  %v57 = vld [vmem:[%s1 + $0x74] sm:$0xf]
  %v58 = vld [vmem:[%s1 + $0x78] sm:$0xf]
  %v59 = vld [vmem:[%s1 + $0x7c] sm:$0xf]
  %v60 = vld [vmem:[%s1 + $0x80] sm:$0xf]
  %v61 = vld [vmem:[%s1 + $0x84] sm:$0xf]
  %v62 = vld [vmem:[%s1 + $0x88] sm:$0xf]
  %v63 = vld [vmem:[%s1 + $0x8c] sm:$0xf]
  %v64 = vld [vmem:[%s1 + $0x90] sm:$0xf]
  %v65 = vld [vmem:[%s1 + $0x94] sm:$0xf]
  %v66 = vld [vmem:[%s1 + $0x98] sm:$0xf]
  %v67 = vld [vmem:[%s1 + $0x9c] sm:$0xf]
  %v68 = vld [vmem:[%s1 + $0xa0] sm:$0xf]
  %v69 = vld [vmem:[%s1 + $0xa4] sm:$0xf]
  %v70 = vld [vmem:[%s1 + $0xa8] sm:$0xf]
  %v71 = vld [vmem:[%s1 + $0xac] sm:$0xf]
  %v72 = vld [vmem:[%s1 + $0xb0] sm:$0xf]
  %v73 = vld [vmem:[%s1 + $0xb4] sm:$0xf]
  %v74 = vld [vmem:[%s1 + $0xb8] sm:$0xf]
  %v75 = vld [vmem:[%s1 + $0xbc] sm:$0xf]
  %v76 = vld [vmem:[%s1 + $0xc0] sm:$0xf]
  %v77 = vld [vmem:[%s1 + $0xc4] sm:$0xf]
  %v78 = vld [vmem:[%s1 + $0xc8] sm:$0xf]
  %v79 = vld [vmem:[%s1 + $0xcc] sm:$0xf]
  %v80 = vld [vmem:[%s1 + $0xd0] sm:$0xf]
  %v81 = vld [vmem:[%s1 + $0xd4] sm:$0xf]
  %v82 = vld [vmem:[%s1 + $0xd8] sm:$0xf]
  %v83 = vld [vmem:[%s1 + $0xdc] sm:$0xf]
  %v84 = vld [vmem:[%s1 + $0xe0] sm:$0xf]
  %v85 = vld [vmem:[%s1 + $0xe4] sm:$0xf]
  %v86 = vld [vmem:[%s1 + $0xe8] sm:$0xf]
  %v87 = vld [vmem:[%s1 + $0xec] sm:$0xf]
  %v88 = vld [vmem:[%s1 + $0xf0] sm:$0xf]
  %v89 = vld [vmem:[%s1 + $0xf4] sm:$0xf]
  %v90 = vld [vmem:[%s1 + $0xf8] sm:$0xf]
  %v91 = vld [vmem:[%s1 + $0xfc] sm:$0xf]
  %v92 = vld [vmem:[%s1 + $0x100] sm:$0xf]
  %v93 = vld [vmem:[%s1 + $0x104] sm:$0xf]
  %v94 = vld [vmem:[%s1 + $0x108] sm:$0xf]
  %v95 = vld [vmem:[%s1 + $0x10c] sm:$0xf]
  %v96 = vld [vmem:[%s1 + $0x110] sm:$0xf]
  %v97 = vld [vmem:[%s1 + $0x114] sm:$0xf]
  %v98 = vld [vmem:[%s1 + $0x118] sm:$0xf]
  %v99 = vld [vmem:[%s1 + $0x11c] sm:$0xf]
  %v100 = vld [vmem:[%s1 + $0x120] sm:$0xf]
  %v101 = vld [vmem:[%s1 + $0x124] sm:$0xf]
  %v102 = vld [vmem:[%s1 + $0x128] sm:$0xf]
  %v103 = vld [vmem:[%s1 + $0x12c] sm:$0xf]
  %v104 = vld [vmem:[%s1 + $0x130] sm:$0xf]
  %v105 = vld [vmem:[%s1 + $0x134] sm:$0xf]
  %v106 = vld [vmem:[%s1 + $0x138] sm:$0xf]
  %v107 = vld [vmem:[%s1 + $0x13c] sm:$0xf]
  %v108 = vld [vmem:[%s1 + $0x140] sm:$0xf]
  %v109 = vld [vmem:[%s1 + $0x144] sm:$0xf]
  %v110 = vld [vmem:[%s1 + $0x148] sm:$0xf]
  %v111 = vld [vmem:[%s1 + $0x14c] sm:$0xf]
  %v112 = vld [vmem:[%s1 + $0x150] sm:$0xf]
  %v113 = vld [vmem:[%s1 + $0x154] sm:$0xf]
  %v114 = vld [vmem:[%s1 + $0x158] sm:$0xf]
  %v115 = vld [vmem:[%s1 + $0x15c] sm:$0xf]
  %v116 = vld [vmem:[%s1 + $0x160] sm:$0xf]
  %v117 = vld [vmem:[%s1 + $0x164] sm:$0xf]
  %v118 = vld [vmem:[%s1 + $0x168] sm:$0xf]
  %v119 = vld [vmem:[%s1 + $0x16c] sm:$0xf]
  %v120 = vld [vmem:[%s1 + $0x170] sm:$0xf]
  %v121 = vld [vmem:[%s1 + $0x174] sm:$0xf]
  %v122 = vld [vmem:[%s1 + $0x178] sm:$0xf]
  %v123 = vld [vmem:[%s1 + $0x17c] sm:$0xf]
  %v124 = vld [vmem:[%s1 + $0x180] sm:$0xf]
  %v125 = vld [vmem:[%s1 + $0x184] sm:$0xf]
  %v126 = vld [vmem:[%s1 + $0x188] sm:$0xf]
  %v127 = vld [vmem:[%s1 + $0x18c] sm:$0xf]
  %v128 = vld [vmem:[%s1 + $0x190] sm:$0xf]
  %v129 = vld [vmem:[%s1 + $0x194] sm:$0xf]
  %v130 = vld [vmem:[%s1 + $0x198] sm:$0xf]
  %v131 = vld [vmem:[%s1 + $0x19c] sm:$0xf]
  %v132 = vld [vmem:[%s1 + $0x1a0] sm:$0xf]
  %v133 = vld [vmem:[%s1 + $0x1a4] sm:$0xf]
  %v134 = vld [vmem:[%s1 + $0x1a8] sm:$0xf]
  %v135 = vld [vmem:[%s1 + $0x1ac] sm:$0xf]
  %v136 = vld [vmem:[%s1 + $0x1b0] sm:$0xf]
  %v137 = vld [vmem:[%s1 + $0x1b4] sm:$0xf]
  %v138 = vld [vmem:[%s1 + $0x1b8] sm:$0xf]
  %v139 = vld [vmem:[%s1 + $0x1bc] sm:$0xf]
  %v148 = vunpack.c.l.b16 %v20
  %v149 = vunpack.c.h.b16 %v20
  %v150 = vunpack.c.l.b16 %v21
  %v151 = vunpack.c.h.b16 %v21
  %v152 = vunpack.c.l.b16 %v22
  %v153 = vunpack.c.h.b16 %v22
  %v154 = vunpack.c.l.b16 %v23
  %v155 = vunpack.c.l.b16 %v24
  %v156 = vunpack.c.h.b16 %v24
  %v157 = vunpack.c.l.b16 %v25
  %v158 = vunpack.c.h.b16 %v25
  %v159 = vunpack.c.l.b16 %v26
  %v160 = vunpack.c.h.b16 %v26
  %v161 = vunpack.c.l.b16 %v27
  %v162 = vpack.c.b16 %v155, %v148
  %v163 = vpack.c.b16 %v156, %v149
  %v164 = vpack.c.b16 %v157, %v150
  %v165 = vpack.c.b16 %v158, %v151
  %v166 = vpack.c.b16 %v159, %v152
  %v167 = vpack.c.b16 %v160, %v153
  %v168 = vpack.c.b16 %v161, %v154
  %v288 = vunpack.c.l.b16 %v28
  %v289 = vunpack.c.l.b16 %v29
  %v290 = vunpack.c.l.b16 %v30
  %v291 = vunpack.c.l.b16 %v31
  %v292 = vunpack.c.l.b16 %v32
  %v293 = vunpack.c.l.b16 %v33
  %v294 = vunpack.c.l.b16 %v34
  %v295 = vunpack.c.l.b16 %v35
  %v296 = vunpack.c.l.b16 %v36
  %v297 = vunpack.c.l.b16 %v37
  %v298 = vunpack.c.l.b16 %v38
  %v299 = vunpack.c.l.b16 %v39
  %v300 = vunpack.c.l.b16 %v40
  %v301 = vunpack.c.l.b16 %v41
  %v302 = vunpack.c.l.b16 %v42
  %v303 = vunpack.c.l.b16 %v43
  %v304 = vunpack.c.l.b16 %v44
  %v305 = vunpack.c.l.b16 %v45
  %v306 = vunpack.c.l.b16 %v46
  %v307 = vunpack.c.l.b16 %v47
  %v308 = vunpack.c.l.b16 %v48
  %v309 = vunpack.c.l.b16 %v49
  %v310 = vunpack.c.l.b16 %v50
  %v311 = vunpack.c.l.b16 %v51
  %v312 = vunpack.c.l.b16 %v52
  %v313 = vunpack.c.l.b16 %v53
  %v314 = vunpack.c.l.b16 %v54
  %v315 = vunpack.c.l.b16 %v55
  %v316 = vunpack.c.l.b16 %v56
  %v317 = vunpack.c.l.b16 %v57
  %v318 = vunpack.c.l.b16 %v58
  %v319 = vunpack.c.l.b16 %v59
  %v320 = vunpack.c.l.b16 %v60
  %v321 = vunpack.c.l.b16 %v61
  %v322 = vunpack.c.l.b16 %v62
  %v323 = vunpack.c.l.b16 %v63
  %v324 = vunpack.c.l.b16 %v64
  %v325 = vunpack.c.l.b16 %v65
  %v326 = vunpack.c.l.b16 %v66
  %v327 = vunpack.c.l.b16 %v67
  %v328 = vunpack.c.l.b16 %v68
  %v329 = vunpack.c.l.b16 %v69
  %v330 = vunpack.c.l.b16 %v70
  %v331 = vunpack.c.l.b16 %v71
  %v332 = vunpack.c.l.b16 %v72
  %v333 = vunpack.c.l.b16 %v73
  %v334 = vunpack.c.l.b16 %v74
  %v335 = vunpack.c.l.b16 %v75
  %v336 = vunpack.c.l.b16 %v76
  %v337 = vunpack.c.l.b16 %v77
  %v338 = vunpack.c.l.b16 %v78
  %v339 = vunpack.c.l.b16 %v79
  %v340 = vunpack.c.l.b16 %v80
  %v341 = vunpack.c.l.b16 %v81
  %v342 = vunpack.c.l.b16 %v82
  %v343 = vunpack.c.l.b16 %v83
  %v344 = vunpack.c.l.b16 %v84
  %v345 = vunpack.c.l.b16 %v85
  %v346 = vunpack.c.l.b16 %v86
  %v347 = vunpack.c.l.b16 %v87
  %v348 = vunpack.c.l.b16 %v88
  %v349 = vunpack.c.l.b16 %v89
  %v350 = vunpack.c.l.b16 %v90
  %v351 = vunpack.c.l.b16 %v91
  %v352 = vunpack.c.l.b16 %v92
  %v353 = vunpack.c.l.b16 %v93
  %v354 = vunpack.c.l.b16 %v94
  %v355 = vunpack.c.l.b16 %v95
  %v356 = vunpack.c.l.b16 %v96
  %v357 = vunpack.c.l.b16 %v97
  %v358 = vunpack.c.l.b16 %v98
  %v359 = vunpack.c.l.b16 %v99
  %v360 = vunpack.c.l.b16 %v100
  %v361 = vunpack.c.l.b16 %v101
  %v362 = vunpack.c.l.b16 %v102
  %v363 = vunpack.c.l.b16 %v103
  %v364 = vunpack.c.l.b16 %v104
  %v365 = vunpack.c.l.b16 %v105
  %v366 = vunpack.c.l.b16 %v106
  %v367 = vunpack.c.l.b16 %v107
  %v368 = vunpack.c.l.b16 %v108
  %v369 = vunpack.c.l.b16 %v109
  %v370 = vunpack.c.l.b16 %v110
  %v371 = vunpack.c.l.b16 %v111
  %v372 = vunpack.c.l.b16 %v112
  %v373 = vunpack.c.l.b16 %v113
  %v374 = vunpack.c.l.b16 %v114
  %v375 = vunpack.c.l.b16 %v115
  %v376 = vunpack.c.l.b16 %v116
  %v377 = vunpack.c.l.b16 %v117
  %v378 = vunpack.c.l.b16 %v118
  %v379 = vunpack.c.l.b16 %v119
  %v380 = vunpack.c.l.b16 %v120
  %v381 = vunpack.c.l.b16 %v121
  %v382 = vunpack.c.l.b16 %v122
  %v383 = vunpack.c.l.b16 %v123
  %v384 = vunpack.c.l.b16 %v124
  %v385 = vunpack.c.l.b16 %v125
  %v386 = vunpack.c.l.b16 %v126
  %v387 = vunpack.c.l.b16 %v127
  %v388 = vunpack.c.l.b16 %v128
  %v389 = vunpack.c.l.b16 %v129
  %v390 = vunpack.c.l.b16 %v130
  %v391 = vunpack.c.l.b16 %v131
  %v392 = vunpack.c.l.b16 %v132
  %v393 = vunpack.c.l.b16 %v133
  %v394 = vunpack.c.l.b16 %v134
  %v395 = vunpack.c.l.b16 %v135
  %v396 = vunpack.c.l.b16 %v136
  %v397 = vunpack.c.l.b16 %v137
  %v398 = vunpack.c.l.b16 %v138
  %v399 = vunpack.c.l.b16 %v139
  %v400 = vpack.c.b16 %v289, %v288
  %v401 = vpack.c.b16 %v291, %v290
  %v402 = vpack.c.b16 %v293, %v292
  %v403 = vpack.c.b16 %v295, %v294
  %v404 = vpack.c.b16 %v297, %v296
  %v405 = vpack.c.b16 %v299, %v298
  %v406 = vpack.c.b16 %v301, %v300
  %v407 = vpack.c.b16 %v303, %v302
  %v408 = vpack.c.b16 %v305, %v304
  %v409 = vpack.c.b16 %v307, %v306
  %v410 = vpack.c.b16 %v309, %v308
  %v411 = vpack.c.b16 %v311, %v310
  %v412 = vpack.c.b16 %v313, %v312
  %v413 = vpack.c.b16 %v315, %v314
  %v414 = vpack.c.b16 %v317, %v316
  %v415 = vpack.c.b16 %v319, %v318
  %v416 = vpack.c.b16 %v321, %v320
  %v417 = vpack.c.b16 %v323, %v322
  %v418 = vpack.c.b16 %v325, %v324
  %v419 = vpack.c.b16 %v327, %v326
  %v420 = vpack.c.b16 %v329, %v328
  %v421 = vpack.c.b16 %v331, %v330
  %v422 = vpack.c.b16 %v333, %v332
  %v423 = vpack.c.b16 %v335, %v334
  %v424 = vpack.c.b16 %v337, %v336
  %v425 = vpack.c.b16 %v339, %v338
  %v426 = vpack.c.b16 %v341, %v340
  %v427 = vpack.c.b16 %v343, %v342
  %v428 = vpack.c.b16 %v345, %v344
  %v429 = vpack.c.b16 %v347, %v346
  %v430 = vpack.c.b16 %v349, %v348
  %v431 = vpack.c.b16 %v351, %v350
  %v432 = vpack.c.b16 %v353, %v352
  %v433 = vpack.c.b16 %v355, %v354
  %v434 = vpack.c.b16 %v357, %v356
  %v435 = vpack.c.b16 %v359, %v358
  %v436 = vpack.c.b16 %v361, %v360
  %v437 = vpack.c.b16 %v363, %v362
  %v438 = vpack.c.b16 %v365, %v364
  %v439 = vpack.c.b16 %v367, %v366
  %v440 = vpack.c.b16 %v369, %v368
  %v441 = vpack.c.b16 %v371, %v370
  %v442 = vpack.c.b16 %v373, %v372
  %v443 = vpack.c.b16 %v375, %v374
  %v444 = vpack.c.b16 %v377, %v376
  %v445 = vpack.c.b16 %v379, %v378
  %v446 = vpack.c.b16 %v381, %v380
  %v447 = vpack.c.b16 %v383, %v382
  %v448 = vpack.c.b16 %v385, %v384
  %v449 = vpack.c.b16 %v387, %v386
  %v450 = vpack.c.b16 %v389, %v388
  %v451 = vpack.c.b16 %v391, %v390
  %v452 = vpack.c.b16 %v393, %v392
  %v453 = vpack.c.b16 %v395, %v394
  %v454 = vpack.c.b16 %v397, %v396
  %v455 = vpack.c.b16 %v399, %v398
  %512 = vmatprep.subr.bf16.mxu0 0
  %513 = vmatpush1.bf16.msra.mxu0 %v400
  %514 = vmatprep.subr.bf16.mxu0 0
  %515 = vmatpush1.bf16.msra.mxu0 %v401
  %516 = vmatprep.subr.bf16.mxu0 0
  %517 = vmatpush1.bf16.msra.mxu0 %v402
  %518 = vmatprep.subr.bf16.mxu0 0
  %519 = vmatpush1.bf16.msra.mxu0 %v403
  %520 = vmatprep.subr.bf16.mxu0 0
  %521 = vmatpush1.bf16.msra.mxu0 %v404
  %522 = vmatprep.subr.bf16.mxu0 0
  %523 = vmatpush1.bf16.msra.mxu0 %v405
  %524 = vmatprep.subr.bf16.mxu0 0
  %525 = vmatpush1.bf16.msra.mxu0 %v406
  %526 = vmatprep.subr.bf16.mxu0 0
  %527 = vmatpush1.bf16.msra.mxu0 %v407
  %528 = vmatprep.subr.bf16.mxu0 0
  %529 = vmatpush1.bf16.msra.mxu0 %v408
  %530 = vmatprep.subr.bf16.mxu0 0
  %531 = vmatpush1.bf16.msra.mxu0 %v409
  %532 = vmatprep.subr.bf16.mxu0 0
  %533 = vmatpush1.bf16.msra.mxu0 %v410
  %534 = vmatprep.subr.bf16.mxu0 0
  %535 = vmatpush1.bf16.msra.mxu0 %v411
  %536 = vmatprep.subr.bf16.mxu0 0
  %537 = vmatpush1.bf16.msra.mxu0 %v412
  %538 = vmatprep.subr.bf16.mxu0 0
  %539 = vmatpush1.bf16.msra.mxu0 %v413
  %540 = vmatprep.subr.bf16.mxu0 0
  %541 = vmatpush1.bf16.msra.mxu0 %v414
  %542 = vmatprep.subr.bf16.mxu0 0
  %543 = vmatpush1.bf16.msra.mxu0 %v415
  %544 = vmatprep.mubr.bf16.mxu0 %v163
  %545 = vmatmul.mubr.bf16.gmra.mrb[0].mxu0 %v162
  %v546 = vpop.f32.mrb[0].mxu0
  %v547 = vadd.f32 0.0, %v546
  %v548 = vpop.f32.mrb[0].mxu0
  %v549 = vpop.f32.mrb[0].mxu0
  %v550 = vadd.f32 0.0, %v549
  %v551 = vpop.f32.mrb[0].mxu0
  %552 = vdwg.mxu0
  %553 = vmatprep.subr.bf16.mxu0 0
  %554 = vmatpush1.bf16.msra.mxu0 %v416
  %555 = vmatprep.subr.bf16.mxu0 0
  %556 = vmatpush1.bf16.msra.mxu0 %v417
  %557 = vmatprep.subr.bf16.mxu0 0
  %558 = vmatpush1.bf16.msra.mxu0 %v418
  %559 = vmatprep.subr.bf16.mxu0 0
  %560 = vmatpush1.bf16.msra.mxu0 %v419
  %561 = vmatprep.subr.bf16.mxu0 0
  %562 = vmatpush1.bf16.msra.mxu0 %v420
  %563 = vmatprep.subr.bf16.mxu0 0
  %564 = vmatpush1.bf16.msra.mxu0 %v421
  %565 = vmatprep.subr.bf16.mxu0 0
  %566 = vmatpush1.bf16.msra.mxu0 %v422
  %567 = vmatprep.subr.bf16.mxu0 0
  %568 = vmatpush1.bf16.msra.mxu0 %v423
  %569 = vmatprep.subr.bf16.mxu0 0
  %570 = vmatpush1.bf16.msra.mxu0 %v424
  %571 = vmatprep.subr.bf16.mxu0 0
  %572 = vmatpush1.bf16.msra.mxu0 %v425
  %573 = vmatprep.subr.bf16.mxu0 0
  %574 = vmatpush1.bf16.msra.mxu0 %v426
  %575 = vmatprep.subr.bf16.mxu0 0
  %576 = vmatpush1.bf16.msra.mxu0 %v427
  %577 = vmatprep.subr.bf16.mxu0 0
  %578 = vmatpush1.bf16.msra.mxu0 %v428
  %579 = vmatprep.subr.bf16.mxu0 0
  %580 = vmatpush1.bf16.msra.mxu0 %v429
  %581 = vmatprep.subr.bf16.mxu0 0
  %582 = vmatpush1.bf16.msra.mxu0 %v430
  %583 = vmatprep.subr.bf16.mxu0 0
  %584 = vmatpush1.bf16.msra.mxu0 %v431
  %585 = vmatprep.mubr.bf16.mxu0 %v165
  %586 = vmatmul.mubr.bf16.gmra.mrb[0].mxu0 %v164
  %v587 = vpop.f32.mrb[0].mxu0
  %v588 = vadd.f32 %v547, %v587
  %v589 = vpop.f32.mrb[0].mxu0
  %v590 = vpop.f32.mrb[0].mxu0
  %v591 = vadd.f32 %v550, %v590
  %v592 = vpop.f32.mrb[0].mxu0
  %593 = vdwg.mxu0
  %594 = vmatprep.subr.bf16.mxu0 0
  %595 = vmatpush1.bf16.msra.mxu0 %v432
  %596 = vmatprep.subr.bf16.mxu0 0
  %597 = vmatpush1.bf16.msra.mxu0 %v433
  %598 = vmatprep.subr.bf16.mxu0 0
  %599 = vmatpush1.bf16.msra.mxu0 %v434
  %600 = vmatprep.subr.bf16.mxu0 0
  %601 = vmatpush1.bf16.msra.mxu0 %v435
  %602 = vmatprep.subr.bf16.mxu0 0
  %603 = vmatpush1.bf16.msra.mxu0 %v436
  %604 = vmatprep.subr.bf16.mxu0 0
  %605 = vmatpush1.bf16.msra.mxu0 %v437
  %606 = vmatprep.subr.bf16.mxu0 0
  %607 = vmatpush1.bf16.msra.mxu0 %v438
  %608 = vmatprep.subr.bf16.mxu0 0
  %609 = vmatpush1.bf16.msra.mxu0 %v439
  %610 = vmatprep.subr.bf16.mxu0 0
  %611 = vmatpush1.bf16.msra.mxu0 %v440
  %612 = vmatprep.subr.bf16.mxu0 0
  %613 = vmatpush1.bf16.msra.mxu0 %v441
  %614 = vmatprep.subr.bf16.mxu0 0
  %615 = vmatpush1.bf16.msra.mxu0 %v442
  %616 = vmatprep.subr.bf16.mxu0 0
  %617 = vmatpush1.bf16.msra.mxu0 %v443
  %618 = vmatprep.subr.bf16.mxu0 0
  %619 = vmatpush1.bf16.msra.mxu0 %v444
  %620 = vmatprep.subr.bf16.mxu0 0
  %621 = vmatpush1.bf16.msra.mxu0 %v445
  %622 = vmatprep.subr.bf16.mxu0 0
  %623 = vmatpush1.bf16.msra.mxu0 %v446
  %624 = vmatprep.subr.bf16.mxu0 0
  %625 = vmatpush1.bf16.msra.mxu0 %v447
  %626 = vmatprep.mubr.bf16.mxu0 %v167
  %627 = vmatmul.mubr.bf16.gmra.mrb[0].mxu0 %v166
  %v628 = vpop.f32.mrb[0].mxu0
  %v629 = vadd.f32 %v588, %v628
  %v630 = vpop.f32.mrb[0].mxu0
  %v631 = vpop.f32.mrb[0].mxu0
  %v632 = vadd.f32 %v591, %v631
  %v633 = vpop.f32.mrb[0].mxu0
  %634 = vdwg.mxu0
  %635 = vmatprep.subr.bf16.mxu0 0
  %636 = vmatpush1.bf16.msra.mxu0 %v448
  %637 = vmatprep.subr.bf16.mxu0 0
  %638 = vmatpush1.bf16.msra.mxu0 %v449
  %639 = vmatprep.subr.bf16.mxu0 0
  %640 = vmatpush1.bf16.msra.mxu0 %v450
  %641 = vmatprep.subr.bf16.mxu0 0
  %642 = vmatpush1.bf16.msra.mxu0 %v451
  %643 = vmatprep.subr.bf16.mxu0 0
  %644 = vmatpush1.bf16.msra.mxu0 %v452
  %645 = vmatprep.subr.bf16.mxu0 0
  %646 = vmatpush1.bf16.msra.mxu0 %v453
  %647 = vmatprep.subr.bf16.mxu0 0
  %648 = vmatpush1.bf16.msra.mxu0 %v454
  %649 = vmatprep.subr.bf16.mxu0 0
  %650 = vmatpush1.bf16.msra.mxu0 %v455
  %651 = vmatprep.subr.bf16.mxu0 0
  %652 = vmatpush1.bf16.msra.mxu0 0
  %653 = vmatprep.subr.bf16.mxu0 0
  %654 = vmatpush1.bf16.msra.mxu0 0
  %655 = vmatprep.subr.bf16.mxu0 0
  %656 = vmatpush1.bf16.msra.mxu0 0
  %657 = vmatprep.subr.bf16.mxu0 0
  %658 = vmatpush1.bf16.msra.mxu0 0
  %659 = vmatprep.subr.bf16.mxu0 0
  %660 = vmatpush1.bf16.msra.mxu0 0
  %661 = vmatprep.subr.bf16.mxu0 0
  %662 = vmatpush1.bf16.msra.mxu0 0
  %663 = vmatprep.subr.bf16.mxu0 0
  %664 = vmatpush1.bf16.msra.mxu0 0
  %665 = vmatprep.subr.bf16.mxu0 0
  %666 = vmatpush1.bf16.msra.mxu0 0
  %667 = vmatprep.mubr.bf16.mxu0 0
  %668 = vmatmul.mubr.bf16.gmra.mrb[0].mxu0 %v168
  %v669 = vpop.f32.mrb[0].mxu0
  %v670 = vadd.f32 %v629, %v669
  %v671 = vpop.f32.mrb[0].mxu0
  %v672 = vpop.f32.mrb[0].mxu0
  %v673 = vadd.f32 %v632, %v672
  %v674 = vpop.f32.mrb[0].mxu0
  %675 = vdwg.mxu0
  %v676 = vadd.f32 %v18, %v670
  %v677 = vadd.f32 %v19, %v673
  %678 = vst [vmem:[%s2] sm:$0xff] %v676
  %679 = vst [vmem:[%s2 + $0x8] sm:$0xff] %v677
  // Predicated region
  $region14: #{fcn_forward.5} parent=0 // pred_check
    _
  $region15: #{fcn_forward.5} parent=0 // pred_check_branch
    %681 = sbr.rel (0) target = $region17
  $region16: #{fcn_forward.5} parent=0 // pred_region
    _
  $region17: #{fcn_forward.5} parent=0 // pred_fallthru
    _
  // Predicated region
  $region18: #{fcn_forward.5} parent=0 // pred_check
    _
  $region19: #{fcn_forward.5} parent=0 // pred_check_branch
    %683 = sbr.rel (0) target = $region21
  $region20: #{fcn_forward.5} parent=0 // pred_region
    _
  $region21: #{fcn_forward.5} parent=0 // pred_fallthru
    _

// kernel: fcn_forward.4
$region0: #{fcn_forward.4}
  #allocation0 [shape = 'u32[]', space=smem, size = 0x4, offset = 0x4, fixed_abs, tag = 'smem constant byte address 0x4 - core index']
  #allocation1 [shape = 'u32[144,128]{1,0:T(1,128)}', space=vmem, size = 0x12000, scoped, tag = 'internal scratch']
  %s0 = inlined_call_operand.vmem [shape: bf16[16,896], index: 0, kind: input, shape index: {}]
  %s1 = inlined_call_operand.hbm [shape: bf16[896,896], index: 1, kind: input, shape index: {}]
  %s2 = inlined_call_operand.vmem [shape: f32[16,896], index: 2, kind: output, shape index: {}]
  %s3 = sld [smem:[#allocation0]]
  $region30: #{fcn_forward.4} parent=0
    _
  %s5 = ssub.s32 1, %s3
  %s6 = scalar_select 0, %s5, %s3
  $region1: #{fcn_forward.4} parent=0
    #allocation2 [shape = 'u8[1605632]{0}', space=vmem, size = 0x188000, scoped, tag = 'input window, operand 1, single buffered']
    #allocation3 [shape = 's32[1]{0}', space=sflag, size = 0x4, scoped, tag = 'scoped memory for fcn_forward.4']
    %7 = vsyncpa [#allocation3], 0
    // Predicated region
    $region2: #{fcn_forward.4} parent=1 // pred_check
      _
    $region3: #{fcn_forward.4} parent=1 // pred_check_branch
      %9 = sbr.rel (0) target = $region5
    $region4: #{fcn_forward.4} parent=1 // pred_region
      _
    $region5: #{fcn_forward.4} parent=1 // pred_fallthru
      _
    // Predicated region
    $region6: #{fcn_forward.4} parent=1 // pred_check
      _
    $region7: #{fcn_forward.4} parent=1 // pred_check_branch
      %11 = sbr.rel (0) target = $region9
    $region8: #{fcn_forward.4} parent=1 // pred_region
      %s13 = ssub.s32 50176, 50176
      %14 = vsyncadd [#allocation3], %s13
      %s15 = sshll.u32 [#allocation2], 4
      %s16 = int_to_ptr.vmem [resolvable:$true] %s15
      %21 = dma.hbm_to_vmem [thread:$0]  %s1, 50176, %s16, [#allocation3], 448, 448, 28
    $region9: #{fcn_forward.4} parent=1 // pred_fallthru
      _
    // Predicated region
    $region10: #{fcn_forward.4} parent=1 // pred_check
      _
    $region11: #{fcn_forward.4} parent=1 // pred_check_branch
      %23 = sbr.rel (0) target = $region13
    $region12: #{fcn_forward.4} parent=1 // pred_region
      %24 = dma.done [#allocation3], 50176
    $region13: #{fcn_forward.4} parent=1 // pred_fallthru
      _
    %p26 = scmp.eq.s32.totalorder 0, 0
    // Predicated region
    $region14: #{fcn_forward.4} parent=1 // pred_check
      %p27 = pneg %p26
    $region15: #{fcn_forward.4} parent=1 // pred_check_branch
      %29 = sbr.rel (%p27) target = $region17
    $region16: #{fcn_forward.4} parent=1 // pred_region
      %30 = vst [vmem:[%s2] sm:$0xff] 0.0
      %31 = vst [vmem:[%s2 + $0x8] sm:$0xff] 0.0
      %32 = vst [vmem:[%s2 + $0x10] sm:$0xff] 0.0
      %33 = vst [vmem:[%s2 + $0x18] sm:$0xff] 0.0
      %34 = vst [vmem:[%s2 + $0x20] sm:$0xff] 0.0
      %35 = vst [vmem:[%s2 + $0x28] sm:$0xff] 0.0
      %36 = vst [vmem:[%s2 + $0x30] sm:$0xff] 0.0
      %37 = vst [vmem:[%s2 + $0x38] sm:$0xff] 0.0
      %38 = vst [vmem:[%s2 + $0x40] sm:$0xff] 0.0
      %39 = vst [vmem:[%s2 + $0x48] sm:$0xff] 0.0
      %40 = vst [vmem:[%s2 + $0x50] sm:$0xff] 0.0
      %41 = vst [vmem:[%s2 + $0x58] sm:$0xff] 0.0
      %42 = vst [vmem:[%s2 + $0x60] sm:$0xff] 0.0
      %43 = vst [vmem:[%s2 + $0x68] sm:$0xff] 0.0
    $region17: #{fcn_forward.4} parent=1 // pred_fallthru
      _
    %v44 = vld [vmem:[%s2] sm:$0xff]
    %v45 = vld [vmem:[%s2 + $0x8] sm:$0xff]
    %v46 = vld [vmem:[%s2 + $0x10] sm:$0xff]
    %v47 = vld [vmem:[%s2 + $0x18] sm:$0xff]
    %v48 = vld [vmem:[%s2 + $0x20] sm:$0xff]
    %v49 = vld [vmem:[%s2 + $0x28] sm:$0xff]
    %v50 = vld [vmem:[%s2 + $0x30] sm:$0xff]
    %v51 = vld [vmem:[%s2 + $0x38] sm:$0xff]
    %v52 = vld [vmem:[%s2 + $0x40] sm:$0xff]
    %v53 = vld [vmem:[%s2 + $0x48] sm:$0xff]
    %v54 = vld [vmem:[%s2 + $0x50] sm:$0xff]
    %v55 = vld [vmem:[%s2 + $0x58] sm:$0xff]
    %v56 = vld [vmem:[%s2 + $0x60] sm:$0xff]
    %v57 = vld [vmem:[%s2 + $0x68] sm:$0xff]
    %v58 = vld [vmem:[%s0] sm:$0xff]
    %v59 = vld [vmem:[%s0 + $0x8] sm:$0xff]
    %v60 = vld [vmem:[%s0 + $0x10] sm:$0xff]
    %v61 = vld [vmem:[%s0 + $0x18] sm:$0xf]
    %v62 = vld [vmem:[%s0 + $0x1c] sm:$0xff]
    %v63 = vld [vmem:[%s0 + $0x24] sm:$0xff]
    %v64 = vld [vmem:[%s0 + $0x2c] sm:$0xff]
    %v65 = vld [vmem:[%s0 + $0x34] sm:$0xf]
    %v66 = vld [vmem:[#allocation2] sm:$0xff]
    %v67 = vld [vmem:[#allocation2 + $0x8] sm:$0xff]
    %v68 = vld [vmem:[#allocation2 + $0x10] sm:$0xff]
    %v69 = vld [vmem:[#allocation2 + $0x18] sm:$0xf]
    %v70 = vld [vmem:[#allocation2 + $0x1c] sm:$0xff]
    %v71 = vld [vmem:[#allocation2 + $0x24] sm:$0xff]
    %v72 = vld [vmem:[#allocation2 + $0x2c] sm:$0xff]
    %v73 = vld [vmem:[#allocation2 + $0x34] sm:$0xf]
    %v74 = vld [vmem:[#allocation2 + $0x38] sm:$0xff]
    %v75 = vld [vmem:[#allocation2 + $0x40] sm:$0xff]
    %v76 = vld [vmem:[#allocation2 + $0x48] sm:$0xff]
    %v77 = vld [vmem:[#allocation2 + $0x50] sm:$0xf]
    %v78 = vld [vmem:[#allocation2 + $0x54] sm:$0xff]
    %v79 = vld [vmem:[#allocation2 + $0x5c] sm:$0xff]
    %v80 = vld [vmem:[#allocation2 + $0x64] sm:$0xff]
    %v81 = vld [vmem:[#allocation2 + $0x6c] sm:$0xf]
    %v82 = vld [vmem:[#allocation2 + $0x70] sm:$0xff]
    %v83 = vld [vmem:[#allocation2 + $0x78] sm:$0xff]
    %v84 = vld [vmem:[#allocation2 + $0x80] sm:$0xff]
    %v85 = vld [vmem:[#allocation2 + $0x88] sm:$0xf]
    %v86 = vld [vmem:[#allocation2 + $0x8c] sm:$0xff]
    %v87 = vld [vmem:[#allocation2 + $0x94] sm:$0xff]
    %v88 = vld [vmem:[#allocation2 + $0x9c] sm:$0xff]
    %v89 = vld [vmem:[#allocation2 + $0xa4] sm:$0xf]
    %v90 = vld [vmem:[#allocation2 + $0xa8] sm:$0xff]
    %v91 = vld [vmem:[#allocation2 + $0xb0] sm:$0xff]
    %v92 = vld [vmem:[#allocation2 + $0xb8] sm:$0xff]
    %v93 = vld [vmem:[#allocation2 + $0xc0] sm:$0xf]
    %v94 = vld [vmem:[#allocation2 + $0xc4] sm:$0xff]
    %v95 = vld [vmem:[#allocation2 + $0xcc] sm:$0xff]
    %v96 = vld [vmem:[#allocation2 + $0xd4] sm:$0xff]
    %v97 = vld [vmem:[#allocation2 + $0xdc] sm:$0xf]
    %v98 = vld [vmem:[#allocation2 + $0xe0] sm:$0xff]
    %v99 = vld [vmem:[#allocation2 + $0xe8] sm:$0xff]
    %v100 = vld [vmem:[#allocation2 + $0xf0] sm:$0xff]
    %v101 = vld [vmem:[#allocation2 + $0xf8] sm:$0xf]
    %v102 = vld [vmem:[#allocation2 + $0xfc] sm:$0xff]
    %v103 = vld [vmem:[#allocation2 + $0x104] sm:$0xff]
    %v104 = vld [vmem:[#allocation2 + $0x10c] sm:$0xff]
    %v105 = vld [vmem:[#allocation2 + $0x114] sm:$0xf]
    %v106 = vld [vmem:[#allocation2 + $0x118] sm:$0xff]
    %v107 = vld [vmem:[#allocation2 + $0x120] sm:$0xff]
    %v108 = vld [vmem:[#allocation2 + $0x128] sm:$0xff]
    %v109 = vld [vmem:[#allocation2 + $0x130] sm:$0xf]
    %v110 = vld [vmem:[#allocation2 + $0x134] sm:$0xff]
    %v111 = vld [vmem:[#allocation2 + $0x13c] sm:$0xff]
    %v112 = vld [vmem:[#allocation2 + $0x144] sm:$0xff]
    %v113 = vld [vmem:[#allocation2 + $0x14c] sm:$0xf]
    %v114 = vld [vmem:[#allocation2 + $0x150] sm:$0xff]
    %v115 = vld [vmem:[#allocation2 + $0x158] sm:$0xff]
    %v116 = vld [vmem:[#allocation2 + $0x160] sm:$0xff]
    %v117 = vld [vmem:[#allocation2 + $0x168] sm:$0xf]
    %v118 = vld [vmem:[#allocation2 + $0x16c] sm:$0xff]
    %v119 = vld [vmem:[#allocation2 + $0x174] sm:$0xff]
    %v120 = vld [vmem:[#allocation2 + $0x17c] sm:$0xff]
    %v121 = vld [vmem:[#allocation2 + $0x184] sm:$0xf]
    %v122 = vld [vmem:[#allocation2 + $0x188] sm:$0xff]
    %v123 = vld [vmem:[#allocation2 + $0x190] sm:$0xff]
    %v124 = vld [vmem:[#allocation2 + $0x198] sm:$0xff]
    %v125 = vld [vmem:[#allocation2 + $0x1a0] sm:$0xf]
    %v126 = vld [vmem:[#allocation2 + $0x1a4] sm:$0xff]
    %v127 = vld [vmem:[#allocation2 + $0x1ac] sm:$0xff]
    %v128 = vld [vmem:[#allocation2 + $0x1b4] sm:$0xff]
    %v129 = vld [vmem:[#allocation2 + $0x1bc] sm:$0xf]
    %v130 = vld [vmem:[#allocation2 + $0x1c0] sm:$0xff]
    %v131 = vld [vmem:[#allocation2 + $0x1c8] sm:$0xff]
    %v132 = vld [vmem:[#allocation2 + $0x1d0] sm:$0xff]
    %v133 = vld [vmem:[#allocation2 + $0x1d8] sm:$0xf]
    %v134 = vld [vmem:[#allocation2 + $0x1dc] sm:$0xff]
    %v135 = vld [vmem:[#allocation2 + $0x1e4] sm:$0xff]
    %v136 = vld [vmem:[#allocation2 + $0x1ec] sm:$0xff]
    %v137 = vld [vmem:[#allocation2 + $0x1f4] sm:$0xf]
    %v138 = vld [vmem:[#allocation2 + $0x1f8] sm:$0xff]
    %v139 = vld [vmem:[#allocation2 + $0x200] sm:$0xff]
    %v140 = vld [vmem:[#allocation2 + $0x208] sm:$0xff]
    %v141 = vld [vmem:[#allocation2 + $0x210] sm:$0xf]
    %v142 = vld [vmem:[#allocation2 + $0x214] sm:$0xff]
    %v143 = vld [vmem:[#allocation2 + $0x21c] sm:$0xff]
    %v144 = vld [vmem:[#allocation2 + $0x224] sm:$0xff]
    %v145 = vld [vmem:[#allocation2 + $0x22c] sm:$0xf]
    %v146 = vld [vmem:[#allocation2 + $0x230] sm:$0xff]
    %v147 = vld [vmem:[#allocation2 + $0x238] sm:$0xff]
    %v148 = vld [vmem:[#allocation2 + $0x240] sm:$0xff]
    %v149 = vld [vmem:[#allocation2 + $0x248] sm:$0xf]
    %v150 = vld [vmem:[#allocation2 + $0x24c] sm:$0xff]
    %v151 = vld [vmem:[#allocation2 + $0x254] sm:$0xff]
    %v152 = vld [vmem:[#allocation2 + $0x25c] sm:$0xff]
    %v153 = vld [vmem:[#allocation2 + $0x264] sm:$0xf]
    %v154 = vld [vmem:[#allocation2 + $0x268] sm:$0xff]
    %v155 = vld [vmem:[#allocation2 + $0x270] sm:$0xff]
    %v156 = vld [vmem:[#allocation2 + $0x278] sm:$0xff]
    %v157 = vld [vmem:[#allocation2 + $0x280] sm:$0xf]
    %v158 = vld [vmem:[#allocation2 + $0x284] sm:$0xff]
    %v159 = vld [vmem:[#allocation2 + $0x28c] sm:$0xff]
    %v160 = vld [vmem:[#allocation2 + $0x294] sm:$0xff]
    %v161 = vld [vmem:[#allocation2 + $0x29c] sm:$0xf]
    %v162 = vld [vmem:[#allocation2 + $0x2a0] sm:$0xff]
    %v163 = vld [vmem:[#allocation2 + $0x2a8] sm:$0xff]
    %v164 = vld [vmem:[#allocation2 + $0x2b0] sm:$0xff]
    %v165 = vld [vmem:[#allocation2 + $0x2b8] sm:$0xf]
    %v166 = vld [vmem:[#allocation2 + $0x2bc] sm:$0xff]
    %v167 = vld [vmem:[#allocation2 + $0x2c4] sm:$0xff]
    %v168 = vld [vmem:[#allocation2 + $0x2cc] sm:$0xff]
    %v169 = vld [vmem:[#allocation2 + $0x2d4] sm:$0xf]
    %v170 = vld [vmem:[#allocation2 + $0x2d8] sm:$0xff]
    %v171 = vld [vmem:[#allocation2 + $0x2e0] sm:$0xff]
    %v172 = vld [vmem:[#allocation2 + $0x2e8] sm:$0xff]
    %v173 = vld [vmem:[#allocation2 + $0x2f0] sm:$0xf]
    %v174 = vld [vmem:[#allocation2 + $0x2f4] sm:$0xff]
    %v175 = vld [vmem:[#allocation2 + $0x2fc] sm:$0xff]
    %v176 = vld [vmem:[#allocation2 + $0x304] sm:$0xff]
    %v177 = vld [vmem:[#allocation2 + $0x30c] sm:$0xf]
    %v178 = vld [vmem:[#allocation2 + $0x310] sm:$0xff]
    %v179 = vld [vmem:[#allocation2 + $0x318] sm:$0xff]
    %v180 = vld [vmem:[#allocation2 + $0x320] sm:$0xff]
    %v181 = vld [vmem:[#allocation2 + $0x328] sm:$0xf]
    %v182 = vld [vmem:[#allocation2 + $0x32c] sm:$0xff]
    %v183 = vld [vmem:[#allocation2 + $0x334] sm:$0xff]
    %v184 = vld [vmem:[#allocation2 + $0x33c] sm:$0xff]
    %v185 = vld [vmem:[#allocation2 + $0x344] sm:$0xf]
    %v186 = vld [vmem:[#allocation2 + $0x348] sm:$0xff]
    %v187 = vld [vmem:[#allocation2 + $0x350] sm:$0xff]
    %v188 = vld [vmem:[#allocation2 + $0x358] sm:$0xff]
    %v189 = vld [vmem:[#allocation2 + $0x360] sm:$0xf]
    %v190 = vld [vmem:[#allocation2 + $0x364] sm:$0xff]
    %v191 = vld [vmem:[#allocation2 + $0x36c] sm:$0xff]
    %v192 = vld [vmem:[#allocation2 + $0x374] sm:$0xff]
    %v193 = vld [vmem:[#allocation2 + $0x37c] sm:$0xf]
    %v194 = vld [vmem:[#allocation2 + $0x380] sm:$0xff]
    %v195 = vld [vmem:[#allocation2 + $0x388] sm:$0xff]
    %v196 = vld [vmem:[#allocation2 + $0x390] sm:$0xff]
    %v197 = vld [vmem:[#allocation2 + $0x398] sm:$0xf]
    %v198 = vld [vmem:[#allocation2 + $0x39c] sm:$0xff]
    %v199 = vld [vmem:[#allocation2 + $0x3a4] sm:$0xff]
    %v200 = vld [vmem:[#allocation2 + $0x3ac] sm:$0xff]
    %v201 = vld [vmem:[#allocation2 + $0x3b4] sm:$0xf]
    %v202 = vld [vmem:[#allocation2 + $0x3b8] sm:$0xff]
    %v203 = vld [vmem:[#allocation2 + $0x3c0] sm:$0xff]
    %v204 = vld [vmem:[#allocation2 + $0x3c8] sm:$0xff]
    %v205 = vld [vmem:[#allocation2 + $0x3d0] sm:$0xf]
    %v206 = vld [vmem:[#allocation2 + $0x3d4] sm:$0xff]
    %v207 = vld [vmem:[#allocation2 + $0x3dc] sm:$0xff]
    %v208 = vld [vmem:[#allocation2 + $0x3e4] sm:$0xff]
    %v209 = vld [vmem:[#allocation2 + $0x3ec] sm:$0xf]
    %v210 = vld [vmem:[#allocation2 + $0x3f0] sm:$0xff]
    %v211 = vld [vmem:[#allocation2 + $0x3f8] sm:$0xff]
    %v212 = vld [vmem:[#allocation2 + $0x400] sm:$0xff]
    %v213 = vld [vmem:[#allocation2 + $0x408] sm:$0xf]
    %v214 = vld [vmem:[#allocation2 + $0x40c] sm:$0xff]
    %v215 = vld [vmem:[#allocation2 + $0x414] sm:$0xff]
    %v216 = vld [vmem:[#allocation2 + $0x41c] sm:$0xff]
    %v217 = vld [vmem:[#allocation2 + $0x424] sm:$0xf]
    %v218 = vld [vmem:[#allocation2 + $0x428] sm:$0xff]
    %v219 = vld [vmem:[#allocation2 + $0x430] sm:$0xff]
    %v220 = vld [vmem:[#allocation2 + $0x438] sm:$0xff]
    %v221 = vld [vmem:[#allocation2 + $0x440] sm:$0xf]
    %v222 = vld [vmem:[#allocation2 + $0x444] sm:$0xff]
    %v223 = vld [vmem:[#allocation2 + $0x44c] sm:$0xff]
    %v224 = vld [vmem:[#allocation2 + $0x454] sm:$0xff]
    %v225 = vld [vmem:[#allocation2 + $0x45c] sm:$0xf]
    %v226 = vld [vmem:[#allocation2 + $0x460] sm:$0xff]
    %v227 = vld [vmem:[#allocation2 + $0x468] sm:$0xff]
    %v228 = vld [vmem:[#allocation2 + $0x470] sm:$0xff]
    %v229 = vld [vmem:[#allocation2 + $0x478] sm:$0xf]
    %v230 = vld [vmem:[#allocation2 + $0x47c] sm:$0xff]
    %v231 = vld [vmem:[#allocation2 + $0x484] sm:$0xff]
    %v232 = vld [vmem:[#allocation2 + $0x48c] sm:$0xff]
    %v233 = vld [vmem:[#allocation2 + $0x494] sm:$0xf]
    %v234 = vld [vmem:[#allocation2 + $0x498] sm:$0xff]
    %v235 = vld [vmem:[#allocation2 + $0x4a0] sm:$0xff]
    %v236 = vld [vmem:[#allocation2 + $0x4a8] sm:$0xff]
    %v237 = vld [vmem:[#allocation2 + $0x4b0] sm:$0xf]
    %v238 = vld [vmem:[#allocation2 + $0x4b4] sm:$0xff]
    %v239 = vld [vmem:[#allocation2 + $0x4bc] sm:$0xff]
    %v240 = vld [vmem:[#allocation2 + $0x4c4] sm:$0xff]
    %v241 = vld [vmem:[#allocation2 + $0x4cc] sm:$0xf]
    %v242 = vld [vmem:[#allocation2 + $0x4d0] sm:$0xff]
    %v243 = vld [vmem:[#allocation2 + $0x4d8] sm:$0xff]
    %v244 = vld [vmem:[#allocation2 + $0x4e0] sm:$0xff]
    %v245 = vld [vmem:[#allocation2 + $0x4e8] sm:$0xf]
    %v246 = vld [vmem:[#allocation2 + $0x4ec] sm:$0xff]
    %v247 = vld [vmem:[#allocation2 + $0x4f4] sm:$0xff]
    %v248 = vld [vmem:[#allocation2 + $0x4fc] sm:$0xff]
    %v249 = vld [vmem:[#allocation2 + $0x504] sm:$0xf]
    %v250 = vld [vmem:[#allocation2 + $0x508] sm:$0xff]
    %v251 = vld [vmem:[#allocation2 + $0x510] sm:$0xff]
    %v252 = vld [vmem:[#allocation2 + $0x518] sm:$0xff]
    %v253 = vld [vmem:[#allocation2 + $0x520] sm:$0xf]
    %v254 = vld [vmem:[#allocation2 + $0x524] sm:$0xff]
    %v255 = vld [vmem:[#allocation2 + $0x52c] sm:$0xff]
    %v256 = vld [vmem:[#allocation2 + $0x534] sm:$0xff]
    %v257 = vld [vmem:[#allocation2 + $0x53c] sm:$0xf]
    %v258 = vld [vmem:[#allocation2 + $0x540] sm:$0xff]
    %v259 = vld [vmem:[#allocation2 + $0x548] sm:$0xff]
    %v260 = vld [vmem:[#allocation2 + $0x550] sm:$0xff]
    %v261 = vld [vmem:[#allocation2 + $0x558] sm:$0xf]
    %v262 = vld [vmem:[#allocation2 + $0x55c] sm:$0xff]
    %v263 = vld [vmem:[#allocation2 + $0x564] sm:$0xff]
    %v264 = vld [vmem:[#allocation2 + $0x56c] sm:$0xff]
    %v265 = vld [vmem:[#allocation2 + $0x574] sm:$0xf]
    %v266 = vld [vmem:[#allocation2 + $0x578] sm:$0xff]
    %v267 = vld [vmem:[#allocation2 + $0x580] sm:$0xff]
    %v268 = vld [vmem:[#allocation2 + $0x588] sm:$0xff]
    %v269 = vld [vmem:[#allocation2 + $0x590] sm:$0xf]
    %v270 = vld [vmem:[#allocation2 + $0x594] sm:$0xff]
    %v271 = vld [vmem:[#allocation2 + $0x59c] sm:$0xff]
    %v272 = vld [vmem:[#allocation2 + $0x5a4] sm:$0xff]
    %v273 = vld [vmem:[#allocation2 + $0x5ac] sm:$0xf]
    %v274 = vld [vmem:[#allocation2 + $0x5b0] sm:$0xff]
    %v275 = vld [vmem:[#allocation2 + $0x5b8] sm:$0xff]
    %v276 = vld [vmem:[#allocation2 + $0x5c0] sm:$0xff]
    %v277 = vld [vmem:[#allocation2 + $0x5c8] sm:$0xf]
    %v278 = vld [vmem:[#allocation2 + $0x5cc] sm:$0xff]
    %v279 = vld [vmem:[#allocation2 + $0x5d4] sm:$0xff]
    %v280 = vld [vmem:[#allocation2 + $0x5dc] sm:$0xff]
    %v281 = vld [vmem:[#allocation2 + $0x5e4] sm:$0xf]
    %v282 = vld [vmem:[#allocation2 + $0x5e8] sm:$0xff]
    %v283 = vld [vmem:[#allocation2 + $0x5f0] sm:$0xff]
    %v284 = vld [vmem:[#allocation2 + $0x5f8] sm:$0xff]
    %v285 = vld [vmem:[#allocation2 + $0x600] sm:$0xf]
    %v286 = vld [vmem:[#allocation2 + $0x604] sm:$0xff]
    %v287 = vld [vmem:[#allocation2 + $0x60c] sm:$0xff]
    %v288 = vld [vmem:[#allocation2 + $0x614] sm:$0xff]
    %v289 = vld [vmem:[#allocation2 + $0x61c] sm:$0xf]
    %v290 = vld [vmem:[#allocation2 + $0x620] sm:$0xff]
    %v291 = vld [vmem:[#allocation2 + $0x628] sm:$0xff]
    %v292 = vld [vmem:[#allocation2 + $0x630] sm:$0xff]
    %v293 = vld [vmem:[#allocation2 + $0x638] sm:$0xf]
    %v294 = vld [vmem:[#allocation2 + $0x63c] sm:$0xff]
    %v295 = vld [vmem:[#allocation2 + $0x644] sm:$0xff]
    %v296 = vld [vmem:[#allocation2 + $0x64c] sm:$0xff]
    %v297 = vld [vmem:[#allocation2 + $0x654] sm:$0xf]
    %v298 = vld [vmem:[#allocation2 + $0x658] sm:$0xff]
    %v299 = vld [vmem:[#allocation2 + $0x660] sm:$0xff]
    %v300 = vld [vmem:[#allocation2 + $0x668] sm:$0xff]
    %v301 = vld [vmem:[#allocation2 + $0x670] sm:$0xf]
    %v302 = vld [vmem:[#allocation2 + $0x674] sm:$0xff]
    %v303 = vld [vmem:[#allocation2 + $0x67c] sm:$0xff]
    %v304 = vld [vmem:[#allocation2 + $0x684] sm:$0xff]
    %v305 = vld [vmem:[#allocation2 + $0x68c] sm:$0xf]
    %v306 = vld [vmem:[#allocation2 + $0x690] sm:$0xff]
    %v307 = vld [vmem:[#allocation2 + $0x698] sm:$0xff]
    %v308 = vld [vmem:[#allocation2 + $0x6a0] sm:$0xff]
    %v309 = vld [vmem:[#allocation2 + $0x6a8] sm:$0xf]
    %v310 = vld [vmem:[#allocation2 + $0x6ac] sm:$0xff]
    %v311 = vld [vmem:[#allocation2 + $0x6b4] sm:$0xff]
    %v312 = vld [vmem:[#allocation2 + $0x6bc] sm:$0xff]
    %v313 = vld [vmem:[#allocation2 + $0x6c4] sm:$0xf]
    %v314 = vld [vmem:[#allocation2 + $0x6c8] sm:$0xff]
    %v315 = vld [vmem:[#allocation2 + $0x6d0] sm:$0xff]
    %v316 = vld [vmem:[#allocation2 + $0x6d8] sm:$0xff]
    %v317 = vld [vmem:[#allocation2 + $0x6e0] sm:$0xf]
    %v318 = vld [vmem:[#allocation2 + $0x6e4] sm:$0xff]
    %v319 = vld [vmem:[#allocation2 + $0x6ec] sm:$0xff]
    %v320 = vld [vmem:[#allocation2 + $0x6f4] sm:$0xff]
    %v321 = vld [vmem:[#allocation2 + $0x6fc] sm:$0xf]
    %v322 = vld [vmem:[#allocation2 + $0x700] sm:$0xff]
    %v323 = vld [vmem:[#allocation2 + $0x708] sm:$0xff]
    %v324 = vld [vmem:[#allocation2 + $0x710] sm:$0xff]
    %v325 = vld [vmem:[#allocation2 + $0x718] sm:$0xf]
    %v326 = vld [vmem:[#allocation2 + $0x71c] sm:$0xff]
    %v327 = vld [vmem:[#allocation2 + $0x724] sm:$0xff]
    %v328 = vld [vmem:[#allocation2 + $0x72c] sm:$0xff]
    %v329 = vld [vmem:[#allocation2 + $0x734] sm:$0xf]
    %v330 = vld [vmem:[#allocation2 + $0x738] sm:$0xff]
    %v331 = vld [vmem:[#allocation2 + $0x740] sm:$0xff]
    %v332 = vld [vmem:[#allocation2 + $0x748] sm:$0xff]
    %v333 = vld [vmem:[#allocation2 + $0x750] sm:$0xf]
    %v334 = vld [vmem:[#allocation2 + $0x754] sm:$0xff]
    %v335 = vld [vmem:[#allocation2 + $0x75c] sm:$0xff]
    %v336 = vld [vmem:[#allocation2 + $0x764] sm:$0xff]
    %v337 = vld [vmem:[#allocation2 + $0x76c] sm:$0xf]
    %v338 = vld [vmem:[#allocation2 + $0x770] sm:$0xff]
    %v339 = vld [vmem:[#allocation2 + $0x778] sm:$0xff]
    %v340 = vld [vmem:[#allocation2 + $0x780] sm:$0xff]
    %v341 = vld [vmem:[#allocation2 + $0x788] sm:$0xf]
    %v342 = vld [vmem:[#allocation2 + $0x78c] sm:$0xff]
    %v343 = vld [vmem:[#allocation2 + $0x794] sm:$0xff]
    %v344 = vld [vmem:[#allocation2 + $0x79c] sm:$0xff]
    %v345 = vld [vmem:[#allocation2 + $0x7a4] sm:$0xf]
    %v346 = vld [vmem:[#allocation2 + $0x7a8] sm:$0xff]
    %v347 = vld [vmem:[#allocation2 + $0x7b0] sm:$0xff]
    %v348 = vld [vmem:[#allocation2 + $0x7b8] sm:$0xff]
    %v349 = vld [vmem:[#allocation2 + $0x7c0] sm:$0xf]
    %v350 = vld [vmem:[#allocation2 + $0x7c4] sm:$0xff]
    %v351 = vld [vmem:[#allocation2 + $0x7cc] sm:$0xff]
    %v352 = vld [vmem:[#allocation2 + $0x7d4] sm:$0xff]
    %v353 = vld [vmem:[#allocation2 + $0x7dc] sm:$0xf]
    %v354 = vld [vmem:[#allocation2 + $0x7e0] sm:$0xff]
    %v355 = vld [vmem:[#allocation2 + $0x7e8] sm:$0xff]
    %v356 = vld [vmem:[#allocation2 + $0x7f0] sm:$0xff]
    %v357 = vld [vmem:[#allocation2 + $0x7f8] sm:$0xf]
    %v358 = vld [vmem:[#allocation2 + $0x7fc] sm:$0xff]
    %v359 = vld [vmem:[#allocation2 + $0x804] sm:$0xff]
    %v360 = vld [vmem:[#allocation2 + $0x80c] sm:$0xff]
    %v361 = vld [vmem:[#allocation2 + $0x814] sm:$0xf]
    %v362 = vld [vmem:[#allocation2 + $0x818] sm:$0xff]
    %v363 = vld [vmem:[#allocation2 + $0x820] sm:$0xff]
    %v364 = vld [vmem:[#allocation2 + $0x828] sm:$0xff]
    %v365 = vld [vmem:[#allocation2 + $0x830] sm:$0xf]
    %v366 = vld [vmem:[#allocation2 + $0x834] sm:$0xff]
    %v367 = vld [vmem:[#allocation2 + $0x83c] sm:$0xff]
    %v368 = vld [vmem:[#allocation2 + $0x844] sm:$0xff]
    %v369 = vld [vmem:[#allocation2 + $0x84c] sm:$0xf]
    %v370 = vld [vmem:[#allocation2 + $0x850] sm:$0xff]
    %v371 = vld [vmem:[#allocation2 + $0x858] sm:$0xff]
    %v372 = vld [vmem:[#allocation2 + $0x860] sm:$0xff]
    %v373 = vld [vmem:[#allocation2 + $0x868] sm:$0xf]
    %v374 = vld [vmem:[#allocation2 + $0x86c] sm:$0xff]
    %v375 = vld [vmem:[#allocation2 + $0x874] sm:$0xff]
    %v376 = vld [vmem:[#allocation2 + $0x87c] sm:$0xff]
    %v377 = vld [vmem:[#allocation2 + $0x884] sm:$0xf]
    %v378 = vld [vmem:[#allocation2 + $0x888] sm:$0xff]
    %v379 = vld [vmem:[#allocation2 + $0x890] sm:$0xff]
    %v380 = vld [vmem:[#allocation2 + $0x898] sm:$0xff]
    %v381 = vld [vmem:[#allocation2 + $0x8a0] sm:$0xf]
    %v382 = vld [vmem:[#allocation2 + $0x8a4] sm:$0xff]
    %v383 = vld [vmem:[#allocation2 + $0x8ac] sm:$0xff]
    %v384 = vld [vmem:[#allocation2 + $0x8b4] sm:$0xff]
    %v385 = vld [vmem:[#allocation2 + $0x8bc] sm:$0xf]
    %v386 = vld [vmem:[#allocation2 + $0x8c0] sm:$0xff]
    %v387 = vld [vmem:[#allocation2 + $0x8c8] sm:$0xff]
    %v388 = vld [vmem:[#allocation2 + $0x8d0] sm:$0xff]
    %v389 = vld [vmem:[#allocation2 + $0x8d8] sm:$0xf]
    %v390 = vld [vmem:[#allocation2 + $0x8dc] sm:$0xff]
    %v391 = vld [vmem:[#allocation2 + $0x8e4] sm:$0xff]
    %v392 = vld [vmem:[#allocation2 + $0x8ec] sm:$0xff]
    %v393 = vld [vmem:[#allocation2 + $0x8f4] sm:$0xf]
    %v394 = vld [vmem:[#allocation2 + $0x8f8] sm:$0xff]
    %v395 = vld [vmem:[#allocation2 + $0x900] sm:$0xff]
    %v396 = vld [vmem:[#allocation2 + $0x908] sm:$0xff]
    %v397 = vld [vmem:[#allocation2 + $0x910] sm:$0xf]
    %v398 = vld [vmem:[#allocation2 + $0x914] sm:$0xff]
    %v399 = vld [vmem:[#allocation2 + $0x91c] sm:$0xff]
    %v400 = vld [vmem:[#allocation2 + $0x924] sm:$0xff]
    %v401 = vld [vmem:[#allocation2 + $0x92c] sm:$0xf]
    %v402 = vld [vmem:[#allocation2 + $0x930] sm:$0xff]
    %v403 = vld [vmem:[#allocation2 + $0x938] sm:$0xff]
    %v404 = vld [vmem:[#allocation2 + $0x940] sm:$0xff]
    %v405 = vld [vmem:[#allocation2 + $0x948] sm:$0xf]
    %v406 = vld [vmem:[#allocation2 + $0x94c] sm:$0xff]
    %v407 = vld [vmem:[#allocation2 + $0x954] sm:$0xff]
    %v408 = vld [vmem:[#allocation2 + $0x95c] sm:$0xff]
    %v409 = vld [vmem:[#allocation2 + $0x964] sm:$0xf]
    %v410 = vld [vmem:[#allocation2 + $0x968] sm:$0xff]
    %v411 = vld [vmem:[#allocation2 + $0x970] sm:$0xff]
    %v412 = vld [vmem:[#allocation2 + $0x978] sm:$0xff]
    %v413 = vld [vmem:[#allocation2 + $0x980] sm:$0xf]
    %v414 = vld [vmem:[#allocation2 + $0x984] sm:$0xff]
    %v415 = vld [vmem:[#allocation2 + $0x98c] sm:$0xff]
    %v416 = vld [vmem:[#allocation2 + $0x994] sm:$0xff]
    %v417 = vld [vmem:[#allocation2 + $0x99c] sm:$0xf]
    %v418 = vld [vmem:[#allocation2 + $0x9a0] sm:$0xff]
    %v419 = vld [vmem:[#allocation2 + $0x9a8] sm:$0xff]
    %v420 = vld [vmem:[#allocation2 + $0x9b0] sm:$0xff]
    %v421 = vld [vmem:[#allocation2 + $0x9b8] sm:$0xf]
    %v422 = vld [vmem:[#allocation2 + $0x9bc] sm:$0xff]
    %v423 = vld [vmem:[#allocation2 + $0x9c4] sm:$0xff]
    %v424 = vld [vmem:[#allocation2 + $0x9cc] sm:$0xff]
    %v425 = vld [vmem:[#allocation2 + $0x9d4] sm:$0xf]
    %v426 = vld [vmem:[#allocation2 + $0x9d8] sm:$0xff]
    %v427 = vld [vmem:[#allocation2 + $0x9e0] sm:$0xff]
    %v428 = vld [vmem:[#allocation2 + $0x9e8] sm:$0xff]
    %v429 = vld [vmem:[#allocation2 + $0x9f0] sm:$0xf]
    %v430 = vld [vmem:[#allocation2 + $0x9f4] sm:$0xff]
    %v431 = vld [vmem:[#allocation2 + $0x9fc] sm:$0xff]
    %v432 = vld [vmem:[#allocation2 + $0xa04] sm:$0xff]
    %v433 = vld [vmem:[#allocation2 + $0xa0c] sm:$0xf]
    %v434 = vld [vmem:[#allocation2 + $0xa10] sm:$0xff]
    %v435 = vld [vmem:[#allocation2 + $0xa18] sm:$0xff]
    %v436 = vld [vmem:[#allocation2 + $0xa20] sm:$0xff]
    %v437 = vld [vmem:[#allocation2 + $0xa28] sm:$0xf]
    %v438 = vld [vmem:[#allocation2 + $0xa2c] sm:$0xff]
    %v439 = vld [vmem:[#allocation2 + $0xa34] sm:$0xff]
    %v440 = vld [vmem:[#allocation2 + $0xa3c] sm:$0xff]
    %v441 = vld [vmem:[#allocation2 + $0xa44] sm:$0xf]
    %v442 = vld [vmem:[#allocation2 + $0xa48] sm:$0xff]
    %v443 = vld [vmem:[#allocation2 + $0xa50] sm:$0xff]
    %v444 = vld [vmem:[#allocation2 + $0xa58] sm:$0xff]
    %v445 = vld [vmem:[#allocation2 + $0xa60] sm:$0xf]
    %v446 = vld [vmem:[#allocation2 + $0xa64] sm:$0xff]
    %v447 = vld [vmem:[#allocation2 + $0xa6c] sm:$0xff]
    %v448 = vld [vmem:[#allocation2 + $0xa74] sm:$0xff]
    %v449 = vld [vmem:[#allocation2 + $0xa7c] sm:$0xf]
    %v450 = vld [vmem:[#allocation2 + $0xa80] sm:$0xff]
    %v451 = vld [vmem:[#allocation2 + $0xa88] sm:$0xff]
    %v452 = vld [vmem:[#allocation2 + $0xa90] sm:$0xff]
    %v453 = vld [vmem:[#allocation2 + $0xa98] sm:$0xf]
    %v454 = vld [vmem:[#allocation2 + $0xa9c] sm:$0xff]
    %v455 = vld [vmem:[#allocation2 + $0xaa4] sm:$0xff]
    %v456 = vld [vmem:[#allocation2 + $0xaac] sm:$0xff]
    %v457 = vld [vmem:[#allocation2 + $0xab4] sm:$0xf]
    %v458 = vld [vmem:[#allocation2 + $0xab8] sm:$0xff]
    %v459 = vld [vmem:[#allocation2 + $0xac0] sm:$0xff]
    %v460 = vld [vmem:[#allocation2 + $0xac8] sm:$0xff]
    %v461 = vld [vmem:[#allocation2 + $0xad0] sm:$0xf]
    %v462 = vld [vmem:[#allocation2 + $0xad4] sm:$0xff]
    %v463 = vld [vmem:[#allocation2 + $0xadc] sm:$0xff]
    %v464 = vld [vmem:[#allocation2 + $0xae4] sm:$0xff]
    %v465 = vld [vmem:[#allocation2 + $0xaec] sm:$0xf]
    %v466 = vld [vmem:[#allocation2 + $0xaf0] sm:$0xff]
    %v467 = vld [vmem:[#allocation2 + $0xaf8] sm:$0xff]
    %v468 = vld [vmem:[#allocation2 + $0xb00] sm:$0xff]
    %v469 = vld [vmem:[#allocation2 + $0xb08] sm:$0xf]
    %v470 = vld [vmem:[#allocation2 + $0xb0c] sm:$0xff]
    %v471 = vld [vmem:[#allocation2 + $0xb14] sm:$0xff]
    %v472 = vld [vmem:[#allocation2 + $0xb1c] sm:$0xff]
    %v473 = vld [vmem:[#allocation2 + $0xb24] sm:$0xf]
    %v474 = vld [vmem:[#allocation2 + $0xb28] sm:$0xff]
    %v475 = vld [vmem:[#allocation2 + $0xb30] sm:$0xff]
    %v476 = vld [vmem:[#allocation2 + $0xb38] sm:$0xff]
    %v477 = vld [vmem:[#allocation2 + $0xb40] sm:$0xf]
    %v478 = vld [vmem:[#allocation2 + $0xb44] sm:$0xff]
    %v479 = vld [vmem:[#allocation2 + $0xb4c] sm:$0xff]
    %v480 = vld [vmem:[#allocation2 + $0xb54] sm:$0xff]
    %v481 = vld [vmem:[#allocation2 + $0xb5c] sm:$0xf]
    %v482 = vld [vmem:[#allocation2 + $0xb60] sm:$0xff]
    %v483 = vld [vmem:[#allocation2 + $0xb68] sm:$0xff]
    %v484 = vld [vmem:[#allocation2 + $0xb70] sm:$0xff]
    %v485 = vld [vmem:[#allocation2 + $0xb78] sm:$0xf]
    %v486 = vld [vmem:[#allocation2 + $0xb7c] sm:$0xff]
    %v487 = vld [vmem:[#allocation2 + $0xb84] sm:$0xff]
    %v488 = vld [vmem:[#allocation2 + $0xb8c] sm:$0xff]
    %v489 = vld [vmem:[#allocation2 + $0xb94] sm:$0xf]
    %v490 = vld [vmem:[#allocation2 + $0xb98] sm:$0xff]
    %v491 = vld [vmem:[#allocation2 + $0xba0] sm:$0xff]
    %v492 = vld [vmem:[#allocation2 + $0xba8] sm:$0xff]
    %v493 = vld [vmem:[#allocation2 + $0xbb0] sm:$0xf]
    %v494 = vld [vmem:[#allocation2 + $0xbb4] sm:$0xff]
    %v495 = vld [vmem:[#allocation2 + $0xbbc] sm:$0xff]
    %v496 = vld [vmem:[#allocation2 + $0xbc4] sm:$0xff]
    %v497 = vld [vmem:[#allocation2 + $0xbcc] sm:$0xf]
    %v498 = vld [vmem:[#allocation2 + $0xbd0] sm:$0xff]
    %v499 = vld [vmem:[#allocation2 + $0xbd8] sm:$0xff]
    %v500 = vld [vmem:[#allocation2 + $0xbe0] sm:$0xff]
    %v501 = vld [vmem:[#allocation2 + $0xbe8] sm:$0xf]
    %v502 = vld [vmem:[#allocation2 + $0xbec] sm:$0xff]
    %v503 = vld [vmem:[#allocation2 + $0xbf4] sm:$0xff]
    %v504 = vld [vmem:[#allocation2 + $0xbfc] sm:$0xff]
    %v505 = vld [vmem:[#allocation2 + $0xc04] sm:$0xf]
    %v506 = vld [vmem:[#allocation2 + $0xc08] sm:$0xff]
    %v507 = vld [vmem:[#allocation2 + $0xc10] sm:$0xff]
    %v508 = vld [vmem:[#allocation2 + $0xc18] sm:$0xff]
    %v509 = vld [vmem:[#allocation2 + $0xc20] sm:$0xf]
    %v510 = vld [vmem:[#allocation2 + $0xc24] sm:$0xff]
    %v511 = vld [vmem:[#allocation2 + $0xc2c] sm:$0xff]
    %v512 = vld [vmem:[#allocation2 + $0xc34] sm:$0xff]
    %v513 = vld [vmem:[#allocation2 + $0xc3c] sm:$0xf]
    %v522 = vunpack.c.l.b16 %v58
    %v523 = vunpack.c.h.b16 %v58
    %v524 = vunpack.c.l.b16 %v59
    %v525 = vunpack.c.h.b16 %v59
    %v526 = vunpack.c.l.b16 %v60
    %v527 = vunpack.c.h.b16 %v60
    %v528 = vunpack.c.l.b16 %v61
    %v529 = vunpack.c.l.b16 %v62
    %v530 = vunpack.c.h.b16 %v62
    %v531 = vunpack.c.l.b16 %v63
    %v532 = vunpack.c.h.b16 %v63
    %v533 = vunpack.c.l.b16 %v64
    %v534 = vunpack.c.h.b16 %v64
    %v535 = vunpack.c.l.b16 %v65
    %v536 = vpack.c.b16 %v529, %v522
    %v537 = vpack.c.b16 %v530, %v523
    %v538 = vpack.c.b16 %v531, %v524
    %v539 = vpack.c.b16 %v532, %v525
    %v540 = vpack.c.b16 %v533, %v526
    %v541 = vpack.c.b16 %v534, %v527
    %v542 = vpack.c.b16 %v535, %v528
    %v998 = vunpack.c.l.b16 %v66
    %v999 = vunpack.c.h.b16 %v66
    %v1000 = vunpack.c.l.b16 %v67
    %v1001 = vunpack.c.h.b16 %v67
    %v1002 = vunpack.c.l.b16 %v68
    %v1003 = vunpack.c.h.b16 %v68
    %v1004 = vunpack.c.l.b16 %v69
    %v1005 = vunpack.c.l.b16 %v70
    %v1006 = vunpack.c.h.b16 %v70
    %v1007 = vunpack.c.l.b16 %v71
    %v1008 = vunpack.c.h.b16 %v71
    %v1009 = vunpack.c.l.b16 %v72
    %v1010 = vunpack.c.h.b16 %v72
    %v1011 = vunpack.c.l.b16 %v73
    %v1012 = vunpack.c.l.b16 %v74
    %v1013 = vunpack.c.h.b16 %v74
    %v1014 = vunpack.c.l.b16 %v75
    %v1015 = vunpack.c.h.b16 %v75
    %v1016 = vunpack.c.l.b16 %v76
    %v1017 = vunpack.c.h.b16 %v76
    %v1018 = vunpack.c.l.b16 %v77
    %v1019 = vunpack.c.l.b16 %v78
    %v1020 = vunpack.c.h.b16 %v78
    %v1021 = vunpack.c.l.b16 %v79
    %v1022 = vunpack.c.h.b16 %v79
    %v1023 = vunpack.c.l.b16 %v80
    %v1024 = vunpack.c.h.b16 %v80
    %v1025 = vunpack.c.l.b16 %v81
    %v1026 = vunpack.c.l.b16 %v82
    %v1027 = vunpack.c.h.b16 %v82
    %v1028 = vunpack.c.l.b16 %v83
    %v1029 = vunpack.c.h.b16 %v83
    %v1030 = vunpack.c.l.b16 %v84
    %v1031 = vunpack.c.h.b16 %v84
    %v1032 = vunpack.c.l.b16 %v85
    %v1033 = vunpack.c.l.b16 %v86
    %v1034 = vunpack.c.h.b16 %v86
    %v1035 = vunpack.c.l.b16 %v87
    %v1036 = vunpack.c.h.b16 %v87
    %v1037 = vunpack.c.l.b16 %v88
    %v1038 = vunpack.c.h.b16 %v88
    %v1039 = vunpack.c.l.b16 %v89
    %v1040 = vunpack.c.l.b16 %v90
    %v1041 = vunpack.c.h.b16 %v90
    %v1042 = vunpack.c.l.b16 %v91
    %v1043 = vunpack.c.h.b16 %v91
    %v1044 = vunpack.c.l.b16 %v92
    %v1045 = vunpack.c.h.b16 %v92
    %v1046 = vunpack.c.l.b16 %v93
    %v1047 = vunpack.c.l.b16 %v94
    %v1048 = vunpack.c.h.b16 %v94
    %v1049 = vunpack.c.l.b16 %v95
    %v1050 = vunpack.c.h.b16 %v95
    %v1051 = vunpack.c.l.b16 %v96
    %v1052 = vunpack.c.h.b16 %v96
    %v1053 = vunpack.c.l.b16 %v97
    %v1054 = vunpack.c.l.b16 %v98
    %v1055 = vunpack.c.h.b16 %v98
    %v1056 = vunpack.c.l.b16 %v99
    %v1057 = vunpack.c.h.b16 %v99
    %v1058 = vunpack.c.l.b16 %v100
    %v1059 = vunpack.c.h.b16 %v100
    %v1060 = vunpack.c.l.b16 %v101
    %v1061 = vunpack.c.l.b16 %v102
    %v1062 = vunpack.c.h.b16 %v102
    %v1063 = vunpack.c.l.b16 %v103
    %v1064 = vunpack.c.h.b16 %v103
    %v1065 = vunpack.c.l.b16 %v104
    %v1066 = vunpack.c.h.b16 %v104
    %v1067 = vunpack.c.l.b16 %v105
    %v1068 = vunpack.c.l.b16 %v106
    %v1069 = vunpack.c.h.b16 %v106
    %v1070 = vunpack.c.l.b16 %v107
    %v1071 = vunpack.c.h.b16 %v107
    %v1072 = vunpack.c.l.b16 %v108
    %v1073 = vunpack.c.h.b16 %v108
    %v1074 = vunpack.c.l.b16 %v109
    %v1075 = vunpack.c.l.b16 %v110
    %v1076 = vunpack.c.h.b16 %v110
    %v1077 = vunpack.c.l.b16 %v111
    %v1078 = vunpack.c.h.b16 %v111
    %v1079 = vunpack.c.l.b16 %v112
    %v1080 = vunpack.c.h.b16 %v112
    %v1081 = vunpack.c.l.b16 %v113
    %v1082 = vunpack.c.l.b16 %v114
    %v1083 = vunpack.c.h.b16 %v114
    %v1084 = vunpack.c.l.b16 %v115
    %v1085 = vunpack.c.h.b16 %v115
    %v1086 = vunpack.c.l.b16 %v116
    %v1087 = vunpack.c.h.b16 %v116
    %v1088 = vunpack.c.l.b16 %v117
    %v1089 = vunpack.c.l.b16 %v118
    %v1090 = vunpack.c.h.b16 %v118
    %v1091 = vunpack.c.l.b16 %v119
    %v1092 = vunpack.c.h.b16 %v119
    %v1093 = vunpack.c.l.b16 %v120
    %v1094 = vunpack.c.h.b16 %v120
    %v1095 = vunpack.c.l.b16 %v121
    %v1096 = vunpack.c.l.b16 %v122
    %v1097 = vunpack.c.h.b16 %v122
    %v1098 = vunpack.c.l.b16 %v123
    %v1099 = vunpack.c.h.b16 %v123
    %v1100 = vunpack.c.l.b16 %v124
    %v1101 = vunpack.c.h.b16 %v124
    %v1102 = vunpack.c.l.b16 %v125
    %v1103 = vunpack.c.l.b16 %v126
    %v1104 = vunpack.c.h.b16 %v126
    %v1105 = vunpack.c.l.b16 %v127
    %v1106 = vunpack.c.h.b16 %v127
    %v1107 = vunpack.c.l.b16 %v128
    %v1108 = vunpack.c.h.b16 %v128
    %v1109 = vunpack.c.l.b16 %v129
    %v1110 = vunpack.c.l.b16 %v130
    %v1111 = vunpack.c.h.b16 %v130
    %v1112 = vunpack.c.l.b16 %v131
    %v1113 = vunpack.c.h.b16 %v131
    %v1114 = vunpack.c.l.b16 %v132
    %v1115 = vunpack.c.h.b16 %v132
    %v1116 = vunpack.c.l.b16 %v133
    %v1117 = vunpack.c.l.b16 %v134
    %v1118 = vunpack.c.h.b16 %v134
    %v1119 = vunpack.c.l.b16 %v135
    %v1120 = vunpack.c.h.b16 %v135
    %v1121 = vunpack.c.l.b16 %v136
    %v1122 = vunpack.c.h.b16 %v136
    %v1123 = vunpack.c.l.b16 %v137
    %v1124 = vunpack.c.l.b16 %v138
    %v1125 = vunpack.c.h.b16 %v138
    %v1126 = vunpack.c.l.b16 %v139
    %v1127 = vunpack.c.h.b16 %v139
    %v1128 = vunpack.c.l.b16 %v140
    %v1129 = vunpack.c.h.b16 %v140
    %v1130 = vunpack.c.l.b16 %v141
    %v1131 = vunpack.c.l.b16 %v142
    %v1132 = vunpack.c.h.b16 %v142
    %v1133 = vunpack.c.l.b16 %v143
    %v1134 = vunpack.c.h.b16 %v143
    %v1135 = vunpack.c.l.b16 %v144
    %v1136 = vunpack.c.h.b16 %v144
    %v1137 = vunpack.c.l.b16 %v145
    %v1138 = vunpack.c.l.b16 %v146
    %v1139 = vunpack.c.h.b16 %v146
    %v1140 = vunpack.c.l.b16 %v147
    %v1141 = vunpack.c.h.b16 %v147
    %v1142 = vunpack.c.l.b16 %v148
    %v1143 = vunpack.c.h.b16 %v148
    %v1144 = vunpack.c.l.b16 %v149
    %v1145 = vunpack.c.l.b16 %v150
    %v1146 = vunpack.c.h.b16 %v150
    %v1147 = vunpack.c.l.b16 %v151
    %v1148 = vunpack.c.h.b16 %v151
    %v1149 = vunpack.c.l.b16 %v152
    %v1150 = vunpack.c.h.b16 %v152
    %v1151 = vunpack.c.l.b16 %v153
    %v1152 = vunpack.c.l.b16 %v154
    %v1153 = vunpack.c.h.b16 %v154
    %v1154 = vunpack.c.l.b16 %v155
    %v1155 = vunpack.c.h.b16 %v155
    %v1156 = vunpack.c.l.b16 %v156
    %v1157 = vunpack.c.h.b16 %v156
    %v1158 = vunpack.c.l.b16 %v157
    %v1159 = vunpack.c.l.b16 %v158
    %v1160 = vunpack.c.h.b16 %v158
    %v1161 = vunpack.c.l.b16 %v159
    %v1162 = vunpack.c.h.b16 %v159
    %v1163 = vunpack.c.l.b16 %v160
    %v1164 = vunpack.c.h.b16 %v160
    %v1165 = vunpack.c.l.b16 %v161
    %v1166 = vunpack.c.l.b16 %v162
    %v1167 = vunpack.c.h.b16 %v162
    %v1168 = vunpack.c.l.b16 %v163
    %v1169 = vunpack.c.h.b16 %v163
    %v1170 = vunpack.c.l.b16 %v164
    %v1171 = vunpack.c.h.b16 %v164
    %v1172 = vunpack.c.l.b16 %v165
    %v1173 = vunpack.c.l.b16 %v166
    %v1174 = vunpack.c.h.b16 %v166
    %v1175 = vunpack.c.l.b16 %v167
    %v1176 = vunpack.c.h.b16 %v167
    %v1177 = vunpack.c.l.b16 %v168
    %v1178 = vunpack.c.h.b16 %v168
    %v1179 = vunpack.c.l.b16 %v169
    %v1180 = vunpack.c.l.b16 %v170
    %v1181 = vunpack.c.h.b16 %v170
    %v1182 = vunpack.c.l.b16 %v171
    %v1183 = vunpack.c.h.b16 %v171
    %v1184 = vunpack.c.l.b16 %v172
    %v1185 = vunpack.c.h.b16 %v172
    %v1186 = vunpack.c.l.b16 %v173
    %v1187 = vunpack.c.l.b16 %v174
    %v1188 = vunpack.c.h.b16 %v174
    %v1189 = vunpack.c.l.b16 %v175
    %v1190 = vunpack.c.h.b16 %v175
    %v1191 = vunpack.c.l.b16 %v176
    %v1192 = vunpack.c.h.b16 %v176
    %v1193 = vunpack.c.l.b16 %v177
    %v1194 = vunpack.c.l.b16 %v178
    %v1195 = vunpack.c.h.b16 %v178
    %v1196 = vunpack.c.l.b16 %v179
    %v1197 = vunpack.c.h.b16 %v179
    %v1198 = vunpack.c.l.b16 %v180
    %v1199 = vunpack.c.h.b16 %v180
    %v1200 = vunpack.c.l.b16 %v181
    %v1201 = vunpack.c.l.b16 %v182
    %v1202 = vunpack.c.h.b16 %v182
    %v1203 = vunpack.c.l.b16 %v183
    %v1204 = vunpack.c.h.b16 %v183
    %v1205 = vunpack.c.l.b16 %v184
    %v1206 = vunpack.c.h.b16 %v184
    %v1207 = vunpack.c.l.b16 %v185
    %v1208 = vunpack.c.l.b16 %v186
    %v1209 = vunpack.c.h.b16 %v186
    %v1210 = vunpack.c.l.b16 %v187
    %v1211 = vunpack.c.h.b16 %v187
    %v1212 = vunpack.c.l.b16 %v188
    %v1213 = vunpack.c.h.b16 %v188
    %v1214 = vunpack.c.l.b16 %v189
    %v1215 = vunpack.c.l.b16 %v190
    %v1216 = vunpack.c.h.b16 %v190
    %v1217 = vunpack.c.l.b16 %v191
    %v1218 = vunpack.c.h.b16 %v191
    %v1219 = vunpack.c.l.b16 %v192
    %v1220 = vunpack.c.h.b16 %v192
    %v1221 = vunpack.c.l.b16 %v193
    %v1222 = vunpack.c.l.b16 %v194
    %v1223 = vunpack.c.h.b16 %v194
    %v1224 = vunpack.c.l.b16 %v195
    %v1225 = vunpack.c.h.b16 %v195
    %v1226 = vunpack.c.l.b16 %v196
    %v1227 = vunpack.c.h.b16 %v196
    %v1228 = vunpack.c.l.b16 %v197
    %v1229 = vunpack.c.l.b16 %v198
    %v1230 = vunpack.c.h.b16 %v198
    %v1231 = vunpack.c.l.b16 %v199
    %v1232 = vunpack.c.h.b16 %v199
    %v1233 = vunpack.c.l.b16 %v200
    %v1234 = vunpack.c.h.b16 %v200
    %v1235 = vunpack.c.l.b16 %v201
    %v1236 = vunpack.c.l.b16 %v202
    %v1237 = vunpack.c.h.b16 %v202
    %v1238 = vunpack.c.l.b16 %v203
    %v1239 = vunpack.c.h.b16 %v203
    %v1240 = vunpack.c.l.b16 %v204
    %v1241 = vunpack.c.h.b16 %v204
    %v1242 = vunpack.c.l.b16 %v205
    %v1243 = vunpack.c.l.b16 %v206
    %v1244 = vunpack.c.h.b16 %v206
    %v1245 = vunpack.c.l.b16 %v207
    %v1246 = vunpack.c.h.b16 %v207
    %v1247 = vunpack.c.l.b16 %v208
    %v1248 = vunpack.c.h.b16 %v208
    %v1249 = vunpack.c.l.b16 %v209
    %v1250 = vunpack.c.l.b16 %v210
    %v1251 = vunpack.c.h.b16 %v210
    %v1252 = vunpack.c.l.b16 %v211
    %v1253 = vunpack.c.h.b16 %v211
    %v1254 = vunpack.c.l.b16 %v212
    %v1255 = vunpack.c.h.b16 %v212
    %v1256 = vunpack.c.l.b16 %v213
    %v1257 = vunpack.c.l.b16 %v214
    %v1258 = vunpack.c.h.b16 %v214
    %v1259 = vunpack.c.l.b16 %v215
    %v1260 = vunpack.c.h.b16 %v215
    %v1261 = vunpack.c.l.b16 %v216
    %v1262 = vunpack.c.h.b16 %v216
    %v1263 = vunpack.c.l.b16 %v217
    %v1264 = vunpack.c.l.b16 %v218
    %v1265 = vunpack.c.h.b16 %v218
    %v1266 = vunpack.c.l.b16 %v219
    %v1267 = vunpack.c.h.b16 %v219
    %v1268 = vunpack.c.l.b16 %v220
    %v1269 = vunpack.c.h.b16 %v220
    %v1270 = vunpack.c.l.b16 %v221
    %v1271 = vunpack.c.l.b16 %v222
    %v1272 = vunpack.c.h.b16 %v222
    %v1273 = vunpack.c.l.b16 %v223
    %v1274 = vunpack.c.h.b16 %v223
    %v1275 = vunpack.c.l.b16 %v224
    %v1276 = vunpack.c.h.b16 %v224
    %v1277 = vunpack.c.l.b16 %v225
    %v1278 = vunpack.c.l.b16 %v226
    %v1279 = vunpack.c.h.b16 %v226
    %v1280 = vunpack.c.l.b16 %v227
    %v1281 = vunpack.c.h.b16 %v227
    %v1282 = vunpack.c.l.b16 %v228
    %v1283 = vunpack.c.h.b16 %v228
    %v1284 = vunpack.c.l.b16 %v229
    %v1285 = vunpack.c.l.b16 %v230
    %v1286 = vunpack.c.h.b16 %v230
    %v1287 = vunpack.c.l.b16 %v231
    %v1288 = vunpack.c.h.b16 %v231
    %v1289 = vunpack.c.l.b16 %v232
    %v1290 = vunpack.c.h.b16 %v232
    %v1291 = vunpack.c.l.b16 %v233
    %v1292 = vunpack.c.l.b16 %v234
    %v1293 = vunpack.c.h.b16 %v234
    %v1294 = vunpack.c.l.b16 %v235
    %v1295 = vunpack.c.h.b16 %v235
    %v1296 = vunpack.c.l.b16 %v236
    %v1297 = vunpack.c.h.b16 %v236
    %v1298 = vunpack.c.l.b16 %v237
    %v1299 = vunpack.c.l.b16 %v238
    %v1300 = vunpack.c.h.b16 %v238
    %v1301 = vunpack.c.l.b16 %v239
    %v1302 = vunpack.c.h.b16 %v239
    %v1303 = vunpack.c.l.b16 %v240
    %v1304 = vunpack.c.h.b16 %v240
    %v1305 = vunpack.c.l.b16 %v241
    %v1306 = vunpack.c.l.b16 %v242
    %v1307 = vunpack.c.h.b16 %v242
    %v1308 = vunpack.c.l.b16 %v243
    %v1309 = vunpack.c.h.b16 %v243
    %v1310 = vunpack.c.l.b16 %v244
    %v1311 = vunpack.c.h.b16 %v244
    %v1312 = vunpack.c.l.b16 %v245
    %v1313 = vunpack.c.l.b16 %v246
    %v1314 = vunpack.c.h.b16 %v246
    %v1315 = vunpack.c.l.b16 %v247
    %v1316 = vunpack.c.h.b16 %v247
    %v1317 = vunpack.c.l.b16 %v248
    %v1318 = vunpack.c.h.b16 %v248
    %v1319 = vunpack.c.l.b16 %v249
    %v1320 = vunpack.c.l.b16 %v250
    %v1321 = vunpack.c.h.b16 %v250
    %v1322 = vunpack.c.l.b16 %v251
    %v1323 = vunpack.c.h.b16 %v251
    %v1324 = vunpack.c.l.b16 %v252
    %v1325 = vunpack.c.h.b16 %v252
    %v1326 = vunpack.c.l.b16 %v253
    %v1327 = vunpack.c.l.b16 %v254
    %v1328 = vunpack.c.h.b16 %v254
    %v1329 = vunpack.c.l.b16 %v255
    %v1330 = vunpack.c.h.b16 %v255
    %v1331 = vunpack.c.l.b16 %v256
    %v1332 = vunpack.c.h.b16 %v256
    %v1333 = vunpack.c.l.b16 %v257
    %v1334 = vunpack.c.l.b16 %v258
    %v1335 = vunpack.c.h.b16 %v258
    %v1336 = vunpack.c.l.b16 %v259
    %v1337 = vunpack.c.h.b16 %v259
    %v1338 = vunpack.c.l.b16 %v260
    %v1339 = vunpack.c.h.b16 %v260
    %v1340 = vunpack.c.l.b16 %v261
    %v1341 = vunpack.c.l.b16 %v262
    %v1342 = vunpack.c.h.b16 %v262
    %v1343 = vunpack.c.l.b16 %v263
    %v1344 = vunpack.c.h.b16 %v263
    %v1345 = vunpack.c.l.b16 %v264
    %v1346 = vunpack.c.h.b16 %v264
    %v1347 = vunpack.c.l.b16 %v265
    %v1348 = vunpack.c.l.b16 %v266
    %v1349 = vunpack.c.h.b16 %v266
    %v1350 = vunpack.c.l.b16 %v267
    %v1351 = vunpack.c.h.b16 %v267
    %v1352 = vunpack.c.l.b16 %v268
    %v1353 = vunpack.c.h.b16 %v268
    %v1354 = vunpack.c.l.b16 %v269
    %v1355 = vunpack.c.l.b16 %v270
    %v1356 = vunpack.c.h.b16 %v270
    %v1357 = vunpack.c.l.b16 %v271
    %v1358 = vunpack.c.h.b16 %v271
    %v1359 = vunpack.c.l.b16 %v272
    %v1360 = vunpack.c.h.b16 %v272
    %v1361 = vunpack.c.l.b16 %v273
    %v1362 = vunpack.c.l.b16 %v274
    %v1363 = vunpack.c.h.b16 %v274
    %v1364 = vunpack.c.l.b16 %v275
    %v1365 = vunpack.c.h.b16 %v275
    %v1366 = vunpack.c.l.b16 %v276
    %v1367 = vunpack.c.h.b16 %v276
    %v1368 = vunpack.c.l.b16 %v277
    %v1369 = vunpack.c.l.b16 %v278
    %v1370 = vunpack.c.h.b16 %v278
    %v1371 = vunpack.c.l.b16 %v279
    %v1372 = vunpack.c.h.b16 %v279
    %v1373 = vunpack.c.l.b16 %v280
    %v1374 = vunpack.c.h.b16 %v280
    %v1375 = vunpack.c.l.b16 %v281
    %v1376 = vunpack.c.l.b16 %v282
    %v1377 = vunpack.c.h.b16 %v282
    %v1378 = vunpack.c.l.b16 %v283
    %v1379 = vunpack.c.h.b16 %v283
    %v1380 = vunpack.c.l.b16 %v284
    %v1381 = vunpack.c.h.b16 %v284
    %v1382 = vunpack.c.l.b16 %v285
    %v1383 = vunpack.c.l.b16 %v286
    %v1384 = vunpack.c.h.b16 %v286
    %v1385 = vunpack.c.l.b16 %v287
    %v1386 = vunpack.c.h.b16 %v287
    %v1387 = vunpack.c.l.b16 %v288
    %v1388 = vunpack.c.h.b16 %v288
    %v1389 = vunpack.c.l.b16 %v289
    %v1390 = vunpack.c.l.b16 %v290
    %v1391 = vunpack.c.h.b16 %v290
    %v1392 = vunpack.c.l.b16 %v291
    %v1393 = vunpack.c.h.b16 %v291
    %v1394 = vunpack.c.l.b16 %v292
    %v1395 = vunpack.c.h.b16 %v292
    %v1396 = vunpack.c.l.b16 %v293
    %v1397 = vunpack.c.l.b16 %v294
    %v1398 = vunpack.c.h.b16 %v294
    %v1399 = vunpack.c.l.b16 %v295
    %v1400 = vunpack.c.h.b16 %v295
    %v1401 = vunpack.c.l.b16 %v296
    %v1402 = vunpack.c.h.b16 %v296
    %v1403 = vunpack.c.l.b16 %v297
    %v1404 = vunpack.c.l.b16 %v298
    %v1405 = vunpack.c.h.b16 %v298
    %v1406 = vunpack.c.l.b16 %v299
    %v1407 = vunpack.c.h.b16 %v299
    %v1408 = vunpack.c.l.b16 %v300
    %v1409 = vunpack.c.h.b16 %v300
    %v1410 = vunpack.c.l.b16 %v301
    %v1411 = vunpack.c.l.b16 %v302
    %v1412 = vunpack.c.h.b16 %v302
    %v1413 = vunpack.c.l.b16 %v303
    %v1414 = vunpack.c.h.b16 %v303
    %v1415 = vunpack.c.l.b16 %v304
    %v1416 = vunpack.c.h.b16 %v304
    %v1417 = vunpack.c.l.b16 %v305
    %v1418 = vunpack.c.l.b16 %v306
    %v1419 = vunpack.c.h.b16 %v306
    %v1420 = vunpack.c.l.b16 %v307
    %v1421 = vunpack.c.h.b16 %v307
    %v1422 = vunpack.c.l.b16 %v308
    %v1423 = vunpack.c.h.b16 %v308
    %v1424 = vunpack.c.l.b16 %v309
    %v1425 = vunpack.c.l.b16 %v310
    %v1426 = vunpack.c.h.b16 %v310
    %v1427 = vunpack.c.l.b16 %v311
    %v1428 = vunpack.c.h.b16 %v311
    %v1429 = vunpack.c.l.b16 %v312
    %v1430 = vunpack.c.h.b16 %v312
    %v1431 = vunpack.c.l.b16 %v313
    %v1432 = vunpack.c.l.b16 %v314
    %v1433 = vunpack.c.h.b16 %v314
    %v1434 = vunpack.c.l.b16 %v315
    %v1435 = vunpack.c.h.b16 %v315
    %v1436 = vunpack.c.l.b16 %v316
    %v1437 = vunpack.c.h.b16 %v316
    %v1438 = vunpack.c.l.b16 %v317
    %v1439 = vunpack.c.l.b16 %v318
    %v1440 = vunpack.c.h.b16 %v318
    %v1441 = vunpack.c.l.b16 %v319
    %v1442 = vunpack.c.h.b16 %v319
    %v1443 = vunpack.c.l.b16 %v320
    %v1444 = vunpack.c.h.b16 %v320
    %v1445 = vunpack.c.l.b16 %v321
    %v1446 = vunpack.c.l.b16 %v322
    %v1447 = vunpack.c.h.b16 %v322
    %v1448 = vunpack.c.l.b16 %v323
    %v1449 = vunpack.c.h.b16 %v323
    %v1450 = vunpack.c.l.b16 %v324
    %v1451 = vunpack.c.h.b16 %v324
    %v1452 = vunpack.c.l.b16 %v325
    %v1453 = vunpack.c.l.b16 %v326
    %v1454 = vunpack.c.h.b16 %v326
    %v1455 = vunpack.c.l.b16 %v327
    %v1456 = vunpack.c.h.b16 %v327
    %v1457 = vunpack.c.l.b16 %v328
    %v1458 = vunpack.c.h.b16 %v328
    %v1459 = vunpack.c.l.b16 %v329
    %v1460 = vunpack.c.l.b16 %v330
    %v1461 = vunpack.c.h.b16 %v330
    %v1462 = vunpack.c.l.b16 %v331
    %v1463 = vunpack.c.h.b16 %v331
    %v1464 = vunpack.c.l.b16 %v332
    %v1465 = vunpack.c.h.b16 %v332
    %v1466 = vunpack.c.l.b16 %v333
    %v1467 = vunpack.c.l.b16 %v334
    %v1468 = vunpack.c.h.b16 %v334
    %v1469 = vunpack.c.l.b16 %v335
    %v1470 = vunpack.c.h.b16 %v335
    %v1471 = vunpack.c.l.b16 %v336
    %v1472 = vunpack.c.h.b16 %v336
    %v1473 = vunpack.c.l.b16 %v337
    %v1474 = vunpack.c.l.b16 %v338
    %v1475 = vunpack.c.h.b16 %v338
    %v1476 = vunpack.c.l.b16 %v339
    %v1477 = vunpack.c.h.b16 %v339
    %v1478 = vunpack.c.l.b16 %v340
    %v1479 = vunpack.c.h.b16 %v340
    %v1480 = vunpack.c.l.b16 %v341
    %v1481 = vunpack.c.l.b16 %v342
    %v1482 = vunpack.c.h.b16 %v342
    %v1483 = vunpack.c.l.b16 %v343
    %v1484 = vunpack.c.h.b16 %v343
    %v1485 = vunpack.c.l.b16 %v344
    %v1486 = vunpack.c.h.b16 %v344
    %v1487 = vunpack.c.l.b16 %v345
    %v1488 = vunpack.c.l.b16 %v346
    %v1489 = vunpack.c.h.b16 %v346
    %v1490 = vunpack.c.l.b16 %v347
    %v1491 = vunpack.c.h.b16 %v347
    %v1492 = vunpack.c.l.b16 %v348
    %v1493 = vunpack.c.h.b16 %v348
    %v1494 = vunpack.c.l.b16 %v349
    %v1495 = vunpack.c.l.b16 %v350
    %v1496 = vunpack.c.h.b16 %v350
    %v1497 = vunpack.c.l.b16 %v351
    %v1498 = vunpack.c.h.b16 %v351
    %v1499 = vunpack.c.l.b16 %v352
    %v1500 = vunpack.c.h.b16 %v352
    %v1501 = vunpack.c.l.b16 %v353
    %v1502 = vunpack.c.l.b16 %v354
    %v1503 = vunpack.c.h.b16 %v354
    %v1504 = vunpack.c.l.b16 %v355
    %v1505 = vunpack.c.h.b16 %v355
    %v1506 = vunpack.c.l.b16 %v356
    %v1507 = vunpack.c.h.b16 %v356
    %v1508 = vunpack.c.l.b16 %v357
    %v1509 = vunpack.c.l.b16 %v358
    %v1510 = vunpack.c.h.b16 %v358
    %v1511 = vunpack.c.l.b16 %v359
    %v1512 = vunpack.c.h.b16 %v359
    %v1513 = vunpack.c.l.b16 %v360
    %v1514 = vunpack.c.h.b16 %v360
    %v1515 = vunpack.c.l.b16 %v361
    %v1516 = vunpack.c.l.b16 %v362
    %v1517 = vunpack.c.h.b16 %v362
    %v1518 = vunpack.c.l.b16 %v363
    %v1519 = vunpack.c.h.b16 %v363
    %v1520 = vunpack.c.l.b16 %v364
    %v1521 = vunpack.c.h.b16 %v364
    %v1522 = vunpack.c.l.b16 %v365
    %v1523 = vunpack.c.l.b16 %v366
    %v1524 = vunpack.c.h.b16 %v366
    %v1525 = vunpack.c.l.b16 %v367
    %v1526 = vunpack.c.h.b16 %v367
    %v1527 = vunpack.c.l.b16 %v368
    %v1528 = vunpack.c.h.b16 %v368
    %v1529 = vunpack.c.l.b16 %v369
    %v1530 = vunpack.c.l.b16 %v370
    %v1531 = vunpack.c.h.b16 %v370
    %v1532 = vunpack.c.l.b16 %v371
    %v1533 = vunpack.c.h.b16 %v371
    %v1534 = vunpack.c.l.b16 %v372
    %v1535 = vunpack.c.h.b16 %v372
    %v1536 = vunpack.c.l.b16 %v373
    %v1537 = vunpack.c.l.b16 %v374
    %v1538 = vunpack.c.h.b16 %v374
    %v1539 = vunpack.c.l.b16 %v375
    %v1540 = vunpack.c.h.b16 %v375
    %v1541 = vunpack.c.l.b16 %v376
    %v1542 = vunpack.c.h.b16 %v376
    %v1543 = vunpack.c.l.b16 %v377
    %v1544 = vunpack.c.l.b16 %v378
    %v1545 = vunpack.c.h.b16 %v378
    %v1546 = vunpack.c.l.b16 %v379
    %v1547 = vunpack.c.h.b16 %v379
    %v1548 = vunpack.c.l.b16 %v380
    %v1549 = vunpack.c.h.b16 %v380
    %v1550 = vunpack.c.l.b16 %v381
    %v1551 = vunpack.c.l.b16 %v382
    %v1552 = vunpack.c.h.b16 %v382
    %v1553 = vunpack.c.l.b16 %v383
    %v1554 = vunpack.c.h.b16 %v383
    %v1555 = vunpack.c.l.b16 %v384
    %v1556 = vunpack.c.h.b16 %v384
    %v1557 = vunpack.c.l.b16 %v385
    %v1558 = vunpack.c.l.b16 %v386
    %v1559 = vunpack.c.h.b16 %v386
    %v1560 = vunpack.c.l.b16 %v387
    %v1561 = vunpack.c.h.b16 %v387
    %v1562 = vunpack.c.l.b16 %v388
    %v1563 = vunpack.c.h.b16 %v388
    %v1564 = vunpack.c.l.b16 %v389
    %v1565 = vunpack.c.l.b16 %v390
    %v1566 = vunpack.c.h.b16 %v390
    %v1567 = vunpack.c.l.b16 %v391
    %v1568 = vunpack.c.h.b16 %v391
    %v1569 = vunpack.c.l.b16 %v392
    %v1570 = vunpack.c.h.b16 %v392
    %v1571 = vunpack.c.l.b16 %v393
    %v1572 = vunpack.c.l.b16 %v394
    %v1573 = vunpack.c.h.b16 %v394
    %v1574 = vunpack.c.l.b16 %v395
    %v1575 = vunpack.c.h.b16 %v395
    %v1576 = vunpack.c.l.b16 %v396
    %v1577 = vunpack.c.h.b16 %v396
    %v1578 = vunpack.c.l.b16 %v397
    %v1579 = vunpack.c.l.b16 %v398
    %v1580 = vunpack.c.h.b16 %v398
    %v1581 = vunpack.c.l.b16 %v399
    %v1582 = vunpack.c.h.b16 %v399
    %v1583 = vunpack.c.l.b16 %v400
    %v1584 = vunpack.c.h.b16 %v400
    %v1585 = vunpack.c.l.b16 %v401
    %v1586 = vunpack.c.l.b16 %v402
    %v1587 = vunpack.c.h.b16 %v402
    %v1588 = vunpack.c.l.b16 %v403
    %v1589 = vunpack.c.h.b16 %v403
    %v1590 = vunpack.c.l.b16 %v404
    %v1591 = vunpack.c.h.b16 %v404
    %v1592 = vunpack.c.l.b16 %v405
    %v1593 = vunpack.c.l.b16 %v406
    %v1594 = vunpack.c.h.b16 %v406
    %v1595 = vunpack.c.l.b16 %v407
    %v1596 = vunpack.c.h.b16 %v407
    %v1597 = vunpack.c.l.b16 %v408
    %v1598 = vunpack.c.h.b16 %v408
    %v1599 = vunpack.c.l.b16 %v409
    %v1600 = vunpack.c.l.b16 %v410
    %v1601 = vunpack.c.h.b16 %v410
    %v1602 = vunpack.c.l.b16 %v411
    %v1603 = vunpack.c.h.b16 %v411
    %v1604 = vunpack.c.l.b16 %v412
    %v1605 = vunpack.c.h.b16 %v412
    %v1606 = vunpack.c.l.b16 %v413
    %v1607 = vunpack.c.l.b16 %v414
    %v1608 = vunpack.c.h.b16 %v414
    %v1609 = vunpack.c.l.b16 %v415
    %v1610 = vunpack.c.h.b16 %v415
    %v1611 = vunpack.c.l.b16 %v416
    %v1612 = vunpack.c.h.b16 %v416
    %v1613 = vunpack.c.l.b16 %v417
    %v1614 = vunpack.c.l.b16 %v418
    %v1615 = vunpack.c.h.b16 %v418
    %v1616 = vunpack.c.l.b16 %v419
    %v1617 = vunpack.c.h.b16 %v419
    %v1618 = vunpack.c.l.b16 %v420
    %v1619 = vunpack.c.h.b16 %v420
    %v1620 = vunpack.c.l.b16 %v421
    %v1621 = vunpack.c.l.b16 %v422
    %v1622 = vunpack.c.h.b16 %v422
    %v1623 = vunpack.c.l.b16 %v423
    %v1624 = vunpack.c.h.b16 %v423
    %v1625 = vunpack.c.l.b16 %v424
    %v1626 = vunpack.c.h.b16 %v424
    %v1627 = vunpack.c.l.b16 %v425
    %v1628 = vunpack.c.l.b16 %v426
    %v1629 = vunpack.c.h.b16 %v426
    %v1630 = vunpack.c.l.b16 %v427
    %v1631 = vunpack.c.h.b16 %v427
    %v1632 = vunpack.c.l.b16 %v428
    %v1633 = vunpack.c.h.b16 %v428
    %v1634 = vunpack.c.l.b16 %v429
    %v1635 = vunpack.c.l.b16 %v430
    %v1636 = vunpack.c.h.b16 %v430
    %v1637 = vunpack.c.l.b16 %v431
    %v1638 = vunpack.c.h.b16 %v431
    %v1639 = vunpack.c.l.b16 %v432
    %v1640 = vunpack.c.h.b16 %v432
    %v1641 = vunpack.c.l.b16 %v433
    %v1642 = vunpack.c.l.b16 %v434
    %v1643 = vunpack.c.h.b16 %v434
    %v1644 = vunpack.c.l.b16 %v435
    %v1645 = vunpack.c.h.b16 %v435
    %v1646 = vunpack.c.l.b16 %v436
    %v1647 = vunpack.c.h.b16 %v436
    %v1648 = vunpack.c.l.b16 %v437
    %v1649 = vunpack.c.l.b16 %v438
    %v1650 = vunpack.c.h.b16 %v438
    %v1651 = vunpack.c.l.b16 %v439
    %v1652 = vunpack.c.h.b16 %v439
    %v1653 = vunpack.c.l.b16 %v440
    %v1654 = vunpack.c.h.b16 %v440
    %v1655 = vunpack.c.l.b16 %v441
    %v1656 = vunpack.c.l.b16 %v442
    %v1657 = vunpack.c.h.b16 %v442
    %v1658 = vunpack.c.l.b16 %v443
    %v1659 = vunpack.c.h.b16 %v443
    %v1660 = vunpack.c.l.b16 %v444
    %v1661 = vunpack.c.h.b16 %v444
    %v1662 = vunpack.c.l.b16 %v445
    %v1663 = vunpack.c.l.b16 %v446
    %v1664 = vunpack.c.h.b16 %v446
    %v1665 = vunpack.c.l.b16 %v447
    %v1666 = vunpack.c.h.b16 %v447
    %v1667 = vunpack.c.l.b16 %v448
    %v1668 = vunpack.c.h.b16 %v448
    %v1669 = vunpack.c.l.b16 %v449
    %v1670 = vunpack.c.l.b16 %v450
    %v1671 = vunpack.c.h.b16 %v450
    %v1672 = vunpack.c.l.b16 %v451
    %v1673 = vunpack.c.h.b16 %v451
    %v1674 = vunpack.c.l.b16 %v452
    %v1675 = vunpack.c.h.b16 %v452
    %v1676 = vunpack.c.l.b16 %v453
    %v1677 = vunpack.c.l.b16 %v454
    %v1678 = vunpack.c.h.b16 %v454
    %v1679 = vunpack.c.l.b16 %v455
    %v1680 = vunpack.c.h.b16 %v455
    %v1681 = vunpack.c.l.b16 %v456
    %v1682 = vunpack.c.h.b16 %v456
    %v1683 = vunpack.c.l.b16 %v457
    %v1684 = vunpack.c.l.b16 %v458
    %v1685 = vunpack.c.h.b16 %v458
    %v1686 = vunpack.c.l.b16 %v459
    %v1687 = vunpack.c.h.b16 %v459
    %v1688 = vunpack.c.l.b16 %v460
    %v1689 = vunpack.c.h.b16 %v460
    %v1690 = vunpack.c.l.b16 %v461
    %v1691 = vunpack.c.l.b16 %v462
    %v1692 = vunpack.c.h.b16 %v462
    %v1693 = vunpack.c.l.b16 %v463
    %v1694 = vunpack.c.h.b16 %v463
    %v1695 = vunpack.c.l.b16 %v464
    %v1696 = vunpack.c.h.b16 %v464
    %v1697 = vunpack.c.l.b16 %v465
    %v1698 = vunpack.c.l.b16 %v466
    %v1699 = vunpack.c.h.b16 %v466
    %v1700 = vunpack.c.l.b16 %v467
    %v1701 = vunpack.c.h.b16 %v467
    %v1702 = vunpack.c.l.b16 %v468
    %v1703 = vunpack.c.h.b16 %v468
    %v1704 = vunpack.c.l.b16 %v469
    %v1705 = vunpack.c.l.b16 %v470
    %v1706 = vunpack.c.h.b16 %v470
    %v1707 = vunpack.c.l.b16 %v471
    %v1708 = vunpack.c.h.b16 %v471
    %v1709 = vunpack.c.l.b16 %v472
    %v1710 = vunpack.c.h.b16 %v472
    %v1711 = vunpack.c.l.b16 %v473
    %v1712 = vunpack.c.l.b16 %v474
    %v1713 = vunpack.c.h.b16 %v474
    %v1714 = vunpack.c.l.b16 %v475
    %v1715 = vunpack.c.h.b16 %v475
    %v1716 = vunpack.c.l.b16 %v476
    %v1717 = vunpack.c.h.b16 %v476
    %v1718 = vunpack.c.l.b16 %v477
    %v1719 = vunpack.c.l.b16 %v478
    %v1720 = vunpack.c.h.b16 %v478
    %v1721 = vunpack.c.l.b16 %v479
    %v1722 = vunpack.c.h.b16 %v479
    %v1723 = vunpack.c.l.b16 %v480
    %v1724 = vunpack.c.h.b16 %v480
    %v1725 = vunpack.c.l.b16 %v481
    %v1726 = vunpack.c.l.b16 %v482
    %v1727 = vunpack.c.h.b16 %v482
    %v1728 = vunpack.c.l.b16 %v483
    %v1729 = vunpack.c.h.b16 %v483
    %v1730 = vunpack.c.l.b16 %v484
    %v1731 = vunpack.c.h.b16 %v484
    %v1732 = vunpack.c.l.b16 %v485
    %v1733 = vunpack.c.l.b16 %v486
    %v1734 = vunpack.c.h.b16 %v486
    %v1735 = vunpack.c.l.b16 %v487
    %v1736 = vunpack.c.h.b16 %v487
    %v1737 = vunpack.c.l.b16 %v488
    %v1738 = vunpack.c.h.b16 %v488
    %v1739 = vunpack.c.l.b16 %v489
    %v1740 = vunpack.c.l.b16 %v490
    %v1741 = vunpack.c.h.b16 %v490
    %v1742 = vunpack.c.l.b16 %v491
    %v1743 = vunpack.c.h.b16 %v491
    %v1744 = vunpack.c.l.b16 %v492
    %v1745 = vunpack.c.h.b16 %v492
    %v1746 = vunpack.c.l.b16 %v493
    %v1747 = vunpack.c.l.b16 %v494
    %v1748 = vunpack.c.h.b16 %v494
    %v1749 = vunpack.c.l.b16 %v495
    %v1750 = vunpack.c.h.b16 %v495
    %v1751 = vunpack.c.l.b16 %v496
    %v1752 = vunpack.c.h.b16 %v496
    %v1753 = vunpack.c.l.b16 %v497
    %v1754 = vunpack.c.l.b16 %v498
    %v1755 = vunpack.c.h.b16 %v498
    %v1756 = vunpack.c.l.b16 %v499
    %v1757 = vunpack.c.h.b16 %v499
    %v1758 = vunpack.c.l.b16 %v500
    %v1759 = vunpack.c.h.b16 %v500
    %v1760 = vunpack.c.l.b16 %v501
    %v1761 = vunpack.c.l.b16 %v502
    %v1762 = vunpack.c.h.b16 %v502
    %v1763 = vunpack.c.l.b16 %v503
    %v1764 = vunpack.c.h.b16 %v503
    %v1765 = vunpack.c.l.b16 %v504
    %v1766 = vunpack.c.h.b16 %v504
    %v1767 = vunpack.c.l.b16 %v505
    %v1768 = vunpack.c.l.b16 %v506
    %v1769 = vunpack.c.h.b16 %v506
    %v1770 = vunpack.c.l.b16 %v507
    %v1771 = vunpack.c.h.b16 %v507
    %v1772 = vunpack.c.l.b16 %v508
    %v1773 = vunpack.c.h.b16 %v508
    %v1774 = vunpack.c.l.b16 %v509
    %v1775 = vunpack.c.l.b16 %v510
    %v1776 = vunpack.c.h.b16 %v510
    %v1777 = vunpack.c.l.b16 %v511
    %v1778 = vunpack.c.h.b16 %v511
    %v1779 = vunpack.c.l.b16 %v512
    %v1780 = vunpack.c.h.b16 %v512
    %v1781 = vunpack.c.l.b16 %v513
    %v1782 = vpack.c.b16 %v1005, %v998
    %v1783 = vpack.c.b16 %v1006, %v999
    %v1784 = vpack.c.b16 %v1007, %v1000
    %v1785 = vpack.c.b16 %v1008, %v1001
    %v1786 = vpack.c.b16 %v1009, %v1002
    %v1787 = vpack.c.b16 %v1010, %v1003
    %v1788 = vpack.c.b16 %v1011, %v1004
    %v1789 = vpack.c.b16 %v1019, %v1012
    %v1790 = vpack.c.b16 %v1020, %v1013
    %v1791 = vpack.c.b16 %v1021, %v1014
    %v1792 = vpack.c.b16 %v1022, %v1015
    %v1793 = vpack.c.b16 %v1023, %v1016
    %v1794 = vpack.c.b16 %v1024, %v1017
    %v1795 = vpack.c.b16 %v1025, %v1018
    %v1796 = vpack.c.b16 %v1033, %v1026
    %v1797 = vpack.c.b16 %v1034, %v1027
    %v1798 = vpack.c.b16 %v1035, %v1028
    %v1799 = vpack.c.b16 %v1036, %v1029
    %v1800 = vpack.c.b16 %v1037, %v1030
    %v1801 = vpack.c.b16 %v1038, %v1031
    %v1802 = vpack.c.b16 %v1039, %v1032
    %v1803 = vpack.c.b16 %v1047, %v1040
    %v1804 = vpack.c.b16 %v1048, %v1041
    %v1805 = vpack.c.b16 %v1049, %v1042
    %v1806 = vpack.c.b16 %v1050, %v1043
    %v1807 = vpack.c.b16 %v1051, %v1044
    %v1808 = vpack.c.b16 %v1052, %v1045
    %v1809 = vpack.c.b16 %v1053, %v1046
    %v1810 = vpack.c.b16 %v1061, %v1054
    %v1811 = vpack.c.b16 %v1062, %v1055
    %v1812 = vpack.c.b16 %v1063, %v1056
    %v1813 = vpack.c.b16 %v1064, %v1057
    %v1814 = vpack.c.b16 %v1065, %v1058
    %v1815 = vpack.c.b16 %v1066, %v1059
    %v1816 = vpack.c.b16 %v1067, %v1060
    %v1817 = vpack.c.b16 %v1075, %v1068
    %v1818 = vpack.c.b16 %v1076, %v1069
    %v1819 = vpack.c.b16 %v1077, %v1070
    %v1820 = vpack.c.b16 %v1078, %v1071
    %v1821 = vpack.c.b16 %v1079, %v1072
    %v1822 = vpack.c.b16 %v1080, %v1073
    %v1823 = vpack.c.b16 %v1081, %v1074
    %v1824 = vpack.c.b16 %v1089, %v1082
    %v1825 = vpack.c.b16 %v1090, %v1083
    %v1826 = vpack.c.b16 %v1091, %v1084
    %v1827 = vpack.c.b16 %v1092, %v1085
    %v1828 = vpack.c.b16 %v1093, %v1086
    %v1829 = vpack.c.b16 %v1094, %v1087
    %v1830 = vpack.c.b16 %v1095, %v1088
    %v1831 = vpack.c.b16 %v1103, %v1096
    %v1832 = vpack.c.b16 %v1104, %v1097
    %v1833 = vpack.c.b16 %v1105, %v1098
    %v1834 = vpack.c.b16 %v1106, %v1099
    %v1835 = vpack.c.b16 %v1107, %v1100
    %v1836 = vpack.c.b16 %v1108, %v1101
    %v1837 = vpack.c.b16 %v1109, %v1102
    %v1838 = vpack.c.b16 %v1117, %v1110
    %v1839 = vpack.c.b16 %v1118, %v1111
    %v1840 = vpack.c.b16 %v1119, %v1112
    %v1841 = vpack.c.b16 %v1120, %v1113
    %v1842 = vpack.c.b16 %v1121, %v1114
    %v1843 = vpack.c.b16 %v1122, %v1115
    %v1844 = vpack.c.b16 %v1123, %v1116
    %v1845 = vpack.c.b16 %v1131, %v1124
    %v1846 = vpack.c.b16 %v1132, %v1125
    %v1847 = vpack.c.b16 %v1133, %v1126
    %v1848 = vpack.c.b16 %v1134, %v1127
    %v1849 = vpack.c.b16 %v1135, %v1128
    %v1850 = vpack.c.b16 %v1136, %v1129
    %v1851 = vpack.c.b16 %v1137, %v1130
    %v1852 = vpack.c.b16 %v1145, %v1138
    %v1853 = vpack.c.b16 %v1146, %v1139
    %v1854 = vpack.c.b16 %v1147, %v1140
    %v1855 = vpack.c.b16 %v1148, %v1141
    %v1856 = vpack.c.b16 %v1149, %v1142
    %v1857 = vpack.c.b16 %v1150, %v1143
    %v1858 = vpack.c.b16 %v1151, %v1144
    %v1859 = vpack.c.b16 %v1159, %v1152
    %v1860 = vpack.c.b16 %v1160, %v1153
    %v1861 = vpack.c.b16 %v1161, %v1154
    %v1862 = vpack.c.b16 %v1162, %v1155
    %v1863 = vpack.c.b16 %v1163, %v1156
    %v1864 = vpack.c.b16 %v1164, %v1157
    %v1865 = vpack.c.b16 %v1165, %v1158
    %v1866 = vpack.c.b16 %v1173, %v1166
    %v1867 = vpack.c.b16 %v1174, %v1167
    %v1868 = vpack.c.b16 %v1175, %v1168
    %v1869 = vpack.c.b16 %v1176, %v1169
    %v1870 = vpack.c.b16 %v1177, %v1170
    %v1871 = vpack.c.b16 %v1178, %v1171
    %v1872 = vpack.c.b16 %v1179, %v1172
    %v1873 = vpack.c.b16 %v1187, %v1180
    %v1874 = vpack.c.b16 %v1188, %v1181
    %v1875 = vpack.c.b16 %v1189, %v1182
    %v1876 = vpack.c.b16 %v1190, %v1183
    %v1877 = vpack.c.b16 %v1191, %v1184
    %v1878 = vpack.c.b16 %v1192, %v1185
    %v1879 = vpack.c.b16 %v1193, %v1186
    %v1880 = vpack.c.b16 %v1201, %v1194
    %v1881 = vpack.c.b16 %v1202, %v1195
    %v1882 = vpack.c.b16 %v1203, %v1196
    %v1883 = vpack.c.b16 %v1204, %v1197
    %v1884 = vpack.c.b16 %v1205, %v1198
    %v1885 = vpack.c.b16 %v1206, %v1199
    %v1886 = vpack.c.b16 %v1207, %v1200
    %v1887 = vpack.c.b16 %v1215, %v1208
    %v1888 = vpack.c.b16 %v1216, %v1209
    %v1889 = vpack.c.b16 %v1217, %v1210
    %v1890 = vpack.c.b16 %v1218, %v1211
    %v1891 = vpack.c.b16 %v1219, %v1212
    %v1892 = vpack.c.b16 %v1220, %v1213
    %v1893 = vpack.c.b16 %v1221, %v1214
    %v1894 = vpack.c.b16 %v1229, %v1222
    %v1895 = vpack.c.b16 %v1230, %v1223
    %v1896 = vpack.c.b16 %v1231, %v1224
    %v1897 = vpack.c.b16 %v1232, %v1225
    %v1898 = vpack.c.b16 %v1233, %v1226
    %v1899 = vpack.c.b16 %v1234, %v1227
    %v1900 = vpack.c.b16 %v1235, %v1228
    %v1901 = vpack.c.b16 %v1243, %v1236
    %v1902 = vpack.c.b16 %v1244, %v1237
    %v1903 = vpack.c.b16 %v1245, %v1238
    %v1904 = vpack.c.b16 %v1246, %v1239
    %v1905 = vpack.c.b16 %v1247, %v1240
    %v1906 = vpack.c.b16 %v1248, %v1241
    %v1907 = vpack.c.b16 %v1249, %v1242
    %v1908 = vpack.c.b16 %v1257, %v1250
    %v1909 = vpack.c.b16 %v1258, %v1251
    %v1910 = vpack.c.b16 %v1259, %v1252
    %v1911 = vpack.c.b16 %v1260, %v1253
    %v1912 = vpack.c.b16 %v1261, %v1254
    %v1913 = vpack.c.b16 %v1262, %v1255
    %v1914 = vpack.c.b16 %v1263, %v1256
    %v1915 = vpack.c.b16 %v1271, %v1264
    %v1916 = vpack.c.b16 %v1272, %v1265
    %v1917 = vpack.c.b16 %v1273, %v1266
    %v1918 = vpack.c.b16 %v1274, %v1267
    %v1919 = vpack.c.b16 %v1275, %v1268
    %v1920 = vpack.c.b16 %v1276, %v1269
    %v1921 = vpack.c.b16 %v1277, %v1270
    %v1922 = vpack.c.b16 %v1285, %v1278
    %v1923 = vpack.c.b16 %v1286, %v1279
    %v1924 = vpack.c.b16 %v1287, %v1280
    %v1925 = vpack.c.b16 %v1288, %v1281
    %v1926 = vpack.c.b16 %v1289, %v1282
    %v1927 = vpack.c.b16 %v1290, %v1283
    %v1928 = vpack.c.b16 %v1291, %v1284
    %v1929 = vpack.c.b16 %v1299, %v1292
    %v1930 = vpack.c.b16 %v1300, %v1293
    %v1931 = vpack.c.b16 %v1301, %v1294
    %v1932 = vpack.c.b16 %v1302, %v1295
    %v1933 = vpack.c.b16 %v1303, %v1296
    %v1934 = vpack.c.b16 %v1304, %v1297
    %v1935 = vpack.c.b16 %v1305, %v1298
    %v1936 = vpack.c.b16 %v1313, %v1306
    %v1937 = vpack.c.b16 %v1314, %v1307
    %v1938 = vpack.c.b16 %v1315, %v1308
    %v1939 = vpack.c.b16 %v1316, %v1309
    %v1940 = vpack.c.b16 %v1317, %v1310
    %v1941 = vpack.c.b16 %v1318, %v1311
    %v1942 = vpack.c.b16 %v1319, %v1312
    %v1943 = vpack.c.b16 %v1327, %v1320
    %v1944 = vpack.c.b16 %v1328, %v1321
    %v1945 = vpack.c.b16 %v1329, %v1322
    %v1946 = vpack.c.b16 %v1330, %v1323
    %v1947 = vpack.c.b16 %v1331, %v1324
    %v1948 = vpack.c.b16 %v1332, %v1325
    %v1949 = vpack.c.b16 %v1333, %v1326
    %v1950 = vpack.c.b16 %v1341, %v1334
    %v1951 = vpack.c.b16 %v1342, %v1335
    %v1952 = vpack.c.b16 %v1343, %v1336
    %v1953 = vpack.c.b16 %v1344, %v1337
    %v1954 = vpack.c.b16 %v1345, %v1338
    %v1955 = vpack.c.b16 %v1346, %v1339
    %v1956 = vpack.c.b16 %v1347, %v1340
    %v1957 = vpack.c.b16 %v1355, %v1348
    %v1958 = vpack.c.b16 %v1356, %v1349
    %v1959 = vpack.c.b16 %v1357, %v1350
    %v1960 = vpack.c.b16 %v1358, %v1351
    %v1961 = vpack.c.b16 %v1359, %v1352
    %v1962 = vpack.c.b16 %v1360, %v1353
    %v1963 = vpack.c.b16 %v1361, %v1354
    %v1964 = vpack.c.b16 %v1369, %v1362
    %v1965 = vpack.c.b16 %v1370, %v1363
    %v1966 = vpack.c.b16 %v1371, %v1364
    %v1967 = vpack.c.b16 %v1372, %v1365
    %v1968 = vpack.c.b16 %v1373, %v1366
    %v1969 = vpack.c.b16 %v1374, %v1367
    %v1970 = vpack.c.b16 %v1375, %v1368
    %v1971 = vpack.c.b16 %v1383, %v1376
    %v1972 = vpack.c.b16 %v1384, %v1377
    %v1973 = vpack.c.b16 %v1385, %v1378
    %v1974 = vpack.c.b16 %v1386, %v1379
    %v1975 = vpack.c.b16 %v1387, %v1380
    %v1976 = vpack.c.b16 %v1388, %v1381
    %v1977 = vpack.c.b16 %v1389, %v1382
    %v1978 = vpack.c.b16 %v1397, %v1390
    %v1979 = vpack.c.b16 %v1398, %v1391
    %v1980 = vpack.c.b16 %v1399, %v1392
    %v1981 = vpack.c.b16 %v1400, %v1393
    %v1982 = vpack.c.b16 %v1401, %v1394
    %v1983 = vpack.c.b16 %v1402, %v1395
    %v1984 = vpack.c.b16 %v1403, %v1396
    %v1985 = vpack.c.b16 %v1411, %v1404
    %v1986 = vpack.c.b16 %v1412, %v1405
    %v1987 = vpack.c.b16 %v1413, %v1406
    %v1988 = vpack.c.b16 %v1414, %v1407
    %v1989 = vpack.c.b16 %v1415, %v1408
    %v1990 = vpack.c.b16 %v1416, %v1409
    %v1991 = vpack.c.b16 %v1417, %v1410
    %v1992 = vpack.c.b16 %v1425, %v1418
    %v1993 = vpack.c.b16 %v1426, %v1419
    %v1994 = vpack.c.b16 %v1427, %v1420
    %v1995 = vpack.c.b16 %v1428, %v1421
    %v1996 = vpack.c.b16 %v1429, %v1422
    %v1997 = vpack.c.b16 %v1430, %v1423
    %v1998 = vpack.c.b16 %v1431, %v1424
    %v1999 = vpack.c.b16 %v1439, %v1432
    %v2000 = vpack.c.b16 %v1440, %v1433
    %v2001 = vpack.c.b16 %v1441, %v1434
    %v2002 = vpack.c.b16 %v1442, %v1435
    %v2003 = vpack.c.b16 %v1443, %v1436
    %v2004 = vpack.c.b16 %v1444, %v1437
    %v2005 = vpack.c.b16 %v1445, %v1438
    %v2006 = vpack.c.b16 %v1453, %v1446
    %v2007 = vpack.c.b16 %v1454, %v1447
    %v2008 = vpack.c.b16 %v1455, %v1448
    %v2009 = vpack.c.b16 %v1456, %v1449
    %v2010 = vpack.c.b16 %v1457, %v1450
    %v2011 = vpack.c.b16 %v1458, %v1451
    %v2012 = vpack.c.b16 %v1459, %v1452
    %v2013 = vpack.c.b16 %v1467, %v1460
    %v2014 = vpack.c.b16 %v1468, %v1461
    %v2015 = vpack.c.b16 %v1469, %v1462
    %v2016 = vpack.c.b16 %v1470, %v1463
    %v2017 = vpack.c.b16 %v1471, %v1464
    %v2018 = vpack.c.b16 %v1472, %v1465
    %v2019 = vpack.c.b16 %v1473, %v1466
    %v2020 = vpack.c.b16 %v1481, %v1474
    %v2021 = vpack.c.b16 %v1482, %v1475
    %v2022 = vpack.c.b16 %v1483, %v1476
    %v2023 = vpack.c.b16 %v1484, %v1477
    %v2024 = vpack.c.b16 %v1485, %v1478
    %v2025 = vpack.c.b16 %v1486, %v1479
    %v2026 = vpack.c.b16 %v1487, %v1480
    %v2027 = vpack.c.b16 %v1495, %v1488
    %v2028 = vpack.c.b16 %v1496, %v1489
    %v2029 = vpack.c.b16 %v1497, %v1490
    %v2030 = vpack.c.b16 %v1498, %v1491
    %v2031 = vpack.c.b16 %v1499, %v1492
    %v2032 = vpack.c.b16 %v1500, %v1493
    %v2033 = vpack.c.b16 %v1501, %v1494
    %v2034 = vpack.c.b16 %v1509, %v1502
    %v2035 = vpack.c.b16 %v1510, %v1503
    %v2036 = vpack.c.b16 %v1511, %v1504
    %v2037 = vpack.c.b16 %v1512, %v1505
    %v2038 = vpack.c.b16 %v1513, %v1506
    %v2039 = vpack.c.b16 %v1514, %v1507
    %v2040 = vpack.c.b16 %v1515, %v1508
    %v2041 = vpack.c.b16 %v1523, %v1516
    %v2042 = vpack.c.b16 %v1524, %v1517
    %v2043 = vpack.c.b16 %v1525, %v1518
    %v2044 = vpack.c.b16 %v1526, %v1519
    %v2045 = vpack.c.b16 %v1527, %v1520
    %v2046 = vpack.c.b16 %v1528, %v1521
    %v2047 = vpack.c.b16 %v1529, %v1522
    %v2048 = vpack.c.b16 %v1537, %v1530
    %v2049 = vpack.c.b16 %v1538, %v1531
    %v2050 = vpack.c.b16 %v1539, %v1532
    %v2051 = vpack.c.b16 %v1540, %v1533
    %v2052 = vpack.c.b16 %v1541, %v1534
    %v2053 = vpack.c.b16 %v1542, %v1535
    %v2054 = vpack.c.b16 %v1543, %v1536
    %v2055 = vpack.c.b16 %v1551, %v1544
    %v2056 = vpack.c.b16 %v1552, %v1545
    %v2057 = vpack.c.b16 %v1553, %v1546
    %v2058 = vpack.c.b16 %v1554, %v1547
    %v2059 = vpack.c.b16 %v1555, %v1548
    %v2060 = vpack.c.b16 %v1556, %v1549
    %v2061 = vpack.c.b16 %v1557, %v1550
    %v2062 = vpack.c.b16 %v1565, %v1558
    %v2063 = vpack.c.b16 %v1566, %v1559
    %v2064 = vpack.c.b16 %v1567, %v1560
    %v2065 = vpack.c.b16 %v1568, %v1561
    %v2066 = vpack.c.b16 %v1569, %v1562
    %v2067 = vpack.c.b16 %v1570, %v1563
    %v2068 = vpack.c.b16 %v1571, %v1564
    %v2069 = vpack.c.b16 %v1579, %v1572
    %v2070 = vpack.c.b16 %v1580, %v1573
    %v2071 = vpack.c.b16 %v1581, %v1574
    %v2072 = vpack.c.b16 %v1582, %v1575
    %v2073 = vpack.c.b16 %v1583, %v1576
    %v2074 = vpack.c.b16 %v1584, %v1577
    %v2075 = vpack.c.b16 %v1585, %v1578
    %v2076 = vpack.c.b16 %v1593, %v1586
    %v2077 = vpack.c.b16 %v1594, %v1587
    %v2078 = vpack.c.b16 %v1595, %v1588
    %v2079 = vpack.c.b16 %v1596, %v1589
    %v2080 = vpack.c.b16 %v1597, %v1590
    %v2081 = vpack.c.b16 %v1598, %v1591
    %v2082 = vpack.c.b16 %v1599, %v1592
    %v2083 = vpack.c.b16 %v1607, %v1600
    %v2084 = vpack.c.b16 %v1608, %v1601
    %v2085 = vpack.c.b16 %v1609, %v1602
    %v2086 = vpack.c.b16 %v1610, %v1603
    %v2087 = vpack.c.b16 %v1611, %v1604
    %v2088 = vpack.c.b16 %v1612, %v1605
    %v2089 = vpack.c.b16 %v1613, %v1606
    %v2090 = vpack.c.b16 %v1621, %v1614
    %v2091 = vpack.c.b16 %v1622, %v1615
    %v2092 = vpack.c.b16 %v1623, %v1616
    %v2093 = vpack.c.b16 %v1624, %v1617
    %v2094 = vpack.c.b16 %v1625, %v1618
    %v2095 = vpack.c.b16 %v1626, %v1619
    %v2096 = vpack.c.b16 %v1627, %v1620
    %v2097 = vpack.c.b16 %v1635, %v1628
    %v2098 = vpack.c.b16 %v1636, %v1629
    %v2099 = vpack.c.b16 %v1637, %v1630
    %v2100 = vpack.c.b16 %v1638, %v1631
    %v2101 = vpack.c.b16 %v1639, %v1632
    %v2102 = vpack.c.b16 %v1640, %v1633
    %v2103 = vpack.c.b16 %v1641, %v1634
    %v2104 = vpack.c.b16 %v1649, %v1642
    %v2105 = vpack.c.b16 %v1650, %v1643
    %v2106 = vpack.c.b16 %v1651, %v1644
    %v2107 = vpack.c.b16 %v1652, %v1645
    %v2108 = vpack.c.b16 %v1653, %v1646
    %v2109 = vpack.c.b16 %v1654, %v1647
    %v2110 = vpack.c.b16 %v1655, %v1648
    %v2111 = vpack.c.b16 %v1663, %v1656
    %v2112 = vpack.c.b16 %v1664, %v1657
    %v2113 = vpack.c.b16 %v1665, %v1658
    %v2114 = vpack.c.b16 %v1666, %v1659
    %v2115 = vpack.c.b16 %v1667, %v1660
    %v2116 = vpack.c.b16 %v1668, %v1661
    %v2117 = vpack.c.b16 %v1669, %v1662
    %v2118 = vpack.c.b16 %v1677, %v1670
    %v2119 = vpack.c.b16 %v1678, %v1671
    %v2120 = vpack.c.b16 %v1679, %v1672
    %v2121 = vpack.c.b16 %v1680, %v1673
    %v2122 = vpack.c.b16 %v1681, %v1674
    %v2123 = vpack.c.b16 %v1682, %v1675
    %v2124 = vpack.c.b16 %v1683, %v1676
    %v2125 = vpack.c.b16 %v1691, %v1684
    %v2126 = vpack.c.b16 %v1692, %v1685
    %v2127 = vpack.c.b16 %v1693, %v1686
    %v2128 = vpack.c.b16 %v1694, %v1687
    %v2129 = vpack.c.b16 %v1695, %v1688
    %v2130 = vpack.c.b16 %v1696, %v1689
    %v2131 = vpack.c.b16 %v1697, %v1690
    %v2132 = vpack.c.b16 %v1705, %v1698
    %v2133 = vpack.c.b16 %v1706, %v1699
    %v2134 = vpack.c.b16 %v1707, %v1700
    %v2135 = vpack.c.b16 %v1708, %v1701
    %v2136 = vpack.c.b16 %v1709, %v1702
    %v2137 = vpack.c.b16 %v1710, %v1703
    %v2138 = vpack.c.b16 %v1711, %v1704
    %v2139 = vpack.c.b16 %v1719, %v1712
    %v2140 = vpack.c.b16 %v1720, %v1713
    %v2141 = vpack.c.b16 %v1721, %v1714
    %v2142 = vpack.c.b16 %v1722, %v1715
    %v2143 = vpack.c.b16 %v1723, %v1716
    %v2144 = vpack.c.b16 %v1724, %v1717
    %v2145 = vpack.c.b16 %v1725, %v1718
    %v2146 = vpack.c.b16 %v1733, %v1726
    %v2147 = vpack.c.b16 %v1734, %v1727
    %v2148 = vpack.c.b16 %v1735, %v1728
    %v2149 = vpack.c.b16 %v1736, %v1729
    %v2150 = vpack.c.b16 %v1737, %v1730
    %v2151 = vpack.c.b16 %v1738, %v1731
    %v2152 = vpack.c.b16 %v1739, %v1732
    %v2153 = vpack.c.b16 %v1747, %v1740
    %v2154 = vpack.c.b16 %v1748, %v1741
    %v2155 = vpack.c.b16 %v1749, %v1742
    %v2156 = vpack.c.b16 %v1750, %v1743
    %v2157 = vpack.c.b16 %v1751, %v1744
    %v2158 = vpack.c.b16 %v1752, %v1745
    %v2159 = vpack.c.b16 %v1753, %v1746
    %v2160 = vpack.c.b16 %v1761, %v1754
    %v2161 = vpack.c.b16 %v1762, %v1755
    %v2162 = vpack.c.b16 %v1763, %v1756
    %v2163 = vpack.c.b16 %v1764, %v1757
    %v2164 = vpack.c.b16 %v1765, %v1758
    %v2165 = vpack.c.b16 %v1766, %v1759
    %v2166 = vpack.c.b16 %v1767, %v1760
    %v2167 = vpack.c.b16 %v1775, %v1768
    %v2168 = vpack.c.b16 %v1776, %v1769
    %v2169 = vpack.c.b16 %v1777, %v1770
    %v2170 = vpack.c.b16 %v1778, %v1771
    %v2171 = vpack.c.b16 %v1779, %v1772
    %v2172 = vpack.c.b16 %v1780, %v1773
    %v2173 = vpack.c.b16 %v1781, %v1774
    %2566 = vmatprep.subr.bf16.mxu0 %v1783
    %2567 = vmatpush1.bf16.msra.mxu0 %v1782
    %2568 = vmatprep.subr.bf16.mxu0 %v1790
    %2569 = vmatpush1.bf16.msra.mxu0 %v1789
    %2570 = vmatprep.subr.bf16.mxu0 %v1797
    %2571 = vmatpush1.bf16.msra.mxu0 %v1796
    %2572 = vmatprep.subr.bf16.mxu0 %v1804
    %2573 = vmatpush1.bf16.msra.mxu0 %v1803
    %2574 = vmatprep.subr.bf16.mxu0 %v1811
    %2575 = vmatpush1.bf16.msra.mxu0 %v1810
    %2576 = vmatprep.subr.bf16.mxu0 %v1818
    %2577 = vmatpush1.bf16.msra.mxu0 %v1817
    %2578 = vmatprep.subr.bf16.mxu0 %v1825
    %2579 = vmatpush1.bf16.msra.mxu0 %v1824
    %2580 = vmatprep.subr.bf16.mxu0 %v1832
    %2581 = vmatpush1.bf16.msra.mxu0 %v1831
    %2582 = vmatprep.subr.bf16.mxu0 %v1839
    %2583 = vmatpush1.bf16.msra.mxu0 %v1838
    %2584 = vmatprep.subr.bf16.mxu0 %v1846
    %2585 = vmatpush1.bf16.msra.mxu0 %v1845
    %2586 = vmatprep.subr.bf16.mxu0 %v1853
    %2587 = vmatpush1.bf16.msra.mxu0 %v1852
    %2588 = vmatprep.subr.bf16.mxu0 %v1860
    %2589 = vmatpush1.bf16.msra.mxu0 %v1859
    %2590 = vmatprep.subr.bf16.mxu0 %v1867
    %2591 = vmatpush1.bf16.msra.mxu0 %v1866
    %2592 = vmatprep.subr.bf16.mxu0 %v1874
    %2593 = vmatpush1.bf16.msra.mxu0 %v1873
    %2594 = vmatprep.subr.bf16.mxu0 %v1881
    %2595 = vmatpush1.bf16.msra.mxu0 %v1880
    %2596 = vmatprep.subr.bf16.mxu0 %v1888
    %2597 = vmatpush1.bf16.msra.mxu0 %v1887
    %2598 = vmatprep.mubr.bf16.mxu0 %v537
    %2599 = vmatmul.mubr.bf16.gmra.mrb[0].mxu0 %v536
    %v2600 = vpop.f32.mrb[0].mxu0
    %v2601 = vadd.f32 0.0, %v2600
    %v2602 = vpop.f32.mrb[0].mxu0
    %v2603 = vadd.f32 0.0, %v2602
    %v2604 = vpop.f32.mrb[0].mxu0
    %v2605 = vadd.f32 0.0, %v2604
    %v2606 = vpop.f32.mrb[0].mxu0
    %v2607 = vadd.f32 0.0, %v2606
    %2608 = vdwg.mxu0
    %2609 = vmatprep.subr.bf16.mxu0 %v1895
    %2610 = vmatpush1.bf16.msra.mxu0 %v1894
    %2611 = vmatprep.subr.bf16.mxu0 %v1902
    %2612 = vmatpush1.bf16.msra.mxu0 %v1901
    %2613 = vmatprep.subr.bf16.mxu0 %v1909
    %2614 = vmatpush1.bf16.msra.mxu0 %v1908
    %2615 = vmatprep.subr.bf16.mxu0 %v1916
    %2616 = vmatpush1.bf16.msra.mxu0 %v1915
    %2617 = vmatprep.subr.bf16.mxu0 %v1923
    %2618 = vmatpush1.bf16.msra.mxu0 %v1922
    %2619 = vmatprep.subr.bf16.mxu0 %v1930
    %2620 = vmatpush1.bf16.msra.mxu0 %v1929
    %2621 = vmatprep.subr.bf16.mxu0 %v1937
    %2622 = vmatpush1.bf16.msra.mxu0 %v1936
    %2623 = vmatprep.subr.bf16.mxu0 %v1944
    %2624 = vmatpush1.bf16.msra.mxu0 %v1943
    %2625 = vmatprep.subr.bf16.mxu0 %v1951
    %2626 = vmatpush1.bf16.msra.mxu0 %v1950
    %2627 = vmatprep.subr.bf16.mxu0 %v1958
    %2628 = vmatpush1.bf16.msra.mxu0 %v1957
    %2629 = vmatprep.subr.bf16.mxu0 %v1965
    %2630 = vmatpush1.bf16.msra.mxu0 %v1964
    %2631 = vmatprep.subr.bf16.mxu0 %v1972
    %2632 = vmatpush1.bf16.msra.mxu0 %v1971
    %2633 = vmatprep.subr.bf16.mxu0 %v1979
    %2634 = vmatpush1.bf16.msra.mxu0 %v1978
    %2635 = vmatprep.subr.bf16.mxu0 %v1986
    %2636 = vmatpush1.bf16.msra.mxu0 %v1985
    %2637 = vmatprep.subr.bf16.mxu0 %v1993
    %2638 = vmatpush1.bf16.msra.mxu0 %v1992
    %2639 = vmatprep.subr.bf16.mxu0 %v2000
    %2640 = vmatpush1.bf16.msra.mxu0 %v1999
    %2641 = vmatprep.mubr.bf16.mxu0 %v539
    %2642 = vmatmul.mubr.bf16.gmra.mrb[0].mxu0 %v538
    %v2643 = vpop.f32.mrb[0].mxu0
    %v2644 = vadd.f32 %v2601, %v2643
    %v2645 = vpop.f32.mrb[0].mxu0
    %v2646 = vadd.f32 %v2603, %v2645
    %v2647 = vpop.f32.mrb[0].mxu0
    %v2648 = vadd.f32 %v2605, %v2647
    %v2649 = vpop.f32.mrb[0].mxu0
    %v2650 = vadd.f32 %v2607, %v2649
    %2651 = vdwg.mxu0
    %2652 = vmatprep.subr.bf16.mxu0 %v2007
    %2653 = vmatpush1.bf16.msra.mxu0 %v2006
    %2654 = vmatprep.subr.bf16.mxu0 %v2014
    %2655 = vmatpush1.bf16.msra.mxu0 %v2013
    %2656 = vmatprep.subr.bf16.mxu0 %v2021
    %2657 = vmatpush1.bf16.msra.mxu0 %v2020
    %2658 = vmatprep.subr.bf16.mxu0 %v2028
    %2659 = vmatpush1.bf16.msra.mxu0 %v2027
    %2660 = vmatprep.subr.bf16.mxu0 %v2035
    %2661 = vmatpush1.bf16.msra.mxu0 %v2034
    %2662 = vmatprep.subr.bf16.mxu0 %v2042
    %2663 = vmatpush1.bf16.msra.mxu0 %v2041
    %2664 = vmatprep.subr.bf16.mxu0 %v2049
    %2665 = vmatpush1.bf16.msra.mxu0 %v2048
    %2666 = vmatprep.subr.bf16.mxu0 %v2056
    %2667 = vmatpush1.bf16.msra.mxu0 %v2055
    %2668 = vmatprep.subr.bf16.mxu0 %v2063
    %2669 = vmatpush1.bf16.msra.mxu0 %v2062
    %2670 = vmatprep.subr.bf16.mxu0 %v2070
    %2671 = vmatpush1.bf16.msra.mxu0 %v2069
    %2672 = vmatprep.subr.bf16.mxu0 %v2077
    %2673 = vmatpush1.bf16.msra.mxu0 %v2076
    %2674 = vmatprep.subr.bf16.mxu0 %v2084
    %2675 = vmatpush1.bf16.msra.mxu0 %v2083
    %2676 = vmatprep.subr.bf16.mxu0 %v2091
    %2677 = vmatpush1.bf16.msra.mxu0 %v2090
    %2678 = vmatprep.subr.bf16.mxu0 %v2098
    %2679 = vmatpush1.bf16.msra.mxu0 %v2097
    %2680 = vmatprep.subr.bf16.mxu0 %v2105
    %2681 = vmatpush1.bf16.msra.mxu0 %v2104
    %2682 = vmatprep.subr.bf16.mxu0 %v2112
    %2683 = vmatpush1.bf16.msra.mxu0 %v2111
    %2684 = vmatprep.mubr.bf16.mxu0 %v541
    %2685 = vmatmul.mubr.bf16.gmra.mrb[0].mxu0 %v540
    %v2686 = vpop.f32.mrb[0].mxu0
    %v2687 = vadd.f32 %v2644, %v2686
    %v2688 = vpop.f32.mrb[0].mxu0
    %v2689 = vadd.f32 %v2646, %v2688
    %v2690 = vpop.f32.mrb[0].mxu0
    %v2691 = vadd.f32 %v2648, %v2690
    %v2692 = vpop.f32.mrb[0].mxu0
    %v2693 = vadd.f32 %v2650, %v2692
    %2694 = vdwg.mxu0
    %2695 = vmatprep.subr.bf16.mxu0 %v2119
    %2696 = vmatpush1.bf16.msra.mxu0 %v2118
    %2697 = vmatprep.subr.bf16.mxu0 %v2126
    %2698 = vmatpush1.bf16.msra.mxu0 %v2125
    %2699 = vmatprep.subr.bf16.mxu0 %v2133
    %2700 = vmatpush1.bf16.msra.mxu0 %v2132
    %2701 = vmatprep.subr.bf16.mxu0 %v2140
    %2702 = vmatpush1.bf16.msra.mxu0 %v2139
    %2703 = vmatprep.subr.bf16.mxu0 %v2147
    %2704 = vmatpush1.bf16.msra.mxu0 %v2146
    %2705 = vmatprep.subr.bf16.mxu0 %v2154
    %2706 = vmatpush1.bf16.msra.mxu0 %v2153
    %2707 = vmatprep.subr.bf16.mxu0 %v2161
    %2708 = vmatpush1.bf16.msra.mxu0 %v2160
    %2709 = vmatprep.subr.bf16.mxu0 %v2168
    %2710 = vmatpush1.bf16.msra.mxu0 %v2167
    %2711 = vmatprep.subr.bf16.mxu0 0
    %2712 = vmatpush1.bf16.msra.mxu0 0
    %2713 = vmatprep.subr.bf16.mxu0 0
    %2714 = vmatpush1.bf16.msra.mxu0 0
    %2715 = vmatprep.subr.bf16.mxu0 0
    %2716 = vmatpush1.bf16.msra.mxu0 0
    %2717 = vmatprep.subr.bf16.mxu0 0
    %2718 = vmatpush1.bf16.msra.mxu0 0
    %2719 = vmatprep.subr.bf16.mxu0 0
    %2720 = vmatpush1.bf16.msra.mxu0 0
    %2721 = vmatprep.subr.bf16.mxu0 0
    %2722 = vmatpush1.bf16.msra.mxu0 0
    %2723 = vmatprep.subr.bf16.mxu0 0
    %2724 = vmatpush1.bf16.msra.mxu0 0
    %2725 = vmatprep.subr.bf16.mxu0 0
    %2726 = vmatpush1.bf16.msra.mxu0 0
    %2727 = vmatprep.mubr.bf16.mxu0 0
    %2728 = vmatmul.mubr.bf16.gmra.mrb[0].mxu0 %v542
    %v2729 = vpop.f32.mrb[0].mxu0
    %v2730 = vadd.f32 %v2687, %v2729
    %v2731 = vpop.f32.mrb[0].mxu0
    %v2732 = vadd.f32 %v2689, %v2731
    %v2733 = vpop.f32.mrb[0].mxu0
    %v2734 = vadd.f32 %v2691, %v2733
    %v2735 = vpop.f32.mrb[0].mxu0
    %v2736 = vadd.f32 %v2693, %v2735
    %2737 = vdwg.mxu0
    %2738 = vmatprep.subr.bf16.mxu0 %v1785
    %2739 = vmatpush1.bf16.msra.mxu0 %v1784
    %2740 = vmatprep.subr.bf16.mxu0 %v1792
    %2741 = vmatpush1.bf16.msra.mxu0 %v1791
    %2742 = vmatprep.subr.bf16.mxu0 %v1799
    %2743 = vmatpush1.bf16.msra.mxu0 %v1798
    %2744 = vmatprep.subr.bf16.mxu0 %v1806
    %2745 = vmatpush1.bf16.msra.mxu0 %v1805
    %2746 = vmatprep.subr.bf16.mxu0 %v1813
    %2747 = vmatpush1.bf16.msra.mxu0 %v1812
    %2748 = vmatprep.subr.bf16.mxu0 %v1820
    %2749 = vmatpush1.bf16.msra.mxu0 %v1819
    %2750 = vmatprep.subr.bf16.mxu0 %v1827
    %2751 = vmatpush1.bf16.msra.mxu0 %v1826
    %2752 = vmatprep.subr.bf16.mxu0 %v1834
    %2753 = vmatpush1.bf16.msra.mxu0 %v1833
    %2754 = vmatprep.subr.bf16.mxu0 %v1841
    %2755 = vmatpush1.bf16.msra.mxu0 %v1840
    %2756 = vmatprep.subr.bf16.mxu0 %v1848
    %2757 = vmatpush1.bf16.msra.mxu0 %v1847
    %2758 = vmatprep.subr.bf16.mxu0 %v1855
    %2759 = vmatpush1.bf16.msra.mxu0 %v1854
    %2760 = vmatprep.subr.bf16.mxu0 %v1862
    %2761 = vmatpush1.bf16.msra.mxu0 %v1861
    %2762 = vmatprep.subr.bf16.mxu0 %v1869
    %2763 = vmatpush1.bf16.msra.mxu0 %v1868
    %2764 = vmatprep.subr.bf16.mxu0 %v1876
    %2765 = vmatpush1.bf16.msra.mxu0 %v1875
    %2766 = vmatprep.subr.bf16.mxu0 %v1883
    %2767 = vmatpush1.bf16.msra.mxu0 %v1882
    %2768 = vmatprep.subr.bf16.mxu0 %v1890
    %2769 = vmatpush1.bf16.msra.mxu0 %v1889
    %2770 = vmatprep.mubr.bf16.mxu0 %v537
    %2771 = vmatmul.mubr.bf16.gmra.mrb[0].mxu0 %v536
    %v2772 = vpop.f32.mrb[0].mxu0
    %v2773 = vadd.f32 0.0, %v2772
    %v2774 = vpop.f32.mrb[0].mxu0
    %v2775 = vadd.f32 0.0, %v2774
    %v2776 = vpop.f32.mrb[0].mxu0
    %v2777 = vadd.f32 0.0, %v2776
    %v2778 = vpop.f32.mrb[0].mxu0
    %v2779 = vadd.f32 0.0, %v2778
    %2780 = vdwg.mxu0
    %2781 = vmatprep.subr.bf16.mxu0 %v1897
    %2782 = vmatpush1.bf16.msra.mxu0 %v1896
    %2783 = vmatprep.subr.bf16.mxu0 %v1904
    %2784 = vmatpush1.bf16.msra.mxu0 %v1903
    %2785 = vmatprep.subr.bf16.mxu0 %v1911
    %2786 = vmatpush1.bf16.msra.mxu0 %v1910
    %2787 = vmatprep.subr.bf16.mxu0 %v1918
    %2788 = vmatpush1.bf16.msra.mxu0 %v1917
    %2789 = vmatprep.subr.bf16.mxu0 %v1925
    %2790 = vmatpush1.bf16.msra.mxu0 %v1924
    %2791 = vmatprep.subr.bf16.mxu0 %v1932
    %2792 = vmatpush1.bf16.msra.mxu0 %v1931
    %2793 = vmatprep.subr.bf16.mxu0 %v1939
    %2794 = vmatpush1.bf16.msra.mxu0 %v1938
    %2795 = vmatprep.subr.bf16.mxu0 %v1946
    %2796 = vmatpush1.bf16.msra.mxu0 %v1945
    %2797 = vmatprep.subr.bf16.mxu0 %v1953
    %2798 = vmatpush1.bf16.msra.mxu0 %v1952
    %2799 = vmatprep.subr.bf16.mxu0 %v1960
    %2800 = vmatpush1.bf16.msra.mxu0 %v1959
    %2801 = vmatprep.subr.bf16.mxu0 %v1967
    %2802 = vmatpush1.bf16.msra.mxu0 %v1966
    %2803 = vmatprep.subr.bf16.mxu0 %v1974
    %2804 = vmatpush1.bf16.msra.mxu0 %v1973
    %2805 = vmatprep.subr.bf16.mxu0 %v1981
    %2806 = vmatpush1.bf16.msra.mxu0 %v1980
    %2807 = vmatprep.subr.bf16.mxu0 %v1988
    %2808 = vmatpush1.bf16.msra.mxu0 %v1987
    %2809 = vmatprep.subr.bf16.mxu0 %v1995
    %2810 = vmatpush1.bf16.msra.mxu0 %v1994
    %2811 = vmatprep.subr.bf16.mxu0 %v2002
    %2812 = vmatpush1.bf16.msra.mxu0 %v2001
    %2813 = vmatprep.mubr.bf16.mxu0 %v539
    %2814 = vmatmul.mubr.bf16.gmra.mrb[0].mxu0 %v538
    %v2815 = vpop.f32.mrb[0].mxu0
    %v2816 = vadd.f32 %v2773, %v2815
    %v2817 = vpop.f32.mrb[0].mxu0
    %v2818 = vadd.f32 %v2775, %v2817
    %v2819 = vpop.f32.mrb[0].mxu0
    %v2820 = vadd.f32 %v2777, %v2819
    %v2821 = vpop.f32.mrb[0].mxu0
    %v2822 = vadd.f32 %v2779, %v2821
    %2823 = vdwg.mxu0
    %2824 = vmatprep.subr.bf16.mxu0 %v2009
    %2825 = vmatpush1.bf16.msra.mxu0 %v2008
    %2826 = vmatprep.subr.bf16.mxu0 %v2016
    %2827 = vmatpush1.bf16.msra.mxu0 %v2015
    %2828 = vmatprep.subr.bf16.mxu0 %v2023
    %2829 = vmatpush1.bf16.msra.mxu0 %v2022
    %2830 = vmatprep.subr.bf16.mxu0 %v2030
    %2831 = vmatpush1.bf16.msra.mxu0 %v2029
    %2832 = vmatprep.subr.bf16.mxu0 %v2037
    %2833 = vmatpush1.bf16.msra.mxu0 %v2036
    %2834 = vmatprep.subr.bf16.mxu0 %v2044
    %2835 = vmatpush1.bf16.msra.mxu0 %v2043
    %2836 = vmatprep.subr.bf16.mxu0 %v2051
    %2837 = vmatpush1.bf16.msra.mxu0 %v2050
    %2838 = vmatprep.subr.bf16.mxu0 %v2058
    %2839 = vmatpush1.bf16.msra.mxu0 %v2057
    %2840 = vmatprep.subr.bf16.mxu0 %v2065
    %2841 = vmatpush1.bf16.msra.mxu0 %v2064
    %2842 = vmatprep.subr.bf16.mxu0 %v2072
    %2843 = vmatpush1.bf16.msra.mxu0 %v2071
    %2844 = vmatprep.subr.bf16.mxu0 %v2079
    %2845 = vmatpush1.bf16.msra.mxu0 %v2078
    %2846 = vmatprep.subr.bf16.mxu0 %v2086
    %2847 = vmatpush1.bf16.msra.mxu0 %v2085
    %2848 = vmatprep.subr.bf16.mxu0 %v2093
    %2849 = vmatpush1.bf16.msra.mxu0 %v2092
    %2850 = vmatprep.subr.bf16.mxu0 %v2100
    %2851 = vmatpush1.bf16.msra.mxu0 %v2099
    %2852 = vmatprep.subr.bf16.mxu0 %v2107
    %2853 = vmatpush1.bf16.msra.mxu0 %v2106
    %2854 = vmatprep.subr.bf16.mxu0 %v2114
    %2855 = vmatpush1.bf16.msra.mxu0 %v2113
    %2856 = vmatprep.mubr.bf16.mxu0 %v541
    %2857 = vmatmul.mubr.bf16.gmra.mrb[0].mxu0 %v540
    %v2858 = vpop.f32.mrb[0].mxu0
    %v2859 = vadd.f32 %v2816, %v2858
    %v2860 = vpop.f32.mrb[0].mxu0
    %v2861 = vadd.f32 %v2818, %v2860
    %v2862 = vpop.f32.mrb[0].mxu0
    %v2863 = vadd.f32 %v2820, %v2862
    %v2864 = vpop.f32.mrb[0].mxu0
    %v2865 = vadd.f32 %v2822, %v2864
    %2866 = vdwg.mxu0
    %2867 = vmatprep.subr.bf16.mxu0 %v2121
    %2868 = vmatpush1.bf16.msra.mxu0 %v2120
    %2869 = vmatprep.subr.bf16.mxu0 %v2128
    %2870 = vmatpush1.bf16.msra.mxu0 %v2127
    %2871 = vmatprep.subr.bf16.mxu0 %v2135
    %2872 = vmatpush1.bf16.msra.mxu0 %v2134
    %2873 = vmatprep.subr.bf16.mxu0 %v2142
    %2874 = vmatpush1.bf16.msra.mxu0 %v2141
    %2875 = vmatprep.subr.bf16.mxu0 %v2149
    %2876 = vmatpush1.bf16.msra.mxu0 %v2148
    %2877 = vmatprep.subr.bf16.mxu0 %v2156
    %2878 = vmatpush1.bf16.msra.mxu0 %v2155
    %2879 = vmatprep.subr.bf16.mxu0 %v2163
    %2880 = vmatpush1.bf16.msra.mxu0 %v2162
    %2881 = vmatprep.subr.bf16.mxu0 %v2170
    %2882 = vmatpush1.bf16.msra.mxu0 %v2169
    %2883 = vmatprep.subr.bf16.mxu0 0
    %2884 = vmatpush1.bf16.msra.mxu0 0
    %2885 = vmatprep.subr.bf16.mxu0 0
    %2886 = vmatpush1.bf16.msra.mxu0 0
    %2887 = vmatprep.subr.bf16.mxu0 0
    %2888 = vmatpush1.bf16.msra.mxu0 0
    %2889 = vmatprep.subr.bf16.mxu0 0
    %2890 = vmatpush1.bf16.msra.mxu0 0
    %2891 = vmatprep.subr.bf16.mxu0 0
    %2892 = vmatpush1.bf16.msra.mxu0 0
    %2893 = vmatprep.subr.bf16.mxu0 0
    %2894 = vmatpush1.bf16.msra.mxu0 0
    %2895 = vmatprep.subr.bf16.mxu0 0
    %2896 = vmatpush1.bf16.msra.mxu0 0
    %2897 = vmatprep.subr.bf16.mxu0 0
    %2898 = vmatpush1.bf16.msra.mxu0 0
    %2899 = vmatprep.mubr.bf16.mxu0 0
    %2900 = vmatmul.mubr.bf16.gmra.mrb[0].mxu0 %v542
    %v2901 = vpop.f32.mrb[0].mxu0
    %v2902 = vadd.f32 %v2859, %v2901
    %v2903 = vpop.f32.mrb[0].mxu0
    %v2904 = vadd.f32 %v2861, %v2903
    %v2905 = vpop.f32.mrb[0].mxu0
    %v2906 = vadd.f32 %v2863, %v2905
    %v2907 = vpop.f32.mrb[0].mxu0
    %v2908 = vadd.f32 %v2865, %v2907
    %2909 = vdwg.mxu0
    %2910 = vmatprep.subr.bf16.mxu0 %v1787
    %2911 = vmatpush1.bf16.msra.mxu0 %v1786
    %2912 = vmatprep.subr.bf16.mxu0 %v1794
    %2913 = vmatpush1.bf16.msra.mxu0 %v1793
    %2914 = vmatprep.subr.bf16.mxu0 %v1801
    %2915 = vmatpush1.bf16.msra.mxu0 %v1800
    %2916 = vmatprep.subr.bf16.mxu0 %v1808
    %2917 = vmatpush1.bf16.msra.mxu0 %v1807
    %2918 = vmatprep.subr.bf16.mxu0 %v1815
    %2919 = vmatpush1.bf16.msra.mxu0 %v1814
    %2920 = vmatprep.subr.bf16.mxu0 %v1822
    %2921 = vmatpush1.bf16.msra.mxu0 %v1821
    %2922 = vmatprep.subr.bf16.mxu0 %v1829
    %2923 = vmatpush1.bf16.msra.mxu0 %v1828
    %2924 = vmatprep.subr.bf16.mxu0 %v1836
    %2925 = vmatpush1.bf16.msra.mxu0 %v1835
    %2926 = vmatprep.subr.bf16.mxu0 %v1843
    %2927 = vmatpush1.bf16.msra.mxu0 %v1842
    %2928 = vmatprep.subr.bf16.mxu0 %v1850
    %2929 = vmatpush1.bf16.msra.mxu0 %v1849
    %2930 = vmatprep.subr.bf16.mxu0 %v1857
    %2931 = vmatpush1.bf16.msra.mxu0 %v1856
    %2932 = vmatprep.subr.bf16.mxu0 %v1864
    %2933 = vmatpush1.bf16.msra.mxu0 %v1863
    %2934 = vmatprep.subr.bf16.mxu0 %v1871
    %2935 = vmatpush1.bf16.msra.mxu0 %v1870
    %2936 = vmatprep.subr.bf16.mxu0 %v1878
    %2937 = vmatpush1.bf16.msra.mxu0 %v1877
    %2938 = vmatprep.subr.bf16.mxu0 %v1885
    %2939 = vmatpush1.bf16.msra.mxu0 %v1884
    %2940 = vmatprep.subr.bf16.mxu0 %v1892
    %2941 = vmatpush1.bf16.msra.mxu0 %v1891
    %2942 = vmatprep.mubr.bf16.mxu0 %v537
    %2943 = vmatmul.mubr.bf16.gmra.mrb[0].mxu0 %v536
    %v2944 = vpop.f32.mrb[0].mxu0
    %v2945 = vadd.f32 0.0, %v2944
    %v2946 = vpop.f32.mrb[0].mxu0
    %v2947 = vadd.f32 0.0, %v2946
    %v2948 = vpop.f32.mrb[0].mxu0
    %v2949 = vadd.f32 0.0, %v2948
    %v2950 = vpop.f32.mrb[0].mxu0
    %v2951 = vadd.f32 0.0, %v2950
    %2952 = vdwg.mxu0
    %2953 = vmatprep.subr.bf16.mxu0 %v1899
    %2954 = vmatpush1.bf16.msra.mxu0 %v1898
    %2955 = vmatprep.subr.bf16.mxu0 %v1906
    %2956 = vmatpush1.bf16.msra.mxu0 %v1905
    %2957 = vmatprep.subr.bf16.mxu0 %v1913
    %2958 = vmatpush1.bf16.msra.mxu0 %v1912
    %2959 = vmatprep.subr.bf16.mxu0 %v1920
    %2960 = vmatpush1.bf16.msra.mxu0 %v1919
    %2961 = vmatprep.subr.bf16.mxu0 %v1927
    %2962 = vmatpush1.bf16.msra.mxu0 %v1926
    %2963 = vmatprep.subr.bf16.mxu0 %v1934
    %2964 = vmatpush1.bf16.msra.mxu0 %v1933
    %2965 = vmatprep.subr.bf16.mxu0 %v1941
    %2966 = vmatpush1.bf16.msra.mxu0 %v1940
    %2967 = vmatprep.subr.bf16.mxu0 %v1948
    %2968 = vmatpush1.bf16.msra.mxu0 %v1947
    %2969 = vmatprep.subr.bf16.mxu0 %v1955
    %2970 = vmatpush1.bf16.msra.mxu0 %v1954
    %2971 = vmatprep.subr.bf16.mxu0 %v1962
    %2972 = vmatpush1.bf16.msra.mxu0 %v1961
    %2973 = vmatprep.subr.bf16.mxu0 %v1969
    %2974 = vmatpush1.bf16.msra.mxu0 %v1968
    %2975 = vmatprep.subr.bf16.mxu0 %v1976
    %2976 = vmatpush1.bf16.msra.mxu0 %v1975
    %2977 = vmatprep.subr.bf16.mxu0 %v1983
    %2978 = vmatpush1.bf16.msra.mxu0 %v1982
    %2979 = vmatprep.subr.bf16.mxu0 %v1990
    %2980 = vmatpush1.bf16.msra.mxu0 %v1989
    %2981 = vmatprep.subr.bf16.mxu0 %v1997
    %2982 = vmatpush1.bf16.msra.mxu0 %v1996
    %2983 = vmatprep.subr.bf16.mxu0 %v2004
    %2984 = vmatpush1.bf16.msra.mxu0 %v2003
    %2985 = vmatprep.mubr.bf16.mxu0 %v539
    %2986 = vmatmul.mubr.bf16.gmra.mrb[0].mxu0 %v538
    %v2987 = vpop.f32.mrb[0].mxu0
    %v2988 = vadd.f32 %v2945, %v2987
    %v2989 = vpop.f32.mrb[0].mxu0
    %v2990 = vadd.f32 %v2947, %v2989
    %v2991 = vpop.f32.mrb[0].mxu0
    %v2992 = vadd.f32 %v2949, %v2991
    %v2993 = vpop.f32.mrb[0].mxu0
    %v2994 = vadd.f32 %v2951, %v2993
    %2995 = vdwg.mxu0
    %2996 = vmatprep.subr.bf16.mxu0 %v2011
    %2997 = vmatpush1.bf16.msra.mxu0 %v2010
    %2998 = vmatprep.subr.bf16.mxu0 %v2018
    %2999 = vmatpush1.bf16.msra.mxu0 %v2017
    %3000 = vmatprep.subr.bf16.mxu0 %v2025
    %3001 = vmatpush1.bf16.msra.mxu0 %v2024
    %3002 = vmatprep.subr.bf16.mxu0 %v2032
    %3003 = vmatpush1.bf16.msra.mxu0 %v2031
    %3004 = vmatprep.subr.bf16.mxu0 %v2039
    %3005 = vmatpush1.bf16.msra.mxu0 %v2038
    %3006 = vmatprep.subr.bf16.mxu0 %v2046
    %3007 = vmatpush1.bf16.msra.mxu0 %v2045
    %3008 = vmatprep.subr.bf16.mxu0 %v2053
    %3009 = vmatpush1.bf16.msra.mxu0 %v2052
    %3010 = vmatprep.subr.bf16.mxu0 %v2060
    %3011 = vmatpush1.bf16.msra.mxu0 %v2059
    %3012 = vmatprep.subr.bf16.mxu0 %v2067
    %3013 = vmatpush1.bf16.msra.mxu0 %v2066
    %3014 = vmatprep.subr.bf16.mxu0 %v2074
    %3015 = vmatpush1.bf16.msra.mxu0 %v2073
    %3016 = vmatprep.subr.bf16.mxu0 %v2081
    %3017 = vmatpush1.bf16.msra.mxu0 %v2080
    %3018 = vmatprep.subr.bf16.mxu0 %v2088
    %3019 = vmatpush1.bf16.msra.mxu0 %v2087
    %3020 = vmatprep.subr.bf16.mxu0 %v2095
    %3021 = vmatpush1.bf16.msra.mxu0 %v2094
    %3022 = vmatprep.subr.bf16.mxu0 %v2102
    %3023 = vmatpush1.bf16.msra.mxu0 %v2101
    %3024 = vmatprep.subr.bf16.mxu0 %v2109
    %3025 = vmatpush1.bf16.msra.mxu0 %v2108
    %3026 = vmatprep.subr.bf16.mxu0 %v2116
    %3027 = vmatpush1.bf16.msra.mxu0 %v2115
    %3028 = vmatprep.mubr.bf16.mxu0 %v541
    %3029 = vmatmul.mubr.bf16.gmra.mrb[0].mxu0 %v540
    %v3030 = vpop.f32.mrb[0].mxu0
    %v3031 = vadd.f32 %v2988, %v3030
    %v3032 = vpop.f32.mrb[0].mxu0
    %v3033 = vadd.f32 %v2990, %v3032
    %v3034 = vpop.f32.mrb[0].mxu0
    %v3035 = vadd.f32 %v2992, %v3034
    %v3036 = vpop.f32.mrb[0].mxu0
    %v3037 = vadd.f32 %v2994, %v3036
    %3038 = vdwg.mxu0
    %3039 = vmatprep.subr.bf16.mxu0 %v2123
    %3040 = vmatpush1.bf16.msra.mxu0 %v2122
    %3041 = vmatprep.subr.bf16.mxu0 %v2130
    %3042 = vmatpush1.bf16.msra.mxu0 %v2129
    %3043 = vmatprep.subr.bf16.mxu0 %v2137
    %3044 = vmatpush1.bf16.msra.mxu0 %v2136
    %3045 = vmatprep.subr.bf16.mxu0 %v2144
    %3046 = vmatpush1.bf16.msra.mxu0 %v2143
    %3047 = vmatprep.subr.bf16.mxu0 %v2151
    %3048 = vmatpush1.bf16.msra.mxu0 %v2150
    %3049 = vmatprep.subr.bf16.mxu0 %v2158
    %3050 = vmatpush1.bf16.msra.mxu0 %v2157
    %3051 = vmatprep.subr.bf16.mxu0 %v2165
    %3052 = vmatpush1.bf16.msra.mxu0 %v2164
    %3053 = vmatprep.subr.bf16.mxu0 %v2172
    %3054 = vmatpush1.bf16.msra.mxu0 %v2171
    %3055 = vmatprep.subr.bf16.mxu0 0
    %3056 = vmatpush1.bf16.msra.mxu0 0
    %3057 = vmatprep.subr.bf16.mxu0 0
    %3058 = vmatpush1.bf16.msra.mxu0 0
    %3059 = vmatprep.subr.bf16.mxu0 0
    %3060 = vmatpush1.bf16.msra.mxu0 0
    %3061 = vmatprep.subr.bf16.mxu0 0
    %3062 = vmatpush1.bf16.msra.mxu0 0
    %3063 = vmatprep.subr.bf16.mxu0 0
    %3064 = vmatpush1.bf16.msra.mxu0 0
    %3065 = vmatprep.subr.bf16.mxu0 0
    %3066 = vmatpush1.bf16.msra.mxu0 0
    %3067 = vmatprep.subr.bf16.mxu0 0
    %3068 = vmatpush1.bf16.msra.mxu0 0
    %3069 = vmatprep.subr.bf16.mxu0 0
    %3070 = vmatpush1.bf16.msra.mxu0 0
    %3071 = vmatprep.mubr.bf16.mxu0 0
    %3072 = vmatmul.mubr.bf16.gmra.mrb[0].mxu0 %v542
    %v3073 = vpop.f32.mrb[0].mxu0
    %v3074 = vadd.f32 %v3031, %v3073
    %v3075 = vpop.f32.mrb[0].mxu0
    %v3076 = vadd.f32 %v3033, %v3075
    %v3077 = vpop.f32.mrb[0].mxu0
    %v3078 = vadd.f32 %v3035, %v3077
    %v3079 = vpop.f32.mrb[0].mxu0
    %v3080 = vadd.f32 %v3037, %v3079
    %3081 = vdwg.mxu0
    %3082 = vmatprep.subr.bf16.mxu0 0
    %3083 = vmatpush1.bf16.msra.mxu0 %v1788
    %3084 = vmatprep.subr.bf16.mxu0 0
    %3085 = vmatpush1.bf16.msra.mxu0 %v1795
    %3086 = vmatprep.subr.bf16.mxu0 0
    %3087 = vmatpush1.bf16.msra.mxu0 %v1802
    %3088 = vmatprep.subr.bf16.mxu0 0
    %3089 = vmatpush1.bf16.msra.mxu0 %v1809
    %3090 = vmatprep.subr.bf16.mxu0 0
    %3091 = vmatpush1.bf16.msra.mxu0 %v1816
    %3092 = vmatprep.subr.bf16.mxu0 0
    %3093 = vmatpush1.bf16.msra.mxu0 %v1823
    %3094 = vmatprep.subr.bf16.mxu0 0
    %3095 = vmatpush1.bf16.msra.mxu0 %v1830
    %3096 = vmatprep.subr.bf16.mxu0 0
    %3097 = vmatpush1.bf16.msra.mxu0 %v1837
    %3098 = vmatprep.subr.bf16.mxu0 0
    %3099 = vmatpush1.bf16.msra.mxu0 %v1844
    %3100 = vmatprep.subr.bf16.mxu0 0
    %3101 = vmatpush1.bf16.msra.mxu0 %v1851
    %3102 = vmatprep.subr.bf16.mxu0 0
    %3103 = vmatpush1.bf16.msra.mxu0 %v1858
    %3104 = vmatprep.subr.bf16.mxu0 0
    %3105 = vmatpush1.bf16.msra.mxu0 %v1865
    %3106 = vmatprep.subr.bf16.mxu0 0
    %3107 = vmatpush1.bf16.msra.mxu0 %v1872
    %3108 = vmatprep.subr.bf16.mxu0 0
    %3109 = vmatpush1.bf16.msra.mxu0 %v1879
    %3110 = vmatprep.subr.bf16.mxu0 0
    %3111 = vmatpush1.bf16.msra.mxu0 %v1886
    %3112 = vmatprep.subr.bf16.mxu0 0
    %3113 = vmatpush1.bf16.msra.mxu0 %v1893
    %3114 = vmatprep.mubr.bf16.mxu0 %v537
    %3115 = vmatmul.mubr.bf16.gmra.mrb[0].mxu0 %v536
    %v3116 = vpop.f32.mrb[0].mxu0
    %v3117 = vadd.f32 0.0, %v3116
    %v3118 = vpop.f32.mrb[0].mxu0
    %v3119 = vpop.f32.mrb[0].mxu0
    %v3120 = vadd.f32 0.0, %v3119
    %v3121 = vpop.f32.mrb[0].mxu0
    %3122 = vdwg.mxu0
    %3123 = vmatprep.subr.bf16.mxu0 0
    %3124 = vmatpush1.bf16.msra.mxu0 %v1900
    %3125 = vmatprep.subr.bf16.mxu0 0
    %3126 = vmatpush1.bf16.msra.mxu0 %v1907
    %3127 = vmatprep.subr.bf16.mxu0 0
    %3128 = vmatpush1.bf16.msra.mxu0 %v1914
    %3129 = vmatprep.subr.bf16.mxu0 0
    %3130 = vmatpush1.bf16.msra.mxu0 %v1921
    %3131 = vmatprep.subr.bf16.mxu0 0
    %3132 = vmatpush1.bf16.msra.mxu0 %v1928
    %3133 = vmatprep.subr.bf16.mxu0 0
    %3134 = vmatpush1.bf16.msra.mxu0 %v1935
    %3135 = vmatprep.subr.bf16.mxu0 0
    %3136 = vmatpush1.bf16.msra.mxu0 %v1942
    %3137 = vmatprep.subr.bf16.mxu0 0
    %3138 = vmatpush1.bf16.msra.mxu0 %v1949
    %3139 = vmatprep.subr.bf16.mxu0 0
    %3140 = vmatpush1.bf16.msra.mxu0 %v1956
    %3141 = vmatprep.subr.bf16.mxu0 0
    %3142 = vmatpush1.bf16.msra.mxu0 %v1963
    %3143 = vmatprep.subr.bf16.mxu0 0
    %3144 = vmatpush1.bf16.msra.mxu0 %v1970
    %3145 = vmatprep.subr.bf16.mxu0 0
    %3146 = vmatpush1.bf16.msra.mxu0 %v1977
    %3147 = vmatprep.subr.bf16.mxu0 0
    %3148 = vmatpush1.bf16.msra.mxu0 %v1984
    %3149 = vmatprep.subr.bf16.mxu0 0
    %3150 = vmatpush1.bf16.msra.mxu0 %v1991
    %3151 = vmatprep.subr.bf16.mxu0 0
    %3152 = vmatpush1.bf16.msra.mxu0 %v1998
    %3153 = vmatprep.subr.bf16.mxu0 0
    %3154 = vmatpush1.bf16.msra.mxu0 %v2005
    %3155 = vmatprep.mubr.bf16.mxu0 %v539
    %3156 = vmatmul.mubr.bf16.gmra.mrb[0].mxu0 %v538
    %v3157 = vpop.f32.mrb[0].mxu0
    %v3158 = vadd.f32 %v3117, %v3157
    %v3159 = vpop.f32.mrb[0].mxu0
    %v3160 = vpop.f32.mrb[0].mxu0
    %v3161 = vadd.f32 %v3120, %v3160
    %v3162 = vpop.f32.mrb[0].mxu0
    %3163 = vdwg.mxu0
    %3164 = vmatprep.subr.bf16.mxu0 0
    %3165 = vmatpush1.bf16.msra.mxu0 %v2012
    %3166 = vmatprep.subr.bf16.mxu0 0
    %3167 = vmatpush1.bf16.msra.mxu0 %v2019
    %3168 = vmatprep.subr.bf16.mxu0 0
    %3169 = vmatpush1.bf16.msra.mxu0 %v2026
    %3170 = vmatprep.subr.bf16.mxu0 0
    %3171 = vmatpush1.bf16.msra.mxu0 %v2033
    %3172 = vmatprep.subr.bf16.mxu0 0
    %3173 = vmatpush1.bf16.msra.mxu0 %v2040
    %3174 = vmatprep.subr.bf16.mxu0 0
    %3175 = vmatpush1.bf16.msra.mxu0 %v2047
    %3176 = vmatprep.subr.bf16.mxu0 0
    %3177 = vmatpush1.bf16.msra.mxu0 %v2054
    %3178 = vmatprep.subr.bf16.mxu0 0
    %3179 = vmatpush1.bf16.msra.mxu0 %v2061
    %3180 = vmatprep.subr.bf16.mxu0 0
    %3181 = vmatpush1.bf16.msra.mxu0 %v2068
    %3182 = vmatprep.subr.bf16.mxu0 0
    %3183 = vmatpush1.bf16.msra.mxu0 %v2075
    %3184 = vmatprep.subr.bf16.mxu0 0
    %3185 = vmatpush1.bf16.msra.mxu0 %v2082
    %3186 = vmatprep.subr.bf16.mxu0 0
    %3187 = vmatpush1.bf16.msra.mxu0 %v2089
    %3188 = vmatprep.subr.bf16.mxu0 0
    %3189 = vmatpush1.bf16.msra.mxu0 %v2096
    %3190 = vmatprep.subr.bf16.mxu0 0
    %3191 = vmatpush1.bf16.msra.mxu0 %v2103
    %3192 = vmatprep.subr.bf16.mxu0 0
    %3193 = vmatpush1.bf16.msra.mxu0 %v2110
    %3194 = vmatprep.subr.bf16.mxu0 0
    %3195 = vmatpush1.bf16.msra.mxu0 %v2117
    %3196 = vmatprep.mubr.bf16.mxu0 %v541
    %3197 = vmatmul.mubr.bf16.gmra.mrb[0].mxu0 %v540
    %v3198 = vpop.f32.mrb[0].mxu0
    %v3199 = vadd.f32 %v3158, %v3198
    %v3200 = vpop.f32.mrb[0].mxu0
    %v3201 = vpop.f32.mrb[0].mxu0
    %v3202 = vadd.f32 %v3161, %v3201
    %v3203 = vpop.f32.mrb[0].mxu0
    %3204 = vdwg.mxu0
    %3205 = vmatprep.subr.bf16.mxu0 0
    %3206 = vmatpush1.bf16.msra.mxu0 %v2124
    %3207 = vmatprep.subr.bf16.mxu0 0
    %3208 = vmatpush1.bf16.msra.mxu0 %v2131
    %3209 = vmatprep.subr.bf16.mxu0 0
    %3210 = vmatpush1.bf16.msra.mxu0 %v2138
    %3211 = vmatprep.subr.bf16.mxu0 0
    %3212 = vmatpush1.bf16.msra.mxu0 %v2145
    %3213 = vmatprep.subr.bf16.mxu0 0
    %3214 = vmatpush1.bf16.msra.mxu0 %v2152
    %3215 = vmatprep.subr.bf16.mxu0 0
    %3216 = vmatpush1.bf16.msra.mxu0 %v2159
    %3217 = vmatprep.subr.bf16.mxu0 0
    %3218 = vmatpush1.bf16.msra.mxu0 %v2166
    %3219 = vmatprep.subr.bf16.mxu0 0
    %3220 = vmatpush1.bf16.msra.mxu0 %v2173
    %3221 = vmatprep.subr.bf16.mxu0 0
    %3222 = vmatpush1.bf16.msra.mxu0 0
    %3223 = vmatprep.subr.bf16.mxu0 0
    %3224 = vmatpush1.bf16.msra.mxu0 0
    %3225 = vmatprep.subr.bf16.mxu0 0
    %3226 = vmatpush1.bf16.msra.mxu0 0
    %3227 = vmatprep.subr.bf16.mxu0 0
    %3228 = vmatpush1.bf16.msra.mxu0 0
    %3229 = vmatprep.subr.bf16.mxu0 0
    %3230 = vmatpush1.bf16.msra.mxu0 0
    %3231 = vmatprep.subr.bf16.mxu0 0
    %3232 = vmatpush1.bf16.msra.mxu0 0
    %3233 = vmatprep.subr.bf16.mxu0 0
    %3234 = vmatpush1.bf16.msra.mxu0 0
    %3235 = vmatprep.subr.bf16.mxu0 0
    %3236 = vmatpush1.bf16.msra.mxu0 0
    %3237 = vmatprep.mubr.bf16.mxu0 0
    %3238 = vmatmul.mubr.bf16.gmra.mrb[0].mxu0 %v542
    %v3239 = vpop.f32.mrb[0].mxu0
    %v3240 = vadd.f32 %v3199, %v3239
    %v3241 = vpop.f32.mrb[0].mxu0
    %v3242 = vpop.f32.mrb[0].mxu0
    %v3243 = vadd.f32 %v3202, %v3242
    %v3244 = vpop.f32.mrb[0].mxu0
    %3245 = vdwg.mxu0
    %v3246 = vadd.f32 %v44, %v2730
    %v3247 = vadd.f32 %v45, %v2732
    %v3248 = vadd.f32 %v46, %v2902
    %v3249 = vadd.f32 %v47, %v2904
    %v3250 = vadd.f32 %v48, %v3074
    %v3251 = vadd.f32 %v49, %v3076
    %v3252 = vadd.f32 %v50, %v3240
    %v3253 = vadd.f32 %v51, %v2734
    %v3254 = vadd.f32 %v52, %v2736
    %v3255 = vadd.f32 %v53, %v2906
    %v3256 = vadd.f32 %v54, %v2908
    %v3257 = vadd.f32 %v55, %v3078
    %v3258 = vadd.f32 %v56, %v3080
    %v3259 = vadd.f32 %v57, %v3243
    %3260 = vst [vmem:[%s2] sm:$0xff] %v3246
    %3261 = vst [vmem:[%s2 + $0x8] sm:$0xff] %v3247
    %3262 = vst [vmem:[%s2 + $0x10] sm:$0xff] %v3248
    %3263 = vst [vmem:[%s2 + $0x18] sm:$0xff] %v3249
    %3264 = vst [vmem:[%s2 + $0x20] sm:$0xff] %v3250
    %3265 = vst [vmem:[%s2 + $0x28] sm:$0xff] %v3251
    %3266 = vst [vmem:[%s2 + $0x30] sm:$0xff] %v3252
    %3267 = vst [vmem:[%s2 + $0x38] sm:$0xff] %v3253
    %3268 = vst [vmem:[%s2 + $0x40] sm:$0xff] %v3254
    %3269 = vst [vmem:[%s2 + $0x48] sm:$0xff] %v3255
    %3270 = vst [vmem:[%s2 + $0x50] sm:$0xff] %v3256
    %3271 = vst [vmem:[%s2 + $0x58] sm:$0xff] %v3257
    %3272 = vst [vmem:[%s2 + $0x60] sm:$0xff] %v3258
    %3273 = vst [vmem:[%s2 + $0x68] sm:$0xff] %v3259
    // Predicated region
    $region18: #{fcn_forward.4} parent=1 // pred_check
      %p3274 = pneg %p26
    $region19: #{fcn_forward.4} parent=1 // pred_check_branch
      %3276 = sbr.rel (%p3274) target = $region21
    $region20: #{fcn_forward.4} parent=1 // pred_region
      %v3277 = vld [vmem:[%s2] sm:$0xff]
      %v3278 = vld [vmem:[%s2 + $0x8] sm:$0xff]
      %v3279 = vld [vmem:[%s2 + $0x10] sm:$0xff]
      %v3280 = vld [vmem:[%s2 + $0x18] sm:$0xff]
      %v3281 = vld [vmem:[%s2 + $0x20] sm:$0xff]
      %v3282 = vld [vmem:[%s2 + $0x28] sm:$0xff]
      %v3283 = vld [vmem:[%s2 + $0x30] sm:$0xff]
      %v3284 = vld [vmem:[%s2 + $0x38] sm:$0xff]
      %v3285 = vld [vmem:[%s2 + $0x40] sm:$0xff]
      %v3286 = vld [vmem:[%s2 + $0x48] sm:$0xff]
      %v3287 = vld [vmem:[%s2 + $0x50] sm:$0xff]
      %v3288 = vld [vmem:[%s2 + $0x58] sm:$0xff]
      %v3289 = vld [vmem:[%s2 + $0x60] sm:$0xff]
      %v3290 = vld [vmem:[%s2 + $0x68] sm:$0xff]
      %v3291 = vmax.f32 %v3277, 0.0
      %v3292 = vmax.f32 %v3278, 0.0
      %v3293 = vmax.f32 %v3279, 0.0
      %v3294 = vmax.f32 %v3280, 0.0
      %v3295 = vmax.f32 %v3281, 0.0
      %v3296 = vmax.f32 %v3282, 0.0
      %v3297 = vmax.f32 %v3283, 0.0
      %v3298 = vmax.f32 %v3284, 0.0
      %v3299 = vmax.f32 %v3285, 0.0
      %v3300 = vmax.f32 %v3286, 0.0
      %v3301 = vmax.f32 %v3287, 0.0
      %v3302 = vmax.f32 %v3288, 0.0
      %v3303 = vmax.f32 %v3289, 0.0
      %v3304 = vmax.f32 %v3290, 0.0
      %3305 = vst [vmem:[%s2] sm:$0xff] %v3291
      %3306 = vst [vmem:[%s2 + $0x8] sm:$0xff] %v3292
      %3307 = vst [vmem:[%s2 + $0x10] sm:$0xff] %v3293
      %3308 = vst [vmem:[%s2 + $0x18] sm:$0xff] %v3294
      %3309 = vst [vmem:[%s2 + $0x20] sm:$0xff] %v3295
      %3310 = vst [vmem:[%s2 + $0x28] sm:$0xff] %v3296
      %3311 = vst [vmem:[%s2 + $0x30] sm:$0xff] %v3297
      %3312 = vst [vmem:[%s2 + $0x38] sm:$0xff] %v3298
      %3313 = vst [vmem:[%s2 + $0x40] sm:$0xff] %v3299
      %3314 = vst [vmem:[%s2 + $0x48] sm:$0xff] %v3300
      %3315 = vst [vmem:[%s2 + $0x50] sm:$0xff] %v3301
      %3316 = vst [vmem:[%s2 + $0x58] sm:$0xff] %v3302
      %3317 = vst [vmem:[%s2 + $0x60] sm:$0xff] %v3303
      %3318 = vst [vmem:[%s2 + $0x68] sm:$0xff] %v3304
    $region21: #{fcn_forward.4} parent=1 // pred_fallthru
      _
    // Predicated region
    $region22: #{fcn_forward.4} parent=1 // pred_check
      _
    $region23: #{fcn_forward.4} parent=1 // pred_check_branch
      %3320 = sbr.rel (0) target = $region25
    $region24: #{fcn_forward.4} parent=1 // pred_region
      _
    $region25: #{fcn_forward.4} parent=1 // pred_fallthru
      _
    // Predicated region
    $region26: #{fcn_forward.4} parent=1 // pred_check
      _
    $region27: #{fcn_forward.4} parent=1 // pred_check_branch
      %3322 = sbr.rel (0) target = $region29
    $region28: #{fcn_forward.4} parent=1 // pred_region
      _
    $region29: #{fcn_forward.4} parent=1 // pred_fallthru
      _
    %3323 = vsyncpa [#allocation3], 1

</llo_original>
